<compile_context>
chip_gen: v5e
topology: v5e:2x2
jax: 0.10.0
libtpu: 0.0.40
codegen_flags: <defaults>
</compile_context>

<pallas_src>
import functools

import jax
import jax.numpy as jnp
from jax.experimental import pallas as pl
from jax.experimental.pallas import tpu as pltpu


COMPUTE_DTYPE = jnp.bfloat16   # MXU-native input dtype; accumulation is f32.
N_PAD = 128                    # lane-padded width of the fc2 / Q-value output.


def _conv_out(size, k, s):
    return (size - k) // s + 1


# ----------------------------------------------------------------------------
# Fused forward kernel: one batch element per grid step.
# ----------------------------------------------------------------------------
def _qnet_kernel(x_ref, w1_ref, w2_ref, w3_ref, wf1_ref, wf2_ref,
                 b1_ref, b2_ref, b3_ref, bf1_ref, bf2_ref, o_ref,
                 *, Ho1, Ho2, Ho3):
    f32 = jnp.float32

    def mm(lhs_f32, rhs):
        # bf16 x bf16 -> f32 accumulation on the MXU.
        return jnp.dot(lhs_f32.astype(COMPUTE_DTYPE), rhs,
                       preferred_element_type=f32)

    # Input tile: (Bh, Bw*16*C) space-to-depth rows (one image).  Slicing /
    # concatenation below is done on f32 values (robust relayouts); operands
    # are cast to bf16 right at each matmul.
    x = x_ref[0].astype(f32)

    # ---- conv1 (k=8, s=4): 2 shifted block matmuls over s2d row offsets ----
    acc = jnp.zeros((Ho1, w1_ref.shape[-1]), f32)
    for di in range(2):
        acc = acc + mm(x[di:di + Ho1, :], w1_ref[di])
    h1 = jnp.maximum(acc + b1_ref[...], 0.0)          # (Ho1, Wo1*32)

    # ---- conv2 (k=4, s=2): 4 shifted block matmuls over row offsets --------
    acc = jnp.zeros((Ho2, w2_ref.shape[-1]), f32)
    for di in range(4):
        rows = jnp.concatenate(
            [h1[di + 2 * o: di + 2 * o + 1, :] for o in range(Ho2)], axis=0)
        acc = acc + mm(rows, w2_ref[di])
    h2 = jnp.maximum(acc + b2_ref[...], 0.0)          # (Ho2, Wo2*64)

    # ---- conv3 (k=3, s=1): 3 shifted block matmuls -------------------------
    acc = jnp.zeros((Ho3, w3_ref.shape[-1]), f32)
    for di in range(3):
        acc = acc + mm(h2[di:di + Ho3, :], w3_ref[di])
    h3 = jnp.maximum(acc + b3_ref[...], 0.0)          # (Ho3, Wo3*64)

    # ---- flatten + fc1 + fc2 (fused head, never leaves VMEM) ---------------
    acc = jnp.zeros((1, wf1_ref.shape[-1]), f32)
    for r in range(Ho3):
        acc = acc + mm(h3[r:r + 1, :], wf1_ref[r])
    h4 = jnp.maximum(acc + bf1_ref[...], 0.0)         # (1, 512)

    q = mm(h4, wf2_ref[...]) + bf2_ref[...]           # (1, 128) lane-dense
    o_ref[0] = q.astype(o_ref.dtype)


# ----------------------------------------------------------------------------
# One-time weight repacking (host-side layout work, done at init).
# ----------------------------------------------------------------------------
def prepare_qnet_weights(params, in_channels, H, W, n_actions):
    C = in_channels
    assert H == W and H % 4 == 0, "demo assumes a square input with H % 4 == 0"
    assert n_actions <= N_PAD
    Ho1 = _conv_out(H, 8, 4)
    Ho2 = _conv_out(Ho1, 4, 2)
    Ho3 = _conv_out(Ho2, 3, 1)
    assert Ho3 >= 1
    Bw = W // 4
    BW1 = 16 * C                     # lanes per space-to-depth block
    f32 = jnp.float32

    w1, b1 = params["c1_w"], params["c1_b"]          # (32, C, 8, 8), (32,)
    w2, b2 = params["c2_w"], params["c2_b"]          # (64, 32, 4, 4), (64,)
    w3, b3 = params["c3_w"], params["c3_b"]          # (64, 64, 3, 3), (64,)
    wf1, bf1 = params["fc1_w"], params["fc1_b"]      # (64*Ho3*Ho3, 512), (512,)
    wf2, bf2 = params["fc2_w"], params["fc2_b"]      # (512, n_actions)

    # conv1: W1[di][16C*bw + (16a+4b+c), 32*ow + co] = w1[co, c, 4di+a, 4(bw-ow)+b]
    w1_t = jnp.transpose(w1, (2, 3, 1, 0))           # [kh, kw, c, co]
    W1 = jnp.zeros((2, Bw * BW1, Ho1 * 32), f32)
    for di in range(2):
        for ow in range(Ho1):
            for dj in range(2):
                bw = ow + dj
                blk = w1_t[4 * di:4 * di + 4, 4 * dj:4 * dj + 4, :, :]
                W1 = W1.at[di, BW1 * bw:BW1 * (bw + 1),
                           32 * ow:32 * (ow + 1)].set(blk.reshape(BW1, 32))

    # conv2: W2[di][32*iw + c2, 64*ow2 + co2] = w2[co2, c2, di, iw - 2*ow2]
    w2_t = jnp.transpose(w2, (2, 3, 1, 0))           # [kh2, kw2, c2, co2]
    W2 = jnp.zeros((4, Ho1 * 32, Ho2 * 64), f32)
    for di in range(4):
        for ow2 in range(Ho2):
            for kw2 in range(4):
                iw = 2 * ow2 + kw2
                W2 = W2.at[di, 32 * iw:32 * (iw + 1),
                           64 * ow2:64 * (ow2 + 1)].set(w2_t[di, kw2])

    # conv3: W3[di][64*iw + c3, 64*ow3 + co3] = w3[co3, c3, di, iw - ow3]
    w3_t = jnp.transpose(w3, (2, 3, 1, 0))           # [kh3, kw3, c3, co3]
    W3 = jnp.zeros((3, Ho2 * 64, Ho3 * 64), f32)
    for di in range(3):
        for ow3 in range(Ho3):
            for kw3 in range(3):
                iw = ow3 + kw3
                W3 = W3.at[di, 64 * iw:64 * (iw + 1),
                           64 * ow3:64 * (ow3 + 1)].set(w3_t[di, kw3])

    # fc1: regroup the PyTorch flatten order (c, oh3, ow3) by h3 row (oh3).
    Wf1 = (wf1.reshape(64, Ho3, Ho3, 512)
              .transpose(1, 2, 0, 3)
              .reshape(Ho3, Ho3 * 64, 512))

    # fc2: pad the action dim to a full 128-lane register.
    Wf2 = jnp.zeros((512, N_PAD), f32).at[:, :n_actions].set(wf2)
    bf2_p = jnp.zeros((N_PAD,), f32).at[:n_actions].set(bf2)

    cd = COMPUTE_DTYPE
    return {
        "W1": W1.astype(cd), "W2": W2.astype(cd), "W3": W3.astype(cd),
        "Wf1": Wf1.astype(cd), "Wf2": Wf2.astype(cd),
        "b1": jnp.tile(b1, Ho1).reshape(1, -1).astype(f32),
        "b2": jnp.tile(b2, Ho2).reshape(1, -1).astype(f32),
        "b3": jnp.tile(b3, Ho3).reshape(1, -1).astype(f32),
        "bf1": bf1.reshape(1, -1).astype(f32),
        "bf2": bf2_p.reshape(1, -1).astype(f32),
    }


# ----------------------------------------------------------------------------
# Forward: boundary layout transform + one fused pallas_call.
# ----------------------------------------------------------------------------
@functools.partial(jax.jit, static_argnames=("n_actions",))
def qnet_forward(prep, x, *, n_actions):
    B, C, H, W = x.shape
    Ho1 = _conv_out(H, 8, 4)
    Ho2 = _conv_out(Ho1, 4, 2)
    Ho3 = _conv_out(Ho2, 3, 1)
    Bh, Bw = H // 4, W // 4
    lanes = Bw * 16 * C

    # Boundary-only layout change: NCHW -> space-to-depth(4) channel-last bf16.
    x_s2d = (x.transpose(0, 2, 3, 1)
              .reshape(B, Bh, 4, Bw, 4, C)
              .transpose(0, 1, 3, 2, 4, 5)
              .reshape(B, Bh, lanes)
              .astype(COMPUTE_DTYPE))

    kernel = functools.partial(_qnet_kernel, Ho1=Ho1, Ho2=Ho2, Ho3=Ho3)

    def resident(shape):
        # Invariant weight/bias blocks: fetched once, kept VMEM-resident.
        return pl.BlockSpec(shape, lambda b, n=len(shape): (0,) * n)

    out = pl.pallas_call(
        kernel,
        out_shape=jax.ShapeDtypeStruct((B, 1, N_PAD), jnp.float32),
        grid_spec=pltpu.PrefetchScalarGridSpec(
            num_scalar_prefetch=0,
            grid=(B,),
            in_specs=[
                pl.BlockSpec((1, Bh, lanes), lambda b: (b, 0, 0)),
                resident(prep["W1"].shape), resident(prep["W2"].shape),
                resident(prep["W3"].shape), resident(prep["Wf1"].shape),
                resident(prep["Wf2"].shape),
                resident(prep["b1"].shape), resident(prep["b2"].shape),
                resident(prep["b3"].shape), resident(prep["bf1"].shape),
                resident(prep["bf2"].shape),
            ],
            out_specs=pl.BlockSpec((1, 1, N_PAD), lambda b: (b, 0, 0)),
        ),
        compiler_params=pltpu.CompilerParams(
            dimension_semantics=("parallel",)),
    )(x_s2d, prep["W1"], prep["W2"], prep["W3"], prep["Wf1"], prep["Wf2"],
      prep["b1"], prep["b2"], prep["b3"], prep["bf1"], prep["bf2"])

    return out[:, 0, :n_actions]


# ----------------------------------------------------------------------------
# Parameters (deterministic synthetic init, PyTorch-layout conv weights).
# ----------------------------------------------------------------------------
def init_qnet_params(key, in_channels, flat_dim, n_actions=6):
    ks = jax.random.split(key, 10)
    s = 0.05
    return {
        "c1_w": jax.random.normal(ks[0], (32, in_channels, 8, 8), jnp.float32) * s,
        "c1_b": jax.random.normal(ks[1], (32,), jnp.float32) * s,
        "c2_w": jax.random.normal(ks[2], (64, 32, 4, 4), jnp.float32) * s,
        "c2_b": jax.random.normal(ks[3], (64,), jnp.float32) * s,
        "c3_w": jax.random.normal(ks[4], (64, 64, 3, 3), jnp.float32) * s,
        "c3_b": jax.random.normal(ks[5], (64,), jnp.float32) * s,
        "fc1_w": jax.random.normal(ks[6], (flat_dim, 512), jnp.float32) * s,
        "fc1_b": jax.random.normal(ks[7], (512,), jnp.float32) * s,
        "fc2_w": jax.random.normal(ks[8], (512, n_actions), jnp.float32) * s,
        "fc2_b": jax.random.normal(ks[9], (n_actions,), jnp.float32) * s,
    }


if __name__ == "__main__":
    # Small Atari-like input: B=2, C=4 stacked frames, 36x36 spatial.
    # Conv stack: 36 -> 8 (k8 s4) -> 3 (k4 s2) -> 1 (k3 s1); flat dim = 64.
    B, C, H, W = 2, 4, 36, 36
    n_actions = 6

    key = jax.random.PRNGKey(0)
    kx, kp = jax.random.split(key)
    x = jax.random.normal(kx, (B, C, H, W), jnp.float32)

    Ho1 = _conv_out(H, 8, 4)
    Ho2 = _conv_out(Ho1, 4, 2)
    Ho3 = _conv_out(Ho2, 3, 1)
    flat_dim = 64 * Ho3 * Ho3

    params = init_qnet_params(kp, C, flat_dim, n_actions)
    prep = prepare_qnet_weights(params, C, H, W, n_actions)   # one-time repack

    # TODO(synk): for very large batches, pack several images per grid step so
    # the conv matmuls get a bigger M dimension (currently 1 image/step).
    q_values = qnet_forward(prep, x, n_actions=n_actions)
    q_values = jax.block_until_ready(q_values)
    assert q_values.shape == (B, n_actions), q_values.shape
    print("KERNEL_OK")
</pallas_src>

<mosaic_0001>
module attributes {stable_mosaic.version = 11 : i64} {
  func.func @_qnet_kernel(%arg0: i32, %arg1: memref<1x9x576xbf16, #tpu.memory_space<vmem>>, %arg2: memref<2x576x256xbf16, #tpu.memory_space<vmem>>, %arg3: memref<4x256x192xbf16, #tpu.memory_space<vmem>>, %arg4: memref<3x192x64xbf16, #tpu.memory_space<vmem>>, %arg5: memref<1x64x512xbf16, #tpu.memory_space<vmem>>, %arg6: memref<512x128xbf16, #tpu.memory_space<vmem>>, %arg7: memref<1x256xf32, #tpu.memory_space<vmem>>, %arg8: memref<1x192xf32, #tpu.memory_space<vmem>>, %arg9: memref<1x64xf32, #tpu.memory_space<vmem>>, %arg10: memref<1x512xf32, #tpu.memory_space<vmem>>, %arg11: memref<1x128xf32, #tpu.memory_space<vmem>>, %arg12: memref<1x1x128xf32, #tpu.memory_space<vmem>>) attributes {dimension_semantics = [#tpu.dimension_semantics<parallel>], iteration_bounds = array<i64: 2>, scalar_prefetch = 0 : i64, scratch_operands = 0 : i64, tpu.core_type = #tpu.core_type<tc>, window_params = [{transform_indices = @transform_0, window_bounds = array<i64: 1, 9, 576>}, {pipeline_mode = #tpu.pipeline_mode<synchronous>, transform_indices = @transform_1, window_bounds = array<i64: 2, 576, 256>}, {pipeline_mode = #tpu.pipeline_mode<synchronous>, transform_indices = @transform_2, window_bounds = array<i64: 4, 256, 192>}, {pipeline_mode = #tpu.pipeline_mode<synchronous>, transform_indices = @transform_3, window_bounds = array<i64: 3, 192, 64>}, {pipeline_mode = #tpu.pipeline_mode<synchronous>, transform_indices = @transform_4, window_bounds = array<i64: 1, 64, 512>}, {pipeline_mode = #tpu.pipeline_mode<synchronous>, transform_indices = @transform_5, window_bounds = array<i64: 512, 128>}, {pipeline_mode = #tpu.pipeline_mode<synchronous>, transform_indices = @transform_6, window_bounds = array<i64: 1, 256>}, {pipeline_mode = #tpu.pipeline_mode<synchronous>, transform_indices = @transform_7, window_bounds = array<i64: 1, 192>}, {pipeline_mode = #tpu.pipeline_mode<synchronous>, transform_indices = @transform_8, window_bounds = array<i64: 1, 64>}, {pipeline_mode = #tpu.pipeline_mode<synchronous>, transform_indices = @transform_9, window_bounds = array<i64: 1, 512>}, {pipeline_mode = #tpu.pipeline_mode<synchronous>, transform_indices = @transform_10, window_bounds = array<i64: 1, 128>}, {transform_indices = @transform_11, window_bounds = array<i64: 1, 1, 128>}]} {
    %c0 = arith.constant 0 : index
    %c0_0 = arith.constant 0 : index
    %c0_1 = arith.constant 0 : index
    %0 = vector.load %arg1[%c0, %c0_0, %c0_1] : memref<1x9x576xbf16, #tpu.memory_space<vmem>>, vector<1x9x576xbf16>
    %1 = vector.shape_cast %0 : vector<1x9x576xbf16> to vector<9x576xbf16>
    %2 = arith.extf %1 : vector<9x576xbf16> to vector<9x576xf32>
    %cst = arith.constant 0.000000e+00 : f32
    %3 = vector.broadcast %cst : f32 to vector<8x256xf32>
    %4 = vector.extract_strided_slice %2 {offsets = [0, 0], sizes = [8, 576], strides = [1, 1]} : vector<9x576xf32> to vector<8x576xf32>
    %c0_2 = arith.constant 0 : index
    %c0_3 = arith.constant 0 : index
    %c0_4 = arith.constant 0 : index
    %5 = vector.load %arg2[%c0_2, %c0_3, %c0_4] : memref<2x576x256xbf16, #tpu.memory_space<vmem>>, vector<1x576x256xbf16>
    %6 = vector.shape_cast %5 : vector<1x576x256xbf16> to vector<576x256xbf16>
    %7 = arith.truncf %4 : vector<8x576xf32> to vector<8x576xbf16>
    %cst_5 = arith.constant dense<0.000000e+00> : vector<8x256xf32>
    %8 = tpu.matmul %7, %6, %cst_5 {dimension_numbers = #tpu.dot_dimension_numbers<[1], [0], [0], [1], [0, 0, 1, 1], [], []>} : vector<8x576xbf16>, vector<576x256xbf16>, vector<8x256xf32> -> vector<8x256xf32>
    %9 = arith.addf %3, %8 : vector<8x256xf32>
    %10 = vector.extract_strided_slice %2 {offsets = [1, 0], sizes = [8, 576], strides = [1, 1]} : vector<9x576xf32> to vector<8x576xf32>
    %c1 = arith.constant 1 : index
    %c0_6 = arith.constant 0 : index
    %c0_7 = arith.constant 0 : index
    %11 = vector.load %arg2[%c1, %c0_6, %c0_7] : memref<2x576x256xbf16, #tpu.memory_space<vmem>>, vector<1x576x256xbf16>
    %12 = vector.shape_cast %11 : vector<1x576x256xbf16> to vector<576x256xbf16>
    %13 = arith.truncf %10 : vector<8x576xf32> to vector<8x576xbf16>
    %cst_8 = arith.constant dense<0.000000e+00> : vector<8x256xf32>
    %14 = tpu.matmul %13, %12, %cst_8 {dimension_numbers = #tpu.dot_dimension_numbers<[1], [0], [0], [1], [0, 0, 1, 1], [], []>} : vector<8x576xbf16>, vector<576x256xbf16>, vector<8x256xf32> -> vector<8x256xf32>
    %15 = arith.addf %9, %14 : vector<8x256xf32>
    %c0_9 = arith.constant 0 : index
    %c0_10 = arith.constant 0 : index
    %16 = vector.load %arg7[%c0_9, %c0_10] : memref<1x256xf32, #tpu.memory_space<vmem>>, vector<1x256xf32>
    %17 = vector.broadcast %16 : vector<1x256xf32> to vector<8x256xf32>
    %18 = arith.addf %15, %17 : vector<8x256xf32>
    %cst_11 = arith.constant 0.000000e+00 : f32
    %19 = vector.broadcast %cst_11 : f32 to vector<8x256xf32>
    %20 = arith.maximumf %18, %19 : vector<8x256xf32>
    %cst_12 = arith.constant 0.000000e+00 : f32
    %21 = vector.broadcast %cst_12 : f32 to vector<3x192xf32>
    %22 = vector.extract_strided_slice %20 {offsets = [0, 0], sizes = [1, 256], strides = [1, 1]} : vector<8x256xf32> to vector<1x256xf32>
    %23 = vector.extract_strided_slice %20 {offsets = [2, 0], sizes = [1, 256], strides = [1, 1]} : vector<8x256xf32> to vector<1x256xf32>
    %24 = vector.extract_strided_slice %20 {offsets = [4, 0], sizes = [1, 256], strides = [1, 1]} : vector<8x256xf32> to vector<1x256xf32>
    %25 = tpu.concatenate %22, %23, %24 in 0 : vector<1x256xf32>, vector<1x256xf32>, vector<1x256xf32> -> vector<3x256xf32>
    %c0_13 = arith.constant 0 : index
    %c0_14 = arith.constant 0 : index
    %c0_15 = arith.constant 0 : index
    %26 = vector.load %arg3[%c0_13, %c0_14, %c0_15] : memref<4x256x192xbf16, #tpu.memory_space<vmem>>, vector<1x256x192xbf16>
    %27 = vector.shape_cast %26 : vector<1x256x192xbf16> to vector<256x192xbf16>
    %28 = arith.truncf %25 : vector<3x256xf32> to vector<3x256xbf16>
    %cst_16 = arith.constant dense<0.000000e+00> : vector<3x192xf32>
    %29 = tpu.matmul %28, %27, %cst_16 {dimension_numbers = #tpu.dot_dimension_numbers<[1], [0], [0], [1], [0, 0, 1, 1], [], []>} : vector<3x256xbf16>, vector<256x192xbf16>, vector<3x192xf32> -> vector<3x192xf32>
    %30 = arith.addf %21, %29 : vector<3x192xf32>
    %31 = vector.extract_strided_slice %20 {offsets = [1, 0], sizes = [1, 256], strides = [1, 1]} : vector<8x256xf32> to vector<1x256xf32>
    %32 = vector.extract_strided_slice %20 {offsets = [3, 0], sizes = [1, 256], strides = [1, 1]} : vector<8x256xf32> to vector<1x256xf32>
    %33 = vector.extract_strided_slice %20 {offsets = [5, 0], sizes = [1, 256], strides = [1, 1]} : vector<8x256xf32> to vector<1x256xf32>
    %34 = tpu.concatenate %31, %32, %33 in 0 : vector<1x256xf32>, vector<1x256xf32>, vector<1x256xf32> -> vector<3x256xf32>
    %c1_17 = arith.constant 1 : index
    %c0_18 = arith.constant 0 : index
    %c0_19 = arith.constant 0 : index
    %35 = vector.load %arg3[%c1_17, %c0_18, %c0_19] : memref<4x256x192xbf16, #tpu.memory_space<vmem>>, vector<1x256x192xbf16>
    %36 = vector.shape_cast %35 : vector<1x256x192xbf16> to vector<256x192xbf16>
    %37 = arith.truncf %34 : vector<3x256xf32> to vector<3x256xbf16>
    %cst_20 = arith.constant dense<0.000000e+00> : vector<3x192xf32>
    %38 = tpu.matmul %37, %36, %cst_20 {dimension_numbers = #tpu.dot_dimension_numbers<[1], [0], [0], [1], [0, 0, 1, 1], [], []>} : vector<3x256xbf16>, vector<256x192xbf16>, vector<3x192xf32> -> vector<3x192xf32>
    %39 = arith.addf %30, %38 : vector<3x192xf32>
    %40 = vector.extract_strided_slice %20 {offsets = [2, 0], sizes = [1, 256], strides = [1, 1]} : vector<8x256xf32> to vector<1x256xf32>
    %41 = vector.extract_strided_slice %20 {offsets = [4, 0], sizes = [1, 256], strides = [1, 1]} : vector<8x256xf32> to vector<1x256xf32>
    %42 = vector.extract_strided_slice %20 {offsets = [6, 0], sizes = [1, 256], strides = [1, 1]} : vector<8x256xf32> to vector<1x256xf32>
    %43 = tpu.concatenate %40, %41, %42 in 0 : vector<1x256xf32>, vector<1x256xf32>, vector<1x256xf32> -> vector<3x256xf32>
    %c2 = arith.constant 2 : index
    %c0_21 = arith.constant 0 : index
    %c0_22 = arith.constant 0 : index
    %44 = vector.load %arg3[%c2, %c0_21, %c0_22] : memref<4x256x192xbf16, #tpu.memory_space<vmem>>, vector<1x256x192xbf16>
    %45 = vector.shape_cast %44 : vector<1x256x192xbf16> to vector<256x192xbf16>
    %46 = arith.truncf %43 : vector<3x256xf32> to vector<3x256xbf16>
    %cst_23 = arith.constant dense<0.000000e+00> : vector<3x192xf32>
    %47 = tpu.matmul %46, %45, %cst_23 {dimension_numbers = #tpu.dot_dimension_numbers<[1], [0], [0], [1], [0, 0, 1, 1], [], []>} : vector<3x256xbf16>, vector<256x192xbf16>, vector<3x192xf32> -> vector<3x192xf32>
    %48 = arith.addf %39, %47 : vector<3x192xf32>
    %49 = vector.extract_strided_slice %20 {offsets = [3, 0], sizes = [1, 256], strides = [1, 1]} : vector<8x256xf32> to vector<1x256xf32>
    %50 = vector.extract_strided_slice %20 {offsets = [5, 0], sizes = [1, 256], strides = [1, 1]} : vector<8x256xf32> to vector<1x256xf32>
    %51 = vector.extract_strided_slice %20 {offsets = [7, 0], sizes = [1, 256], strides = [1, 1]} : vector<8x256xf32> to vector<1x256xf32>
    %52 = tpu.concatenate %49, %50, %51 in 0 : vector<1x256xf32>, vector<1x256xf32>, vector<1x256xf32> -> vector<3x256xf32>
    %c3 = arith.constant 3 : index
    %c0_24 = arith.constant 0 : index
    %c0_25 = arith.constant 0 : index
    %53 = vector.load %arg3[%c3, %c0_24, %c0_25] : memref<4x256x192xbf16, #tpu.memory_space<vmem>>, vector<1x256x192xbf16>
    %54 = vector.shape_cast %53 : vector<1x256x192xbf16> to vector<256x192xbf16>
    %55 = arith.truncf %52 : vector<3x256xf32> to vector<3x256xbf16>
    %cst_26 = arith.constant dense<0.000000e+00> : vector<3x192xf32>
    %56 = tpu.matmul %55, %54, %cst_26 {dimension_numbers = #tpu.dot_dimension_numbers<[1], [0], [0], [1], [0, 0, 1, 1], [], []>} : vector<3x256xbf16>, vector<256x192xbf16>, vector<3x192xf32> -> vector<3x192xf32>
    %57 = arith.addf %48, %56 : vector<3x192xf32>
    %c0_27 = arith.constant 0 : index
    %c0_28 = arith.constant 0 : index
    %58 = vector.load %arg8[%c0_27, %c0_28] : memref<1x192xf32, #tpu.memory_space<vmem>>, vector<1x192xf32>
    %59 = vector.broadcast %58 : vector<1x192xf32> to vector<3x192xf32>
    %60 = arith.addf %57, %59 : vector<3x192xf32>
    %cst_29 = arith.constant 0.000000e+00 : f32
    %61 = vector.broadcast %cst_29 : f32 to vector<3x192xf32>
    %62 = arith.maximumf %60, %61 : vector<3x192xf32>
    %cst_30 = arith.constant 0.000000e+00 : f32
    %63 = vector.broadcast %cst_30 : f32 to vector<1x64xf32>
    %64 = vector.extract_strided_slice %62 {offsets = [0, 0], sizes = [1, 192], strides = [1, 1]} : vector<3x192xf32> to vector<1x192xf32>
    %c0_31 = arith.constant 0 : index
    %c0_32 = arith.constant 0 : index
    %c0_33 = arith.constant 0 : index
    %65 = vector.load %arg4[%c0_31, %c0_32, %c0_33] : memref<3x192x64xbf16, #tpu.memory_space<vmem>>, vector<1x192x64xbf16>
    %66 = vector.shape_cast %65 : vector<1x192x64xbf16> to vector<192x64xbf16>
    %67 = arith.truncf %64 : vector<1x192xf32> to vector<1x192xbf16>
    %cst_34 = arith.constant dense<0.000000e+00> : vector<1x64xf32>
    %68 = tpu.matmul %67, %66, %cst_34 {dimension_numbers = #tpu.dot_dimension_numbers<[1], [0], [0], [1], [0, 0, 1, 1], [], []>} : vector<1x192xbf16>, vector<192x64xbf16>, vector<1x64xf32> -> vector<1x64xf32>
    %69 = arith.addf %63, %68 : vector<1x64xf32>
    %70 = vector.extract_strided_slice %62 {offsets = [1, 0], sizes = [1, 192], strides = [1, 1]} : vector<3x192xf32> to vector<1x192xf32>
    %c1_35 = arith.constant 1 : index
    %c0_36 = arith.constant 0 : index
    %c0_37 = arith.constant 0 : index
    %71 = vector.load %arg4[%c1_35, %c0_36, %c0_37] : memref<3x192x64xbf16, #tpu.memory_space<vmem>>, vector<1x192x64xbf16>
    %72 = vector.shape_cast %71 : vector<1x192x64xbf16> to vector<192x64xbf16>
    %73 = arith.truncf %70 : vector<1x192xf32> to vector<1x192xbf16>
    %cst_38 = arith.constant dense<0.000000e+00> : vector<1x64xf32>
    %74 = tpu.matmul %73, %72, %cst_38 {dimension_numbers = #tpu.dot_dimension_numbers<[1], [0], [0], [1], [0, 0, 1, 1], [], []>} : vector<1x192xbf16>, vector<192x64xbf16>, vector<1x64xf32> -> vector<1x64xf32>
    %75 = arith.addf %69, %74 : vector<1x64xf32>
    %76 = vector.extract_strided_slice %62 {offsets = [2, 0], sizes = [1, 192], strides = [1, 1]} : vector<3x192xf32> to vector<1x192xf32>
    %c2_39 = arith.constant 2 : index
    %c0_40 = arith.constant 0 : index
    %c0_41 = arith.constant 0 : index
    %77 = vector.load %arg4[%c2_39, %c0_40, %c0_41] : memref<3x192x64xbf16, #tpu.memory_space<vmem>>, vector<1x192x64xbf16>
    %78 = vector.shape_cast %77 : vector<1x192x64xbf16> to vector<192x64xbf16>
    %79 = arith.truncf %76 : vector<1x192xf32> to vector<1x192xbf16>
    %cst_42 = arith.constant dense<0.000000e+00> : vector<1x64xf32>
    %80 = tpu.matmul %79, %78, %cst_42 {dimension_numbers = #tpu.dot_dimension_numbers<[1], [0], [0], [1], [0, 0, 1, 1], [], []>} : vector<1x192xbf16>, vector<192x64xbf16>, vector<1x64xf32> -> vector<1x64xf32>
    %81 = arith.addf %75, %80 : vector<1x64xf32>
    %c0_43 = arith.constant 0 : index
    %c0_44 = arith.constant 0 : index
    %82 = vector.load %arg9[%c0_43, %c0_44] : memref<1x64xf32, #tpu.memory_space<vmem>>, vector<1x64xf32>
    %83 = arith.addf %81, %82 : vector<1x64xf32>
    %cst_45 = arith.constant 0.000000e+00 : f32
    %84 = vector.broadcast %cst_45 : f32 to vector<1x64xf32>
    %85 = arith.maximumf %83, %84 : vector<1x64xf32>
    %cst_46 = arith.constant 0.000000e+00 : f32
    %86 = vector.broadcast %cst_46 : f32 to vector<1x512xf32>
    %c0_47 = arith.constant 0 : index
    %c0_48 = arith.constant 0 : index
    %c0_49 = arith.constant 0 : index
    %87 = vector.load %arg5[%c0_47, %c0_48, %c0_49] : memref<1x64x512xbf16, #tpu.memory_space<vmem>>, vector<1x64x512xbf16>
    %88 = vector.shape_cast %87 : vector<1x64x512xbf16> to vector<64x512xbf16>
    %89 = arith.truncf %85 : vector<1x64xf32> to vector<1x64xbf16>
    %cst_50 = arith.constant dense<0.000000e+00> : vector<1x512xf32>
    %90 = tpu.matmul %89, %88, %cst_50 {dimension_numbers = #tpu.dot_dimension_numbers<[1], [0], [0], [1], [0, 0, 1, 1], [], []>} : vector<1x64xbf16>, vector<64x512xbf16>, vector<1x512xf32> -> vector<1x512xf32>
    %91 = arith.addf %86, %90 : vector<1x512xf32>
    %c0_51 = arith.constant 0 : index
    %c0_52 = arith.constant 0 : index
    %92 = vector.load %arg10[%c0_51, %c0_52] : memref<1x512xf32, #tpu.memory_space<vmem>>, vector<1x512xf32>
    %93 = arith.addf %91, %92 : vector<1x512xf32>
    %cst_53 = arith.constant 0.000000e+00 : f32
    %94 = vector.broadcast %cst_53 : f32 to vector<1x512xf32>
    %95 = arith.maximumf %93, %94 : vector<1x512xf32>
    %c0_54 = arith.constant 0 : index
    %c0_55 = arith.constant 0 : index
    %96 = vector.load %arg6[%c0_54, %c0_55] : memref<512x128xbf16, #tpu.memory_space<vmem>>, vector<512x128xbf16>
    %97 = arith.truncf %95 : vector<1x512xf32> to vector<1x512xbf16>
    %cst_56 = arith.constant dense<0.000000e+00> : vector<1x128xf32>
    %98 = tpu.matmul %97, %96, %cst_56 {dimension_numbers = #tpu.dot_dimension_numbers<[1], [0], [0], [1], [0, 0, 1, 1], [], []>} : vector<1x512xbf16>, vector<512x128xbf16>, vector<1x128xf32> -> vector<1x128xf32>
    %c0_57 = arith.constant 0 : index
    %c0_58 = arith.constant 0 : index
    %99 = vector.load %arg11[%c0_57, %c0_58] : memref<1x128xf32, #tpu.memory_space<vmem>>, vector<1x128xf32>
    %100 = arith.addf %98, %99 : vector<1x128xf32>
    %c0_59 = arith.constant 0 : index
    %c0_60 = arith.constant 0 : index
    %c0_61 = arith.constant 0 : index
    %101 = vector.load %arg12[%c0_59, %c0_60, %c0_61] : memref<1x1x128xf32, #tpu.memory_space<vmem>>, vector<1x1x128xf32>
    %102 = vector.shape_cast %101 : vector<1x1x128xf32> to vector<1x128xf32>
    %103 = vector.shape_cast %100 : vector<1x128xf32> to vector<1x1x128xf32>
    tpu.vector_store %arg12[%c0_59, %c0_60, %c0_61], %103 {strides = array<i32>} : memref<1x1x128xf32, #tpu.memory_space<vmem>>, vector<1x1x128xf32>,
    return
  }
  func.func @transform_0(%arg0: i32) -> (i32, i32, i32) {
    %c0_i32 = arith.constant 0 : i32
    %c0_i32_0 = arith.constant 0 : i32
    %c0_i32_1 = arith.constant 0 : i32
    return %arg0, %c0_i32, %c0_i32_0 : i32, i32, i32
  }
  func.func @transform_1(%arg0: i32) -> (i32, i32, i32) {
    %c0_i32 = arith.constant 0 : i32
    %c0_i32_0 = arith.constant 0 : i32
    %c0_i32_1 = arith.constant 0 : i32
    %c0_i32_2 = arith.constant 0 : i32
    return %c0_i32, %c0_i32_0, %c0_i32_1 : i32, i32, i32
  }
  func.func @transform_2(%arg0: i32) -> (i32, i32, i32) {
    %c0_i32 = arith.constant 0 : i32
    %c0_i32_0 = arith.constant 0 : i32
    %c0_i32_1 = arith.constant 0 : i32
    %c0_i32_2 = arith.constant 0 : i32
    return %c0_i32, %c0_i32_0, %c0_i32_1 : i32, i32, i32
  }
  func.func @transform_3(%arg0: i32) -> (i32, i32, i32) {
    %c0_i32 = arith.constant 0 : i32
    %c0_i32_0 = arith.constant 0 : i32
    %c0_i32_1 = arith.constant 0 : i32
    %c0_i32_2 = arith.constant 0 : i32
    return %c0_i32, %c0_i32_0, %c0_i32_1 : i32, i32, i32
  }
  func.func @transform_4(%arg0: i32) -> (i32, i32, i32) {
    %c0_i32 = arith.constant 0 : i32
    %c0_i32_0 = arith.constant 0 : i32
    %c0_i32_1 = arith.constant 0 : i32
    %c0_i32_2 = arith.constant 0 : i32
    return %c0_i32, %c0_i32_0, %c0_i32_1 : i32, i32, i32
  }
  func.func @transform_5(%arg0: i32) -> (i32, i32) {
    %c0_i32 = arith.constant 0 : i32
    %c0_i32_0 = arith.constant 0 : i32
    %c0_i32_1 = arith.constant 0 : i32
    return %c0_i32, %c0_i32_0 : i32, i32
  }
  func.func @transform_6(%arg0: i32) -> (i32, i32) {
    %c0_i32 = arith.constant 0 : i32
    %c0_i32_0 = arith.constant 0 : i32
    %c0_i32_1 = arith.constant 0 : i32
    return %c0_i32, %c0_i32_0 : i32, i32
  }
  func.func @transform_7(%arg0: i32) -> (i32, i32) {
    %c0_i32 = arith.constant 0 : i32
    %c0_i32_0 = arith.constant 0 : i32
    %c0_i32_1 = arith.constant 0 : i32
    return %c0_i32, %c0_i32_0 : i32, i32
  }
  func.func @transform_8(%arg0: i32) -> (i32, i32) {
    %c0_i32 = arith.constant 0 : i32
    %c0_i32_0 = arith.constant 0 : i32
    %c0_i32_1 = arith.constant 0 : i32
    return %c0_i32, %c0_i32_0 : i32, i32
  }
  func.func @transform_9(%arg0: i32) -> (i32, i32) {
    %c0_i32 = arith.constant 0 : i32
    %c0_i32_0 = arith.constant 0 : i32
    %c0_i32_1 = arith.constant 0 : i32
    return %c0_i32, %c0_i32_0 : i32, i32
  }
  func.func @transform_10(%arg0: i32) -> (i32, i32) {
    %c0_i32 = arith.constant 0 : i32
    %c0_i32_0 = arith.constant 0 : i32
    %c0_i32_1 = arith.constant 0 : i32
    return %c0_i32, %c0_i32_0 : i32, i32
  }
  func.func @transform_11(%arg0: i32) -> (i32, i32, i32) {
    %c0_i32 = arith.constant 0 : i32
    %c0_i32_0 = arith.constant 0 : i32
    %c0_i32_1 = arith.constant 0 : i32
    return %arg0, %c0_i32, %c0_i32_0 : i32, i32, i32
  }
}

</mosaic_0001>

<llo_original>
// kernel: qnet_forward.1
$region0: #{qnet_forward.1}
  #allocation0 [shape = 'u32[]', space=smem, size = 0x4, offset = 0x4, fixed_abs, tag = 'smem constant byte address 0x4 - core index']
  #allocation1 [shape = 'u32[72,128]{1,0:T(1,128)}', space=vmem, size = 0x9000, scoped, tag = 'internal scratch']
  %s0 = inlined_call_operand.vmem [shape: bf16[2,9,576], index: 0, kind: input, shape index: {}]
  %s1 = inlined_call_operand.vmem [shape: bf16[2,576,256], index: 1, kind: input, shape index: {}]
  %s2 = inlined_call_operand.vmem [shape: bf16[4,256,192], index: 2, kind: input, shape index: {}]
  %s3 = inlined_call_operand.vmem [shape: bf16[3,192,64], index: 3, kind: input, shape index: {}]
  %s4 = inlined_call_operand.vmem [shape: bf16[1,64,512], index: 4, kind: input, shape index: {}]
  %s5 = inlined_call_operand.vmem [shape: bf16[512,128], index: 5, kind: input, shape index: {}]
  %s6 = inlined_call_operand.vmem [shape: f32[1,256], index: 6, kind: input, shape index: {}]
  %s7 = inlined_call_operand.vmem [shape: f32[1,192], index: 7, kind: input, shape index: {}]
  %s8 = inlined_call_operand.vmem [shape: f32[1,64], index: 8, kind: input, shape index: {}]
  %s9 = inlined_call_operand.vmem [shape: f32[1,512], index: 9, kind: input, shape index: {}]
  %s10 = inlined_call_operand.vmem [shape: f32[1,128], index: 10, kind: input, shape index: {}]
  %s11 = inlined_call_operand.hbm [shape: f32[2,1,128], index: 11, kind: output, shape index: {}]
  %s12 = sld [smem:[#allocation0]]
  $region77: #{qnet_forward.1} parent=0
    _
  %s14 = ssub.s32 1, %s12
  %s15 = scalar_select 0, %s14, %s12
  $region1: #{qnet_forward.1} parent=0
    #allocation2 [shape = 'u8[1024]{0}', space=vmem, size = 0x400, scoped, tag = 'output window, operand 0']
    #allocation3 [shape = 's32[2]{0}', space=sflag, size = 0x8, scoped, tag = 'scoped memory for qnet_forward.1']
    %16 = vsyncpa [#allocation3], 0
    %s17 = scalar_lea.sflag [#allocation3], 1
    %18 = vsyncpa %s17, 0
    loop: start=0, step=1, limit=4
    $region2: #{qnet_forward.1} parent=1 // loop_pre_header
      _
    $region3: #{qnet_forward.1} parent=1 // loop_header
      %s20 = sphi 0, %s24
      %p21 = scmp.ge.s32.totalorder %s20, 4
      %s30 = sphi 0, %s32
      %s33 = sphi 0, %s30
      %s34 = sphi 0, %s33
      %s50 = sphi 0, %s34
      %s54 = sphi 0, %s54
      %s56 = sphi 0, %s54
      %s57 = sphi 0, %s56
      %s71 = sphi 0, %s57
      %s75 = sphi 0, %s75
      %s77 = sphi 0, %s75
      %s78 = sphi 0, %s77
      %s92 = sphi 0, %s78
      %s96 = sphi 0, %s96
      %s98 = sphi 0, %s96
      %s99 = sphi 0, %s98
      %s113 = sphi 0, %s99
      %s117 = sphi 0, %s117
      %s119 = sphi 0, %s117
      %s120 = sphi 0, %s119
      %s134 = sphi 0, %s120
      %s138 = sphi 0, %s138
      %s140 = sphi 0, %s138
      %s141 = sphi 0, %s140
      %s155 = sphi 0, %s141
      %s159 = sphi 0, %s159
      %s161 = sphi 0, %s159
      %s162 = sphi 0, %s161
      %s176 = sphi 0, %s162
      %s180 = sphi 0, %s180
      %s182 = sphi 0, %s180
      %s183 = sphi 0, %s182
      %s197 = sphi 0, %s183
      %s201 = sphi 0, %s201
      %s203 = sphi 0, %s201
      %s204 = sphi 0, %s203
      %s218 = sphi 0, %s204
      %s222 = sphi 0, %s222
      %s224 = sphi 0, %s222
      %s225 = sphi 0, %s224
      %s239 = sphi 0, %s225
      %s243 = sphi 0, %s243
      %s245 = sphi 0, %s243
      %s246 = sphi 0, %s245
      %s260 = sphi 0, %s246
      %s266 = sphi 0, %s268
      %s269 = sphi 0, %s266
      %s270 = sphi 0, %s269
      %s286 = sphi 0, %s270
    $region4: #{qnet_forward.1} parent=1 // loop_header_branch
      %23 = sbr.rel (%p21) target = $region8
    $region5: #{qnet_forward.1} parent=1 // loop_body
      %s25 = ssub.s32 %s20, 1
      %s26 = ssub.s32 %s20, 2
      %s27 = sadd.s32 %s20, 1
      %s28 = ssub.s32 %s20, %s27
      %p29 = scmp.eq.s32.totalorder %s28, 0
      %s31 = sadd.s32 %s30, 1
      %s32 = scalar_select %p29, %s30, %s31
      %p35 = pneg %p29
      %p36 = scmp.eq.s32.totalorder %s20, 1
      %p37 = por %p35, %p36
      %p38 = scmp.ne.s32.totalorder %s30, %s33
      %p39 = scmp.eq.s32.totalorder %s20, 0
      %p40 = por %p38, %p39
      %p41 = scmp.ne.s32.totalorder %s30, %s33
      %p42 = scmp.eq.s32.totalorder %s25, 1
      %p43 = por %p41, %p42
      %p44 = scmp.ne.s32.totalorder %s33, %s34
      %p45 = scmp.eq.s32.totalorder %s25, 0
      %p46 = por %p44, %p45
      %p47 = scmp.ne.s32.totalorder %s33, %s34
      %p48 = scmp.eq.s32.totalorder %s26, 1
      %p49 = por %p47, %p48
      %p51 = scmp.ne.s32.totalorder %s34, %s50
      %p52 = scmp.eq.s32.totalorder %s26, 0
      %p53 = por %p51, %p52
      %s55 = sadd.s32 %s54, 1
      %p58 = scmp.eq.s32.totalorder %s20, 1
      %p59 = scmp.ne.s32.totalorder %s54, %s56
      %p60 = scmp.eq.s32.totalorder %s20, 0
      %p61 = por %p59, %p60
      %p62 = scmp.ne.s32.totalorder %s54, %s56
      %p63 = scmp.eq.s32.totalorder %s25, 1
      %p64 = por %p62, %p63
      %p65 = scmp.ne.s32.totalorder %s56, %s57
      %p66 = scmp.eq.s32.totalorder %s25, 0
      %p67 = por %p65, %p66
      %p68 = scmp.ne.s32.totalorder %s56, %s57
      %p69 = scmp.eq.s32.totalorder %s26, 1
      %p70 = por %p68, %p69
      %p72 = scmp.ne.s32.totalorder %s57, %s71
      %p73 = scmp.eq.s32.totalorder %s26, 0
      %p74 = por %p72, %p73
      %s76 = sadd.s32 %s75, 1
      %p79 = scmp.eq.s32.totalorder %s20, 1
      %p80 = scmp.ne.s32.totalorder %s75, %s77
      %p81 = scmp.eq.s32.totalorder %s20, 0
      %p82 = por %p80, %p81
      %p83 = scmp.ne.s32.totalorder %s75, %s77
      %p84 = scmp.eq.s32.totalorder %s25, 1
      %p85 = por %p83, %p84
      %p86 = scmp.ne.s32.totalorder %s77, %s78
      %p87 = scmp.eq.s32.totalorder %s25, 0
      %p88 = por %p86, %p87
      %p89 = scmp.ne.s32.totalorder %s77, %s78
      %p90 = scmp.eq.s32.totalorder %s26, 1
      %p91 = por %p89, %p90
      %p93 = scmp.ne.s32.totalorder %s78, %s92
      %p94 = scmp.eq.s32.totalorder %s26, 0
      %p95 = por %p93, %p94
      %s97 = sadd.s32 %s96, 1
      %p100 = scmp.eq.s32.totalorder %s20, 1
      %p101 = scmp.ne.s32.totalorder %s96, %s98
      %p102 = scmp.eq.s32.totalorder %s20, 0
      %p103 = por %p101, %p102
      %p104 = scmp.ne.s32.totalorder %s96, %s98
      %p105 = scmp.eq.s32.totalorder %s25, 1
      %p106 = por %p104, %p105
      %p107 = scmp.ne.s32.totalorder %s98, %s99
      %p108 = scmp.eq.s32.totalorder %s25, 0
      %p109 = por %p107, %p108
      %p110 = scmp.ne.s32.totalorder %s98, %s99
      %p111 = scmp.eq.s32.totalorder %s26, 1
      %p112 = por %p110, %p111
      %p114 = scmp.ne.s32.totalorder %s99, %s113
      %p115 = scmp.eq.s32.totalorder %s26, 0
      %p116 = por %p114, %p115
      %s118 = sadd.s32 %s117, 1
      %p121 = scmp.eq.s32.totalorder %s20, 1
      %p122 = scmp.ne.s32.totalorder %s117, %s119
      %p123 = scmp.eq.s32.totalorder %s20, 0
      %p124 = por %p122, %p123
      %p125 = scmp.ne.s32.totalorder %s117, %s119
      %p126 = scmp.eq.s32.totalorder %s25, 1
      %p127 = por %p125, %p126
      %p128 = scmp.ne.s32.totalorder %s119, %s120
      %p129 = scmp.eq.s32.totalorder %s25, 0
      %p130 = por %p128, %p129
      %p131 = scmp.ne.s32.totalorder %s119, %s120
      %p132 = scmp.eq.s32.totalorder %s26, 1
      %p133 = por %p131, %p132
      %p135 = scmp.ne.s32.totalorder %s120, %s134
      %p136 = scmp.eq.s32.totalorder %s26, 0
      %p137 = por %p135, %p136
      %s139 = sadd.s32 %s138, 1
      %p142 = scmp.eq.s32.totalorder %s20, 1
      %p143 = scmp.ne.s32.totalorder %s138, %s140
      %p144 = scmp.eq.s32.totalorder %s20, 0
      %p145 = por %p143, %p144
      %p146 = scmp.ne.s32.totalorder %s138, %s140
      %p147 = scmp.eq.s32.totalorder %s25, 1
      %p148 = por %p146, %p147
      %p149 = scmp.ne.s32.totalorder %s140, %s141
      %p150 = scmp.eq.s32.totalorder %s25, 0
      %p151 = por %p149, %p150
      %p152 = scmp.ne.s32.totalorder %s140, %s141
      %p153 = scmp.eq.s32.totalorder %s26, 1
      %p154 = por %p152, %p153
      %p156 = scmp.ne.s32.totalorder %s141, %s155
      %p157 = scmp.eq.s32.totalorder %s26, 0
      %p158 = por %p156, %p157
      %s160 = sadd.s32 %s159, 1
      %p163 = scmp.eq.s32.totalorder %s20, 1
      %p164 = scmp.ne.s32.totalorder %s159, %s161
      %p165 = scmp.eq.s32.totalorder %s20, 0
      %p166 = por %p164, %p165
      %p167 = scmp.ne.s32.totalorder %s159, %s161
      %p168 = scmp.eq.s32.totalorder %s25, 1
      %p169 = por %p167, %p168
      %p170 = scmp.ne.s32.totalorder %s161, %s162
      %p171 = scmp.eq.s32.totalorder %s25, 0
      %p172 = por %p170, %p171
      %p173 = scmp.ne.s32.totalorder %s161, %s162
      %p174 = scmp.eq.s32.totalorder %s26, 1
      %p175 = por %p173, %p174
      %p177 = scmp.ne.s32.totalorder %s162, %s176
      %p178 = scmp.eq.s32.totalorder %s26, 0
      %p179 = por %p177, %p178
      %s181 = sadd.s32 %s180, 1
      %p184 = scmp.eq.s32.totalorder %s20, 1
      %p185 = scmp.ne.s32.totalorder %s180, %s182
      %p186 = scmp.eq.s32.totalorder %s20, 0
      %p187 = por %p185, %p186
      %p188 = scmp.ne.s32.totalorder %s180, %s182
      %p189 = scmp.eq.s32.totalorder %s25, 1
      %p190 = por %p188, %p189
      %p191 = scmp.ne.s32.totalorder %s182, %s183
      %p192 = scmp.eq.s32.totalorder %s25, 0
      %p193 = por %p191, %p192
      %p194 = scmp.ne.s32.totalorder %s182, %s183
      %p195 = scmp.eq.s32.totalorder %s26, 1
      %p196 = por %p194, %p195
      %p198 = scmp.ne.s32.totalorder %s183, %s197
      %p199 = scmp.eq.s32.totalorder %s26, 0
      %p200 = por %p198, %p199
      %s202 = sadd.s32 %s201, 1
      %p205 = scmp.eq.s32.totalorder %s20, 1
      %p206 = scmp.ne.s32.totalorder %s201, %s203
      %p207 = scmp.eq.s32.totalorder %s20, 0
      %p208 = por %p206, %p207
      %p209 = scmp.ne.s32.totalorder %s201, %s203
      %p210 = scmp.eq.s32.totalorder %s25, 1
      %p211 = por %p209, %p210
      %p212 = scmp.ne.s32.totalorder %s203, %s204
      %p213 = scmp.eq.s32.totalorder %s25, 0
      %p214 = por %p212, %p213
      %p215 = scmp.ne.s32.totalorder %s203, %s204
      %p216 = scmp.eq.s32.totalorder %s26, 1
      %p217 = por %p215, %p216
      %p219 = scmp.ne.s32.totalorder %s204, %s218
      %p220 = scmp.eq.s32.totalorder %s26, 0
      %p221 = por %p219, %p220
      %s223 = sadd.s32 %s222, 1
      %p226 = scmp.eq.s32.totalorder %s20, 1
      %p227 = scmp.ne.s32.totalorder %s222, %s224
      %p228 = scmp.eq.s32.totalorder %s20, 0
      %p229 = por %p227, %p228
      %p230 = scmp.ne.s32.totalorder %s222, %s224
      %p231 = scmp.eq.s32.totalorder %s25, 1
      %p232 = por %p230, %p231
      %p233 = scmp.ne.s32.totalorder %s224, %s225
      %p234 = scmp.eq.s32.totalorder %s25, 0
      %p235 = por %p233, %p234
      %p236 = scmp.ne.s32.totalorder %s224, %s225
      %p237 = scmp.eq.s32.totalorder %s26, 1
      %p238 = por %p236, %p237
      %p240 = scmp.ne.s32.totalorder %s225, %s239
      %p241 = scmp.eq.s32.totalorder %s26, 0
      %p242 = por %p240, %p241
      %s244 = sadd.s32 %s243, 1
      %p247 = scmp.eq.s32.totalorder %s20, 1
      %p248 = scmp.ne.s32.totalorder %s243, %s245
      %p249 = scmp.eq.s32.totalorder %s20, 0
      %p250 = por %p248, %p249
      %p251 = scmp.ne.s32.totalorder %s243, %s245
      %p252 = scmp.eq.s32.totalorder %s25, 1
      %p253 = por %p251, %p252
      %p254 = scmp.ne.s32.totalorder %s245, %s246
      %p255 = scmp.eq.s32.totalorder %s25, 0
      %p256 = por %p254, %p255
      %p257 = scmp.ne.s32.totalorder %s245, %s246
      %p258 = scmp.eq.s32.totalorder %s26, 1
      %p259 = por %p257, %p258
      %p261 = scmp.ne.s32.totalorder %s246, %s260
      %p262 = scmp.eq.s32.totalorder %s26, 0
      %p263 = por %p261, %p262
      %s264 = ssub.s32 %s20, %s27
      %p265 = scmp.eq.s32.totalorder %s264, 0
      %s267 = sadd.s32 %s266, 1
      %s268 = scalar_select %p265, %s266, %s267
      %p271 = pneg %p265
      %p272 = scmp.eq.s32.totalorder %s20, 1
      %p273 = por %p271, %p272
      %p274 = scmp.ne.s32.totalorder %s266, %s269
      %p275 = scmp.eq.s32.totalorder %s20, 0
      %p276 = por %p274, %p275
      %p277 = scmp.ne.s32.totalorder %s266, %s269
      %p278 = scmp.eq.s32.totalorder %s25, 1
      %p279 = por %p277, %p278
      %p280 = scmp.ne.s32.totalorder %s269, %s270
      %p281 = scmp.eq.s32.totalorder %s25, 0
      %p282 = por %p280, %p281
      %p283 = scmp.ne.s32.totalorder %s269, %s270
      %p284 = scmp.eq.s32.totalorder %s26, 1
      %p285 = por %p283, %p284
      %p287 = scmp.ne.s32.totalorder %s270, %s286
      %p288 = scmp.eq.s32.totalorder %s26, 0
      %p289 = por %p287, %p288
      %p290 = scmp.le.s32.totalorder 1, %s20
      %p291 = scmp.lt.s32.totalorder %s20, 3
      %p292 = pnand %p290, %p291
      %p293 = pneg %p292
      // Predicated region
      $region9: #{qnet_forward.1} parent=5 // pred_check
        _
      $region10: #{qnet_forward.1} parent=5 // pred_check_branch
        %295 = sbr.rel (%p292) target = $region12
      $region11: #{qnet_forward.1} parent=5 // pred_region
        %s296 = ssub.s32 %s20, 1
        // Predicated region
        $region13: #{qnet_forward.1} parent=11 // pred_check
          %p297 = pneg %p67
        $region14: #{qnet_forward.1} parent=11 // pred_check_branch
          %299 = sbr.rel (%p297) target = $region16
        $region15: #{qnet_forward.1} parent=11 // pred_region
          _
        $region16: #{qnet_forward.1} parent=11 // pred_fallthru
          _
        // Predicated region
        $region17: #{qnet_forward.1} parent=11 // pred_check
          %p300 = pneg %p88
        $region18: #{qnet_forward.1} parent=11 // pred_check_branch
          %302 = sbr.rel (%p300) target = $region20
        $region19: #{qnet_forward.1} parent=11 // pred_region
          _
        $region20: #{qnet_forward.1} parent=11 // pred_fallthru
          _
        // Predicated region
        $region21: #{qnet_forward.1} parent=11 // pred_check
          %p303 = pneg %p109
        $region22: #{qnet_forward.1} parent=11 // pred_check_branch
          %305 = sbr.rel (%p303) target = $region24
        $region23: #{qnet_forward.1} parent=11 // pred_region
          _
        $region24: #{qnet_forward.1} parent=11 // pred_fallthru
          _
        // Predicated region
        $region25: #{qnet_forward.1} parent=11 // pred_check
          %p306 = pneg %p130
        $region26: #{qnet_forward.1} parent=11 // pred_check_branch
          %308 = sbr.rel (%p306) target = $region28
        $region27: #{qnet_forward.1} parent=11 // pred_region
          _
        $region28: #{qnet_forward.1} parent=11 // pred_fallthru
          _
        // Predicated region
        $region29: #{qnet_forward.1} parent=11 // pred_check
          %p309 = pneg %p151
        $region30: #{qnet_forward.1} parent=11 // pred_check_branch
          %311 = sbr.rel (%p309) target = $region32
        $region31: #{qnet_forward.1} parent=11 // pred_region
          _
        $region32: #{qnet_forward.1} parent=11 // pred_fallthru
          _
        // Predicated region
        $region33: #{qnet_forward.1} parent=11 // pred_check
          %p312 = pneg %p172
        $region34: #{qnet_forward.1} parent=11 // pred_check_branch
          %314 = sbr.rel (%p312) target = $region36
        $region35: #{qnet_forward.1} parent=11 // pred_region
          _
        $region36: #{qnet_forward.1} parent=11 // pred_fallthru
          _
        // Predicated region
        $region37: #{qnet_forward.1} parent=11 // pred_check
          %p315 = pneg %p193
        $region38: #{qnet_forward.1} parent=11 // pred_check_branch
          %317 = sbr.rel (%p315) target = $region40
        $region39: #{qnet_forward.1} parent=11 // pred_region
          _
        $region40: #{qnet_forward.1} parent=11 // pred_fallthru
          _
        // Predicated region
        $region41: #{qnet_forward.1} parent=11 // pred_check
          %p318 = pneg %p214
        $region42: #{qnet_forward.1} parent=11 // pred_check_branch
          %320 = sbr.rel (%p318) target = $region44
        $region43: #{qnet_forward.1} parent=11 // pred_region
          _
        $region44: #{qnet_forward.1} parent=11 // pred_fallthru
          _
        // Predicated region
        $region45: #{qnet_forward.1} parent=11 // pred_check
          %p321 = pneg %p235
        $region46: #{qnet_forward.1} parent=11 // pred_check_branch
          %323 = sbr.rel (%p321) target = $region48
        $region47: #{qnet_forward.1} parent=11 // pred_region
          _
        $region48: #{qnet_forward.1} parent=11 // pred_fallthru
          _
        // Predicated region
        $region49: #{qnet_forward.1} parent=11 // pred_check
          %p324 = pneg %p256
        $region50: #{qnet_forward.1} parent=11 // pred_check_branch
          %326 = sbr.rel (%p324) target = $region52
        $region51: #{qnet_forward.1} parent=11 // pred_region
          _
        $region52: #{qnet_forward.1} parent=11 // pred_fallthru
          _
      $region12: #{qnet_forward.1} parent=5 // pred_fallthru
        _
      %p327 = scmp.lt.s32.totalorder %s20, 2
      // Predicated region
      $region53: #{qnet_forward.1} parent=5 // pred_check
        %p328 = pneg %p327
      $region54: #{qnet_forward.1} parent=5 // pred_check_branch
        %330 = sbr.rel (%p328) target = $region56
      $region55: #{qnet_forward.1} parent=5 // pred_region
        // Predicated region
        $region57: #{qnet_forward.1} parent=55 // pred_check
          %p331 = pneg %p40
        $region58: #{qnet_forward.1} parent=55 // pred_check_branch
          %333 = sbr.rel (%p331) target = $region60
        $region59: #{qnet_forward.1} parent=55 // pred_region
          %p334 = scmp.lt.s32.totalorder %s20, 1
          %s335 = scalar_select %p334, %s20, 1
          %s336 = smul.addr %s335, 10
          %s337 = smul.addr %s336, 4
          %s338 = scalar_lea.vmem %s0, %s337
        $region60: #{qnet_forward.1} parent=55 // pred_fallthru
          _
      $region56: #{qnet_forward.1} parent=5 // pred_fallthru
        _
      %p339 = scmp.le.s32.totalorder 1, %s20
      %p340 = scmp.lt.s32.totalorder %s20, 3
      %p341 = pnand %p339, %p340
      %p342 = pneg %p341
      // Predicated region
      $region61: #{qnet_forward.1} parent=5 // pred_check
        _
      $region62: #{qnet_forward.1} parent=5 // pred_check_branch
        %344 = sbr.rel (%p341) target = $region64
      $region63: #{qnet_forward.1} parent=5 // pred_region
        %s345 = ssub.s32 %s20, 1
        %p346 = scmp.lt.s32.totalorder %s25, 1
        %s347 = scalar_select %p346, %s25, 1
        %s348 = smul.addr %s347, 10
        %s349 = smul.addr %s348, 4
        %s350 = scalar_lea.vmem %s0, %s349
        %p351 = pneg %p46
        %p352 = pneg %p43
        %p353 = pneg %p67
        %p354 = pneg %p64
        %p355 = pneg %p88
        %p356 = pneg %p85
        %p357 = pneg %p109
        %p358 = pneg %p106
        %p359 = pneg %p130
        %p360 = pneg %p127
        %p361 = pneg %p151
        %p362 = pneg %p148
        %p363 = pneg %p172
        %p364 = pneg %p169
        %p365 = pneg %p193
        %p366 = pneg %p190
        %p367 = pneg %p214
        %p368 = pneg %p211
        %p369 = pneg %p235
        %p370 = pneg %p232
        %p371 = pneg %p256
        %p372 = pneg %p253
        %p373 = pneg %p282
        %p374 = pneg %p279
        %s375 = sand.u32 %s269, 1
        %s376 = scalar_lea.sflag [#allocation3], %s375
        %s377 = sand.u32 %s269, 1
        %s378 = scalar_lea.vmem [#allocation2], %s377
        %p379 = scmp.lt.s32.totalorder %s25, 1
        %s380 = scalar_select %p379, %s25, 1
        %s381 = smul.addr %s380, 10
        %s382 = smul.addr %s381, 4
        %s383 = scalar_lea.vmem %s0, %s382
        %v385 = vld [vmem:[%s383] sm:$0xff]
        %v386 = vld [vmem:[%s383 + $0x8] sm:$0xff]
        %v387 = vld [vmem:[%s383 + $0x10] sm:$0xf]
        %v388 = vld [vmem:[%s383 + $0x14] sm:$0x11]
        %v389 = vld [vmem:[%s383 + $0x1c] sm:$0x11]
        %v390 = vld [vmem:[%s383 + $0x24] sm:$0x1]
        %v391 = vunpack.c.l.bf16 %v385
        %v392 = vunpack.c.h.bf16 %v385
        %v393 = vunpack.c.l.bf16 %v386
        %v394 = vunpack.c.h.bf16 %v386
        %v395 = vunpack.c.l.bf16 %v387
        %v396 = vunpack.c.l.bf16 %v388
        %v397 = vunpack.c.h.bf16 %v388
        %v398 = vunpack.c.l.bf16 %v389
        %v399 = vunpack.c.h.bf16 %v389
        %v400 = vunpack.c.l.bf16 %v390
        %v401 = vld [vmem:[%s1] sm:$0xff]
        %v402 = vld [vmem:[%s1 + $0x8] sm:$0xff]
        %v403 = vld [vmem:[%s1 + $0x10] sm:$0xff]
        %v404 = vld [vmem:[%s1 + $0x18] sm:$0xff]
        %v405 = vld [vmem:[%s1 + $0x20] sm:$0xff]
        %v406 = vld [vmem:[%s1 + $0x28] sm:$0xff]
        %v407 = vld [vmem:[%s1 + $0x30] sm:$0xff]
        %v408 = vld [vmem:[%s1 + $0x38] sm:$0xff]
        %v409 = vld [vmem:[%s1 + $0x40] sm:$0xff]
        %v410 = vld [vmem:[%s1 + $0x48] sm:$0xff]
        %v411 = vld [vmem:[%s1 + $0x50] sm:$0xff]
        %v412 = vld [vmem:[%s1 + $0x58] sm:$0xff]
        %v413 = vld [vmem:[%s1 + $0x60] sm:$0xff]
        %v414 = vld [vmem:[%s1 + $0x68] sm:$0xff]
        %v415 = vld [vmem:[%s1 + $0x70] sm:$0xff]
        %v416 = vld [vmem:[%s1 + $0x78] sm:$0xff]
        %v417 = vld [vmem:[%s1 + $0x80] sm:$0xff]
        %v418 = vld [vmem:[%s1 + $0x88] sm:$0xff]
        %v419 = vld [vmem:[%s1 + $0x90] sm:$0xff]
        %v420 = vld [vmem:[%s1 + $0x98] sm:$0xff]
        %v421 = vld [vmem:[%s1 + $0xa0] sm:$0xff]
        %v422 = vld [vmem:[%s1 + $0xa8] sm:$0xff]
        %v423 = vld [vmem:[%s1 + $0xb0] sm:$0xff]
        %v424 = vld [vmem:[%s1 + $0xb8] sm:$0xff]
        %v425 = vld [vmem:[%s1 + $0xc0] sm:$0xff]
        %v426 = vld [vmem:[%s1 + $0xc8] sm:$0xff]
        %v427 = vld [vmem:[%s1 + $0xd0] sm:$0xff]
        %v428 = vld [vmem:[%s1 + $0xd8] sm:$0xff]
        %v429 = vld [vmem:[%s1 + $0xe0] sm:$0xff]
        %v430 = vld [vmem:[%s1 + $0xe8] sm:$0xff]
        %v431 = vld [vmem:[%s1 + $0xf0] sm:$0xff]
        %v432 = vld [vmem:[%s1 + $0xf8] sm:$0xff]
        %v433 = vld [vmem:[%s1 + $0x100] sm:$0xff]
        %v434 = vld [vmem:[%s1 + $0x108] sm:$0xff]
        %v435 = vld [vmem:[%s1 + $0x110] sm:$0xff]
        %v436 = vld [vmem:[%s1 + $0x118] sm:$0xff]
        %v437 = vld [vmem:[%s1 + $0x120] sm:$0xff]
        %v438 = vld [vmem:[%s1 + $0x128] sm:$0xff]
        %v439 = vld [vmem:[%s1 + $0x130] sm:$0xff]
        %v440 = vld [vmem:[%s1 + $0x138] sm:$0xff]
        %v441 = vld [vmem:[%s1 + $0x140] sm:$0xff]
        %v442 = vld [vmem:[%s1 + $0x148] sm:$0xff]
        %v443 = vld [vmem:[%s1 + $0x150] sm:$0xff]
        %v444 = vld [vmem:[%s1 + $0x158] sm:$0xff]
        %v445 = vld [vmem:[%s1 + $0x160] sm:$0xff]
        %v446 = vld [vmem:[%s1 + $0x168] sm:$0xff]
        %v447 = vld [vmem:[%s1 + $0x170] sm:$0xff]
        %v448 = vld [vmem:[%s1 + $0x178] sm:$0xff]
        %v449 = vld [vmem:[%s1 + $0x180] sm:$0xff]
        %v450 = vld [vmem:[%s1 + $0x188] sm:$0xff]
        %v451 = vld [vmem:[%s1 + $0x190] sm:$0xff]
        %v452 = vld [vmem:[%s1 + $0x198] sm:$0xff]
        %v453 = vld [vmem:[%s1 + $0x1a0] sm:$0xff]
        %v454 = vld [vmem:[%s1 + $0x1a8] sm:$0xff]
        %v455 = vld [vmem:[%s1 + $0x1b0] sm:$0xff]
        %v456 = vld [vmem:[%s1 + $0x1b8] sm:$0xff]
        %v457 = vld [vmem:[%s1 + $0x1c0] sm:$0xff]
        %v458 = vld [vmem:[%s1 + $0x1c8] sm:$0xff]
        %v459 = vld [vmem:[%s1 + $0x1d0] sm:$0xff]
        %v460 = vld [vmem:[%s1 + $0x1d8] sm:$0xff]
        %v461 = vld [vmem:[%s1 + $0x1e0] sm:$0xff]
        %v462 = vld [vmem:[%s1 + $0x1e8] sm:$0xff]
        %v463 = vld [vmem:[%s1 + $0x1f0] sm:$0xff]
        %v464 = vld [vmem:[%s1 + $0x1f8] sm:$0xff]
        %v465 = vld [vmem:[%s1 + $0x200] sm:$0xff]
        %v466 = vld [vmem:[%s1 + $0x208] sm:$0xff]
        %v467 = vld [vmem:[%s1 + $0x210] sm:$0xff]
        %v468 = vld [vmem:[%s1 + $0x218] sm:$0xff]
        %v469 = vld [vmem:[%s1 + $0x220] sm:$0xff]
        %v470 = vld [vmem:[%s1 + $0x228] sm:$0xff]
        %v471 = vld [vmem:[%s1 + $0x230] sm:$0xff]
        %v472 = vld [vmem:[%s1 + $0x238] sm:$0xff]
        %v473 = vpack.c.bf16 %v391, %v391
        %v474 = vpack.c.bf16 %v392, %v392
        %v475 = vpack.c.bf16 %v393, %v393
        %v476 = vpack.c.bf16 %v394, %v394
        %v477 = vpack.c.bf16 %v395, %v395
        %s478 = scalar_lea.vmem %s1, 576
        %v479 = vld [vmem:[%s478] sm:$0xff]
        %v480 = vld [vmem:[%s478 + $0x8] sm:$0xff]
        %v481 = vld [vmem:[%s478 + $0x10] sm:$0xff]
        %v482 = vld [vmem:[%s478 + $0x18] sm:$0xff]
        %v483 = vld [vmem:[%s478 + $0x20] sm:$0xff]
        %v484 = vld [vmem:[%s478 + $0x28] sm:$0xff]
        %v485 = vld [vmem:[%s478 + $0x30] sm:$0xff]
        %v486 = vld [vmem:[%s478 + $0x38] sm:$0xff]
        %v487 = vld [vmem:[%s478 + $0x40] sm:$0xff]
        %v488 = vld [vmem:[%s478 + $0x48] sm:$0xff]
        %v489 = vld [vmem:[%s478 + $0x50] sm:$0xff]
        %v490 = vld [vmem:[%s478 + $0x58] sm:$0xff]
        %v491 = vld [vmem:[%s478 + $0x60] sm:$0xff]
        %v492 = vld [vmem:[%s478 + $0x68] sm:$0xff]
        %v493 = vld [vmem:[%s478 + $0x70] sm:$0xff]
        %v494 = vld [vmem:[%s478 + $0x78] sm:$0xff]
        %v495 = vld [vmem:[%s478 + $0x80] sm:$0xff]
        %v496 = vld [vmem:[%s478 + $0x88] sm:$0xff]
        %v497 = vld [vmem:[%s478 + $0x90] sm:$0xff]
        %v498 = vld [vmem:[%s478 + $0x98] sm:$0xff]
        %v499 = vld [vmem:[%s478 + $0xa0] sm:$0xff]
        %v500 = vld [vmem:[%s478 + $0xa8] sm:$0xff]
        %v501 = vld [vmem:[%s478 + $0xb0] sm:$0xff]
        %v502 = vld [vmem:[%s478 + $0xb8] sm:$0xff]
        %v503 = vld [vmem:[%s478 + $0xc0] sm:$0xff]
        %v504 = vld [vmem:[%s478 + $0xc8] sm:$0xff]
        %v505 = vld [vmem:[%s478 + $0xd0] sm:$0xff]
        %v506 = vld [vmem:[%s478 + $0xd8] sm:$0xff]
        %v507 = vld [vmem:[%s478 + $0xe0] sm:$0xff]
        %v508 = vld [vmem:[%s478 + $0xe8] sm:$0xff]
        %v509 = vld [vmem:[%s478 + $0xf0] sm:$0xff]
        %v510 = vld [vmem:[%s478 + $0xf8] sm:$0xff]
        %v511 = vld [vmem:[%s478 + $0x100] sm:$0xff]
        %v512 = vld [vmem:[%s478 + $0x108] sm:$0xff]
        %v513 = vld [vmem:[%s478 + $0x110] sm:$0xff]
        %v514 = vld [vmem:[%s478 + $0x118] sm:$0xff]
        %v515 = vld [vmem:[%s478 + $0x120] sm:$0xff]
        %v516 = vld [vmem:[%s478 + $0x128] sm:$0xff]
        %v517 = vld [vmem:[%s478 + $0x130] sm:$0xff]
        %v518 = vld [vmem:[%s478 + $0x138] sm:$0xff]
        %v519 = vld [vmem:[%s478 + $0x140] sm:$0xff]
        %v520 = vld [vmem:[%s478 + $0x148] sm:$0xff]
        %v521 = vld [vmem:[%s478 + $0x150] sm:$0xff]
        %v522 = vld [vmem:[%s478 + $0x158] sm:$0xff]
        %v523 = vld [vmem:[%s478 + $0x160] sm:$0xff]
        %v524 = vld [vmem:[%s478 + $0x168] sm:$0xff]
        %v525 = vld [vmem:[%s478 + $0x170] sm:$0xff]
        %v526 = vld [vmem:[%s478 + $0x178] sm:$0xff]
        %v527 = vld [vmem:[%s478 + $0x180] sm:$0xff]
        %v528 = vld [vmem:[%s478 + $0x188] sm:$0xff]
        %v529 = vld [vmem:[%s478 + $0x190] sm:$0xff]
        %v530 = vld [vmem:[%s478 + $0x198] sm:$0xff]
        %v531 = vld [vmem:[%s478 + $0x1a0] sm:$0xff]
        %v532 = vld [vmem:[%s478 + $0x1a8] sm:$0xff]
        %v533 = vld [vmem:[%s478 + $0x1b0] sm:$0xff]
        %v534 = vld [vmem:[%s478 + $0x1b8] sm:$0xff]
        %v535 = vld [vmem:[%s478 + $0x1c0] sm:$0xff]
        %v536 = vld [vmem:[%s478 + $0x1c8] sm:$0xff]
        %v537 = vld [vmem:[%s478 + $0x1d0] sm:$0xff]
        %v538 = vld [vmem:[%s478 + $0x1d8] sm:$0xff]
        %v539 = vld [vmem:[%s478 + $0x1e0] sm:$0xff]
        %v540 = vld [vmem:[%s478 + $0x1e8] sm:$0xff]
        %v541 = vld [vmem:[%s478 + $0x1f0] sm:$0xff]
        %v542 = vld [vmem:[%s478 + $0x1f8] sm:$0xff]
        %v543 = vld [vmem:[%s478 + $0x200] sm:$0xff]
        %v544 = vld [vmem:[%s478 + $0x208] sm:$0xff]
        %v545 = vld [vmem:[%s478 + $0x210] sm:$0xff]
        %v546 = vld [vmem:[%s478 + $0x218] sm:$0xff]
        %v547 = vld [vmem:[%s478 + $0x220] sm:$0xff]
        %v548 = vld [vmem:[%s478 + $0x228] sm:$0xff]
        %v549 = vld [vmem:[%s478 + $0x230] sm:$0xff]
        %v550 = vld [vmem:[%s478 + $0x238] sm:$0xff]
        %v551 = vpack.c.bf16 %v396, %v391
        %v552 = vpack.c.bf16 %v397, %v392
        %v553 = vpack.c.bf16 %v398, %v393
        %v554 = vpack.c.bf16 %v399, %v394
        %v555 = vpack.c.bf16 %v400, %v395
        %v557 = vshrl.u32 %v551, 16
        %v559 = vshll.u32 %v551, 16
        %v561 = vrot.slane %v559, 1
        %v562 = vor.u32 %v557, %v561
        %v564 = vshrl.u32 %v552, 16
        %v566 = vshll.u32 %v552, 16
        %v568 = vrot.slane %v566, 1
        %v569 = vor.u32 %v564, %v568
        %v571 = vshrl.u32 %v553, 16
        %v573 = vshll.u32 %v553, 16
        %v575 = vrot.slane %v573, 1
        %v576 = vor.u32 %v571, %v575
        %v578 = vshrl.u32 %v554, 16
        %v580 = vshll.u32 %v554, 16
        %v582 = vrot.slane %v580, 1
        %v583 = vor.u32 %v578, %v582
        %v585 = vshrl.u32 %v555, 16
        %v587 = vshll.u32 %v555, 16
        %v589 = vrot.slane %v587, 1
        %v590 = vor.u32 %v585, %v589
        %v667 = vunpack.c.l.b16 %v479
        %v668 = vunpack.c.h.b16 %v479
        %v669 = vunpack.c.l.b16 %v480
        %v670 = vunpack.c.h.b16 %v480
        %v671 = vunpack.c.l.b16 %v481
        %v672 = vunpack.c.h.b16 %v481
        %v673 = vunpack.c.l.b16 %v482
        %v674 = vunpack.c.h.b16 %v482
        %v675 = vunpack.c.l.b16 %v483
        %v676 = vunpack.c.h.b16 %v483
        %v677 = vunpack.c.l.b16 %v484
        %v678 = vunpack.c.h.b16 %v484
        %v679 = vunpack.c.l.b16 %v485
        %v680 = vunpack.c.h.b16 %v485
        %v681 = vunpack.c.l.b16 %v486
        %v682 = vunpack.c.h.b16 %v486
        %v683 = vunpack.c.l.b16 %v487
        %v684 = vunpack.c.h.b16 %v487
        %v685 = vunpack.c.l.b16 %v488
        %v686 = vunpack.c.h.b16 %v488
        %v687 = vunpack.c.l.b16 %v489
        %v688 = vunpack.c.h.b16 %v489
        %v689 = vunpack.c.l.b16 %v490
        %v690 = vunpack.c.h.b16 %v490
        %v691 = vunpack.c.l.b16 %v491
        %v692 = vunpack.c.h.b16 %v491
        %v693 = vunpack.c.l.b16 %v492
        %v694 = vunpack.c.h.b16 %v492
        %v695 = vunpack.c.l.b16 %v493
        %v696 = vunpack.c.h.b16 %v493
        %v697 = vunpack.c.l.b16 %v494
        %v698 = vunpack.c.h.b16 %v494
        %v699 = vunpack.c.l.b16 %v495
        %v700 = vunpack.c.h.b16 %v495
        %v701 = vunpack.c.l.b16 %v496
        %v702 = vunpack.c.h.b16 %v496
        %v703 = vunpack.c.l.b16 %v497
        %v704 = vunpack.c.h.b16 %v497
        %v705 = vunpack.c.l.b16 %v498
        %v706 = vunpack.c.h.b16 %v498
        %v707 = vunpack.c.l.b16 %v499
        %v708 = vunpack.c.h.b16 %v499
        %v709 = vunpack.c.l.b16 %v500
        %v710 = vunpack.c.h.b16 %v500
        %v711 = vunpack.c.l.b16 %v501
        %v712 = vunpack.c.h.b16 %v501
        %v713 = vunpack.c.l.b16 %v502
        %v714 = vunpack.c.h.b16 %v502
        %v715 = vunpack.c.l.b16 %v503
        %v716 = vunpack.c.h.b16 %v503
        %v717 = vunpack.c.l.b16 %v504
        %v718 = vunpack.c.h.b16 %v504
        %v719 = vunpack.c.l.b16 %v505
        %v720 = vunpack.c.h.b16 %v505
        %v721 = vunpack.c.l.b16 %v506
        %v722 = vunpack.c.h.b16 %v506
        %v723 = vunpack.c.l.b16 %v507
        %v724 = vunpack.c.h.b16 %v507
        %v725 = vunpack.c.l.b16 %v508
        %v726 = vunpack.c.h.b16 %v508
        %v727 = vunpack.c.l.b16 %v509
        %v728 = vunpack.c.h.b16 %v509
        %v729 = vunpack.c.l.b16 %v510
        %v730 = vunpack.c.h.b16 %v510
        %v731 = vunpack.c.l.b16 %v511
        %v732 = vunpack.c.h.b16 %v511
        %v733 = vunpack.c.l.b16 %v512
        %v734 = vunpack.c.h.b16 %v512
        %v735 = vunpack.c.l.b16 %v513
        %v736 = vunpack.c.h.b16 %v513
        %v737 = vunpack.c.l.b16 %v514
        %v738 = vunpack.c.h.b16 %v514
        %v739 = vunpack.c.l.b16 %v515
        %v740 = vunpack.c.h.b16 %v515
        %v741 = vunpack.c.l.b16 %v516
        %v742 = vunpack.c.h.b16 %v516
        %v743 = vunpack.c.l.b16 %v517
        %v744 = vunpack.c.h.b16 %v517
        %v745 = vunpack.c.l.b16 %v518
        %v746 = vunpack.c.h.b16 %v518
        %v747 = vunpack.c.l.b16 %v519
        %v748 = vunpack.c.h.b16 %v519
        %v749 = vunpack.c.l.b16 %v520
        %v750 = vunpack.c.h.b16 %v520
        %v751 = vunpack.c.l.b16 %v521
        %v752 = vunpack.c.h.b16 %v521
        %v753 = vunpack.c.l.b16 %v522
        %v754 = vunpack.c.h.b16 %v522
        %v755 = vunpack.c.l.b16 %v523
        %v756 = vunpack.c.h.b16 %v523
        %v757 = vunpack.c.l.b16 %v524
        %v758 = vunpack.c.h.b16 %v524
        %v759 = vunpack.c.l.b16 %v525
        %v760 = vunpack.c.h.b16 %v525
        %v761 = vunpack.c.l.b16 %v526
        %v762 = vunpack.c.h.b16 %v526
        %v763 = vunpack.c.l.b16 %v527
        %v764 = vunpack.c.h.b16 %v527
        %v765 = vunpack.c.l.b16 %v528
        %v766 = vunpack.c.h.b16 %v528
        %v767 = vunpack.c.l.b16 %v529
        %v768 = vunpack.c.h.b16 %v529
        %v769 = vunpack.c.l.b16 %v530
        %v770 = vunpack.c.h.b16 %v530
        %v771 = vunpack.c.l.b16 %v531
        %v772 = vunpack.c.h.b16 %v531
        %v773 = vunpack.c.l.b16 %v532
        %v774 = vunpack.c.h.b16 %v532
        %v775 = vunpack.c.l.b16 %v533
        %v776 = vunpack.c.h.b16 %v533
        %v777 = vunpack.c.l.b16 %v534
        %v778 = vunpack.c.h.b16 %v534
        %v779 = vunpack.c.l.b16 %v535
        %v780 = vunpack.c.h.b16 %v535
        %v781 = vunpack.c.l.b16 %v536
        %v782 = vunpack.c.h.b16 %v536
        %v783 = vunpack.c.l.b16 %v537
        %v784 = vunpack.c.h.b16 %v537
        %v785 = vunpack.c.l.b16 %v538
        %v786 = vunpack.c.h.b16 %v538
        %v787 = vunpack.c.l.b16 %v539
        %v788 = vunpack.c.h.b16 %v539
        %v789 = vunpack.c.l.b16 %v540
        %v790 = vunpack.c.h.b16 %v540
        %v791 = vunpack.c.l.b16 %v541
        %v792 = vunpack.c.h.b16 %v541
        %v793 = vunpack.c.l.b16 %v542
        %v794 = vunpack.c.h.b16 %v542
        %v795 = vunpack.c.l.b16 %v543
        %v796 = vunpack.c.h.b16 %v543
        %v797 = vunpack.c.l.b16 %v544
        %v798 = vunpack.c.h.b16 %v544
        %v799 = vunpack.c.l.b16 %v545
        %v800 = vunpack.c.h.b16 %v545
        %v801 = vunpack.c.l.b16 %v546
        %v802 = vunpack.c.h.b16 %v546
        %v803 = vunpack.c.l.b16 %v547
        %v804 = vunpack.c.h.b16 %v547
        %v805 = vunpack.c.l.b16 %v548
        %v806 = vunpack.c.h.b16 %v548
        %v807 = vunpack.c.l.b16 %v549
        %v808 = vunpack.c.h.b16 %v549
        %v809 = vunpack.c.l.b16 %v550
        %v810 = vunpack.c.h.b16 %v550
        %v811 = vpack.c.b16 %v669, %v667
        %v812 = vpack.c.b16 %v670, %v668
        %v813 = vpack.c.b16 %v673, %v671
        %v814 = vpack.c.b16 %v674, %v672
        %v815 = vpack.c.b16 %v677, %v675
        %v816 = vpack.c.b16 %v678, %v676
        %v817 = vpack.c.b16 %v681, %v679
        %v818 = vpack.c.b16 %v682, %v680
        %v819 = vpack.c.b16 %v685, %v683
        %v820 = vpack.c.b16 %v686, %v684
        %v821 = vpack.c.b16 %v689, %v687
        %v822 = vpack.c.b16 %v690, %v688
        %v823 = vpack.c.b16 %v693, %v691
        %v824 = vpack.c.b16 %v694, %v692
        %v825 = vpack.c.b16 %v697, %v695
        %v826 = vpack.c.b16 %v698, %v696
        %v827 = vpack.c.b16 %v701, %v699
        %v828 = vpack.c.b16 %v702, %v700
        %v829 = vpack.c.b16 %v705, %v703
        %v830 = vpack.c.b16 %v706, %v704
        %v831 = vpack.c.b16 %v709, %v707
        %v832 = vpack.c.b16 %v710, %v708
        %v833 = vpack.c.b16 %v713, %v711
        %v834 = vpack.c.b16 %v714, %v712
        %v835 = vpack.c.b16 %v717, %v715
        %v836 = vpack.c.b16 %v718, %v716
        %v837 = vpack.c.b16 %v721, %v719
        %v838 = vpack.c.b16 %v722, %v720
        %v839 = vpack.c.b16 %v725, %v723
        %v840 = vpack.c.b16 %v726, %v724
        %v841 = vpack.c.b16 %v729, %v727
        %v842 = vpack.c.b16 %v730, %v728
        %v843 = vpack.c.b16 %v733, %v731
        %v844 = vpack.c.b16 %v734, %v732
        %v845 = vpack.c.b16 %v737, %v735
        %v846 = vpack.c.b16 %v738, %v736
        %v847 = vpack.c.b16 %v741, %v739
        %v848 = vpack.c.b16 %v742, %v740
        %v849 = vpack.c.b16 %v745, %v743
        %v850 = vpack.c.b16 %v746, %v744
        %v851 = vpack.c.b16 %v749, %v747
        %v852 = vpack.c.b16 %v750, %v748
        %v853 = vpack.c.b16 %v753, %v751
        %v854 = vpack.c.b16 %v754, %v752
        %v855 = vpack.c.b16 %v757, %v755
        %v856 = vpack.c.b16 %v758, %v756
        %v857 = vpack.c.b16 %v761, %v759
        %v858 = vpack.c.b16 %v762, %v760
        %v859 = vpack.c.b16 %v765, %v763
        %v860 = vpack.c.b16 %v766, %v764
        %v861 = vpack.c.b16 %v769, %v767
        %v862 = vpack.c.b16 %v770, %v768
        %v863 = vpack.c.b16 %v773, %v771
        %v864 = vpack.c.b16 %v774, %v772
        %v865 = vpack.c.b16 %v777, %v775
        %v866 = vpack.c.b16 %v778, %v776
        %v867 = vpack.c.b16 %v781, %v779
        %v868 = vpack.c.b16 %v782, %v780
        %v869 = vpack.c.b16 %v785, %v783
        %v870 = vpack.c.b16 %v786, %v784
        %v871 = vpack.c.b16 %v789, %v787
        %v872 = vpack.c.b16 %v790, %v788
        %v873 = vpack.c.b16 %v793, %v791
        %v874 = vpack.c.b16 %v794, %v792
        %v875 = vpack.c.b16 %v797, %v795
        %v876 = vpack.c.b16 %v798, %v796
        %v877 = vpack.c.b16 %v801, %v799
        %v878 = vpack.c.b16 %v802, %v800
        %v879 = vpack.c.b16 %v805, %v803
        %v880 = vpack.c.b16 %v806, %v804
        %v881 = vpack.c.b16 %v809, %v807
        %v882 = vpack.c.b16 %v810, %v808
        %vm955 = vcmask 523264
        %v957 = vsel %vm955, %v590, 0
        %959 = vmatpush.bf16.msra.mxu0 %v825
        %960 = vmatpush.bf16.msra.mxu0 %v823
        %961 = vmatpush.bf16.msra.mxu0 %v821
        %962 = vmatpush.bf16.msra.mxu0 %v819
        %963 = vmatpush.bf16.msra.mxu0 %v817
        %964 = vmatpush.bf16.msra.mxu0 %v815
        %965 = vmatpush.bf16.msra.mxu0 %v813
        %966 = vmatpush.bf16.msra.mxu0 %v811
        %967 = vmatmul.bf16.gmra.mxu0 %v562
        %v968 = vpop.f32.mrf.mxu0
        %v969 = vadd.f32 0.0, %v968
        %v970 = vpop.f32.mrf.mxu0
        %971 = vdwg.mxu0
        %972 = vmatpush.bf16.msra.mxu0 %v841
        %973 = vmatpush.bf16.msra.mxu0 %v839
        %974 = vmatpush.bf16.msra.mxu0 %v837
        %975 = vmatpush.bf16.msra.mxu0 %v835
        %976 = vmatpush.bf16.msra.mxu0 %v833
        %977 = vmatpush.bf16.msra.mxu0 %v831
        %978 = vmatpush.bf16.msra.mxu0 %v829
        %979 = vmatpush.bf16.msra.mxu0 %v827
        %980 = vmatmul.bf16.gmra.mxu0 %v569
        %v981 = vpop.f32.mrf.mxu0
        %v982 = vadd.f32 %v969, %v981
        %v983 = vpop.f32.mrf.mxu0
        %984 = vdwg.mxu0
        %985 = vmatpush.bf16.msra.mxu0 %v857
        %986 = vmatpush.bf16.msra.mxu0 %v855
        %987 = vmatpush.bf16.msra.mxu0 %v853
        %988 = vmatpush.bf16.msra.mxu0 %v851
        %989 = vmatpush.bf16.msra.mxu0 %v849
        %990 = vmatpush.bf16.msra.mxu0 %v847
        %991 = vmatpush.bf16.msra.mxu0 %v845
        %992 = vmatpush.bf16.msra.mxu0 %v843
        %993 = vmatmul.bf16.gmra.mxu0 %v576
        %v994 = vpop.f32.mrf.mxu0
        %v995 = vadd.f32 %v982, %v994
        %v996 = vpop.f32.mrf.mxu0
        %997 = vdwg.mxu0
        %998 = vmatpush.bf16.msra.mxu0 %v873
        %999 = vmatpush.bf16.msra.mxu0 %v871
        %1000 = vmatpush.bf16.msra.mxu0 %v869
        %1001 = vmatpush.bf16.msra.mxu0 %v867
        %1002 = vmatpush.bf16.msra.mxu0 %v865
        %1003 = vmatpush.bf16.msra.mxu0 %v863
        %1004 = vmatpush.bf16.msra.mxu0 %v861
        %1005 = vmatpush.bf16.msra.mxu0 %v859
        %1006 = vmatmul.bf16.gmra.mxu0 %v583
        %v1007 = vpop.f32.mrf.mxu0
        %v1008 = vadd.f32 %v995, %v1007
        %v1009 = vpop.f32.mrf.mxu0
        %1010 = vdwg.mxu0
        %1011 = vmatpush.bf16.msra.mxu0 0
        %1012 = vmatpush.bf16.msra.mxu0 0
        %1013 = vmatpush.bf16.msra.mxu0 0
        %1014 = vmatpush.bf16.msra.mxu0 0
        %1015 = vmatpush.bf16.msra.mxu0 %v881
        %1016 = vmatpush.bf16.msra.mxu0 %v879
        %1017 = vmatpush.bf16.msra.mxu0 %v877
        %1018 = vmatpush.bf16.msra.mxu0 %v875
        %1019 = vmatmul.bf16.gmra.mxu0 %v957
        %v1020 = vpop.f32.mrf.mxu0
        %v1021 = vadd.f32 %v1008, %v1020
        %v1022 = vpop.f32.mrf.mxu0
        %1023 = vdwg.mxu0
        %1024 = vmatpush.bf16.msra.mxu0 %v826
        %1025 = vmatpush.bf16.msra.mxu0 %v824
        %1026 = vmatpush.bf16.msra.mxu0 %v822
        %1027 = vmatpush.bf16.msra.mxu0 %v820
        %1028 = vmatpush.bf16.msra.mxu0 %v818
        %1029 = vmatpush.bf16.msra.mxu0 %v816
        %1030 = vmatpush.bf16.msra.mxu0 %v814
        %1031 = vmatpush.bf16.msra.mxu0 %v812
        %1032 = vmatmul.bf16.gmra.mxu0 %v562
        %v1033 = vpop.f32.mrf.mxu0
        %v1034 = vadd.f32 0.0, %v1033
        %v1035 = vpop.f32.mrf.mxu0
        %1036 = vdwg.mxu0
        %1037 = vmatpush.bf16.msra.mxu0 %v842
        %1038 = vmatpush.bf16.msra.mxu0 %v840
        %1039 = vmatpush.bf16.msra.mxu0 %v838
        %1040 = vmatpush.bf16.msra.mxu0 %v836
        %1041 = vmatpush.bf16.msra.mxu0 %v834
        %1042 = vmatpush.bf16.msra.mxu0 %v832
        %1043 = vmatpush.bf16.msra.mxu0 %v830
        %1044 = vmatpush.bf16.msra.mxu0 %v828
        %1045 = vmatmul.bf16.gmra.mxu0 %v569
        %v1046 = vpop.f32.mrf.mxu0
        %v1047 = vadd.f32 %v1034, %v1046
        %v1048 = vpop.f32.mrf.mxu0
        %1049 = vdwg.mxu0
        %1050 = vmatpush.bf16.msra.mxu0 %v858
        %1051 = vmatpush.bf16.msra.mxu0 %v856
        %1052 = vmatpush.bf16.msra.mxu0 %v854
        %1053 = vmatpush.bf16.msra.mxu0 %v852
        %1054 = vmatpush.bf16.msra.mxu0 %v850
        %1055 = vmatpush.bf16.msra.mxu0 %v848
        %1056 = vmatpush.bf16.msra.mxu0 %v846
        %1057 = vmatpush.bf16.msra.mxu0 %v844
        %1058 = vmatmul.bf16.gmra.mxu0 %v576
        %v1059 = vpop.f32.mrf.mxu0
        %v1060 = vadd.f32 %v1047, %v1059
        %v1061 = vpop.f32.mrf.mxu0
        %1062 = vdwg.mxu0
        %1063 = vmatpush.bf16.msra.mxu0 %v874
        %1064 = vmatpush.bf16.msra.mxu0 %v872
        %1065 = vmatpush.bf16.msra.mxu0 %v870
        %1066 = vmatpush.bf16.msra.mxu0 %v868
        %1067 = vmatpush.bf16.msra.mxu0 %v866
        %1068 = vmatpush.bf16.msra.mxu0 %v864
        %1069 = vmatpush.bf16.msra.mxu0 %v862
        %1070 = vmatpush.bf16.msra.mxu0 %v860
        %1071 = vmatmul.bf16.gmra.mxu0 %v583
        %v1072 = vpop.f32.mrf.mxu0
        %v1073 = vadd.f32 %v1060, %v1072
        %v1074 = vpop.f32.mrf.mxu0
        %1075 = vdwg.mxu0
        %1076 = vmatpush.bf16.msra.mxu0 0
        %1077 = vmatpush.bf16.msra.mxu0 0
        %1078 = vmatpush.bf16.msra.mxu0 0
        %1079 = vmatpush.bf16.msra.mxu0 0
        %1080 = vmatpush.bf16.msra.mxu0 %v882
        %1081 = vmatpush.bf16.msra.mxu0 %v880
        %1082 = vmatpush.bf16.msra.mxu0 %v878
        %1083 = vmatpush.bf16.msra.mxu0 %v876
        %1084 = vmatmul.bf16.gmra.mxu0 %v957
        %v1085 = vpop.f32.mrf.mxu0
        %v1086 = vadd.f32 %v1073, %v1085
        %v1087 = vpop.f32.mrf.mxu0
        %1088 = vdwg.mxu0
        %v1161 = vunpack.c.l.b16 %v401
        %v1162 = vunpack.c.h.b16 %v401
        %v1163 = vunpack.c.l.b16 %v402
        %v1164 = vunpack.c.h.b16 %v402
        %v1165 = vunpack.c.l.b16 %v403
        %v1166 = vunpack.c.h.b16 %v403
        %v1167 = vunpack.c.l.b16 %v404
        %v1168 = vunpack.c.h.b16 %v404
        %v1169 = vunpack.c.l.b16 %v405
        %v1170 = vunpack.c.h.b16 %v405
        %v1171 = vunpack.c.l.b16 %v406
        %v1172 = vunpack.c.h.b16 %v406
        %v1173 = vunpack.c.l.b16 %v407
        %v1174 = vunpack.c.h.b16 %v407
        %v1175 = vunpack.c.l.b16 %v408
        %v1176 = vunpack.c.h.b16 %v408
        %v1177 = vunpack.c.l.b16 %v409
        %v1178 = vunpack.c.h.b16 %v409
        %v1179 = vunpack.c.l.b16 %v410
        %v1180 = vunpack.c.h.b16 %v410
        %v1181 = vunpack.c.l.b16 %v411
        %v1182 = vunpack.c.h.b16 %v411
        %v1183 = vunpack.c.l.b16 %v412
        %v1184 = vunpack.c.h.b16 %v412
        %v1185 = vunpack.c.l.b16 %v413
        %v1186 = vunpack.c.h.b16 %v413
        %v1187 = vunpack.c.l.b16 %v414
        %v1188 = vunpack.c.h.b16 %v414
        %v1189 = vunpack.c.l.b16 %v415
        %v1190 = vunpack.c.h.b16 %v415
        %v1191 = vunpack.c.l.b16 %v416
        %v1192 = vunpack.c.h.b16 %v416
        %v1193 = vunpack.c.l.b16 %v417
        %v1194 = vunpack.c.h.b16 %v417
        %v1195 = vunpack.c.l.b16 %v418
        %v1196 = vunpack.c.h.b16 %v418
        %v1197 = vunpack.c.l.b16 %v419
        %v1198 = vunpack.c.h.b16 %v419
        %v1199 = vunpack.c.l.b16 %v420
        %v1200 = vunpack.c.h.b16 %v420
        %v1201 = vunpack.c.l.b16 %v421
        %v1202 = vunpack.c.h.b16 %v421
        %v1203 = vunpack.c.l.b16 %v422
        %v1204 = vunpack.c.h.b16 %v422
        %v1205 = vunpack.c.l.b16 %v423
        %v1206 = vunpack.c.h.b16 %v423
        %v1207 = vunpack.c.l.b16 %v424
        %v1208 = vunpack.c.h.b16 %v424
        %v1209 = vunpack.c.l.b16 %v425
        %v1210 = vunpack.c.h.b16 %v425
        %v1211 = vunpack.c.l.b16 %v426
        %v1212 = vunpack.c.h.b16 %v426
        %v1213 = vunpack.c.l.b16 %v427
        %v1214 = vunpack.c.h.b16 %v427
        %v1215 = vunpack.c.l.b16 %v428
        %v1216 = vunpack.c.h.b16 %v428
        %v1217 = vunpack.c.l.b16 %v429
        %v1218 = vunpack.c.h.b16 %v429
        %v1219 = vunpack.c.l.b16 %v430
        %v1220 = vunpack.c.h.b16 %v430
        %v1221 = vunpack.c.l.b16 %v431
        %v1222 = vunpack.c.h.b16 %v431
        %v1223 = vunpack.c.l.b16 %v432
        %v1224 = vunpack.c.h.b16 %v432
        %v1225 = vunpack.c.l.b16 %v433
        %v1226 = vunpack.c.h.b16 %v433
        %v1227 = vunpack.c.l.b16 %v434
        %v1228 = vunpack.c.h.b16 %v434
        %v1229 = vunpack.c.l.b16 %v435
        %v1230 = vunpack.c.h.b16 %v435
        %v1231 = vunpack.c.l.b16 %v436
        %v1232 = vunpack.c.h.b16 %v436
        %v1233 = vunpack.c.l.b16 %v437
        %v1234 = vunpack.c.h.b16 %v437
        %v1235 = vunpack.c.l.b16 %v438
        %v1236 = vunpack.c.h.b16 %v438
        %v1237 = vunpack.c.l.b16 %v439
        %v1238 = vunpack.c.h.b16 %v439
        %v1239 = vunpack.c.l.b16 %v440
        %v1240 = vunpack.c.h.b16 %v440
        %v1241 = vunpack.c.l.b16 %v441
        %v1242 = vunpack.c.h.b16 %v441
        %v1243 = vunpack.c.l.b16 %v442
        %v1244 = vunpack.c.h.b16 %v442
        %v1245 = vunpack.c.l.b16 %v443
        %v1246 = vunpack.c.h.b16 %v443
        %v1247 = vunpack.c.l.b16 %v444
        %v1248 = vunpack.c.h.b16 %v444
        %v1249 = vunpack.c.l.b16 %v445
        %v1250 = vunpack.c.h.b16 %v445
        %v1251 = vunpack.c.l.b16 %v446
        %v1252 = vunpack.c.h.b16 %v446
        %v1253 = vunpack.c.l.b16 %v447
        %v1254 = vunpack.c.h.b16 %v447
        %v1255 = vunpack.c.l.b16 %v448
        %v1256 = vunpack.c.h.b16 %v448
        %v1257 = vunpack.c.l.b16 %v449
        %v1258 = vunpack.c.h.b16 %v449
        %v1259 = vunpack.c.l.b16 %v450
        %v1260 = vunpack.c.h.b16 %v450
        %v1261 = vunpack.c.l.b16 %v451
        %v1262 = vunpack.c.h.b16 %v451
        %v1263 = vunpack.c.l.b16 %v452
        %v1264 = vunpack.c.h.b16 %v452
        %v1265 = vunpack.c.l.b16 %v453
        %v1266 = vunpack.c.h.b16 %v453
        %v1267 = vunpack.c.l.b16 %v454
        %v1268 = vunpack.c.h.b16 %v454
        %v1269 = vunpack.c.l.b16 %v455
        %v1270 = vunpack.c.h.b16 %v455
        %v1271 = vunpack.c.l.b16 %v456
        %v1272 = vunpack.c.h.b16 %v456
        %v1273 = vunpack.c.l.b16 %v457
        %v1274 = vunpack.c.h.b16 %v457
        %v1275 = vunpack.c.l.b16 %v458
        %v1276 = vunpack.c.h.b16 %v458
        %v1277 = vunpack.c.l.b16 %v459
        %v1278 = vunpack.c.h.b16 %v459
        %v1279 = vunpack.c.l.b16 %v460
        %v1280 = vunpack.c.h.b16 %v460
        %v1281 = vunpack.c.l.b16 %v461
        %v1282 = vunpack.c.h.b16 %v461
        %v1283 = vunpack.c.l.b16 %v462
        %v1284 = vunpack.c.h.b16 %v462
        %v1285 = vunpack.c.l.b16 %v463
        %v1286 = vunpack.c.h.b16 %v463
        %v1287 = vunpack.c.l.b16 %v464
        %v1288 = vunpack.c.h.b16 %v464
        %v1289 = vunpack.c.l.b16 %v465
        %v1290 = vunpack.c.h.b16 %v465
        %v1291 = vunpack.c.l.b16 %v466
        %v1292 = vunpack.c.h.b16 %v466
        %v1293 = vunpack.c.l.b16 %v467
        %v1294 = vunpack.c.h.b16 %v467
        %v1295 = vunpack.c.l.b16 %v468
        %v1296 = vunpack.c.h.b16 %v468
        %v1297 = vunpack.c.l.b16 %v469
        %v1298 = vunpack.c.h.b16 %v469
        %v1299 = vunpack.c.l.b16 %v470
        %v1300 = vunpack.c.h.b16 %v470
        %v1301 = vunpack.c.l.b16 %v471
        %v1302 = vunpack.c.h.b16 %v471
        %v1303 = vunpack.c.l.b16 %v472
        %v1304 = vunpack.c.h.b16 %v472
        %v1305 = vpack.c.b16 %v1163, %v1161
        %v1306 = vpack.c.b16 %v1164, %v1162
        %v1307 = vpack.c.b16 %v1167, %v1165
        %v1308 = vpack.c.b16 %v1168, %v1166
        %v1309 = vpack.c.b16 %v1171, %v1169
        %v1310 = vpack.c.b16 %v1172, %v1170
        %v1311 = vpack.c.b16 %v1175, %v1173
        %v1312 = vpack.c.b16 %v1176, %v1174
        %v1313 = vpack.c.b16 %v1179, %v1177
        %v1314 = vpack.c.b16 %v1180, %v1178
        %v1315 = vpack.c.b16 %v1183, %v1181
        %v1316 = vpack.c.b16 %v1184, %v1182
        %v1317 = vpack.c.b16 %v1187, %v1185
        %v1318 = vpack.c.b16 %v1188, %v1186
        %v1319 = vpack.c.b16 %v1191, %v1189
        %v1320 = vpack.c.b16 %v1192, %v1190
        %v1321 = vpack.c.b16 %v1195, %v1193
        %v1322 = vpack.c.b16 %v1196, %v1194
        %v1323 = vpack.c.b16 %v1199, %v1197
        %v1324 = vpack.c.b16 %v1200, %v1198
        %v1325 = vpack.c.b16 %v1203, %v1201
        %v1326 = vpack.c.b16 %v1204, %v1202
        %v1327 = vpack.c.b16 %v1207, %v1205
        %v1328 = vpack.c.b16 %v1208, %v1206
        %v1329 = vpack.c.b16 %v1211, %v1209
        %v1330 = vpack.c.b16 %v1212, %v1210
        %v1331 = vpack.c.b16 %v1215, %v1213
        %v1332 = vpack.c.b16 %v1216, %v1214
        %v1333 = vpack.c.b16 %v1219, %v1217
        %v1334 = vpack.c.b16 %v1220, %v1218
        %v1335 = vpack.c.b16 %v1223, %v1221
        %v1336 = vpack.c.b16 %v1224, %v1222
        %v1337 = vpack.c.b16 %v1227, %v1225
        %v1338 = vpack.c.b16 %v1228, %v1226
        %v1339 = vpack.c.b16 %v1231, %v1229
        %v1340 = vpack.c.b16 %v1232, %v1230
        %v1341 = vpack.c.b16 %v1235, %v1233
        %v1342 = vpack.c.b16 %v1236, %v1234
        %v1343 = vpack.c.b16 %v1239, %v1237
        %v1344 = vpack.c.b16 %v1240, %v1238
        %v1345 = vpack.c.b16 %v1243, %v1241
        %v1346 = vpack.c.b16 %v1244, %v1242
        %v1347 = vpack.c.b16 %v1247, %v1245
        %v1348 = vpack.c.b16 %v1248, %v1246
        %v1349 = vpack.c.b16 %v1251, %v1249
        %v1350 = vpack.c.b16 %v1252, %v1250
        %v1351 = vpack.c.b16 %v1255, %v1253
        %v1352 = vpack.c.b16 %v1256, %v1254
        %v1353 = vpack.c.b16 %v1259, %v1257
        %v1354 = vpack.c.b16 %v1260, %v1258
        %v1355 = vpack.c.b16 %v1263, %v1261
        %v1356 = vpack.c.b16 %v1264, %v1262
        %v1357 = vpack.c.b16 %v1267, %v1265
        %v1358 = vpack.c.b16 %v1268, %v1266
        %v1359 = vpack.c.b16 %v1271, %v1269
        %v1360 = vpack.c.b16 %v1272, %v1270
        %v1361 = vpack.c.b16 %v1275, %v1273
        %v1362 = vpack.c.b16 %v1276, %v1274
        %v1363 = vpack.c.b16 %v1279, %v1277
        %v1364 = vpack.c.b16 %v1280, %v1278
        %v1365 = vpack.c.b16 %v1283, %v1281
        %v1366 = vpack.c.b16 %v1284, %v1282
        %v1367 = vpack.c.b16 %v1287, %v1285
        %v1368 = vpack.c.b16 %v1288, %v1286
        %v1369 = vpack.c.b16 %v1291, %v1289
        %v1370 = vpack.c.b16 %v1292, %v1290
        %v1371 = vpack.c.b16 %v1295, %v1293
        %v1372 = vpack.c.b16 %v1296, %v1294
        %v1373 = vpack.c.b16 %v1299, %v1297
        %v1374 = vpack.c.b16 %v1300, %v1298
        %v1375 = vpack.c.b16 %v1303, %v1301
        %v1376 = vpack.c.b16 %v1304, %v1302
        %v1450 = vsel %vm955, %v477, 0
        %1452 = vmatpush.bf16.msra.mxu0 %v1319
        %1453 = vmatpush.bf16.msra.mxu0 %v1317
        %1454 = vmatpush.bf16.msra.mxu0 %v1315
        %1455 = vmatpush.bf16.msra.mxu0 %v1313
        %1456 = vmatpush.bf16.msra.mxu0 %v1311
        %1457 = vmatpush.bf16.msra.mxu0 %v1309
        %1458 = vmatpush.bf16.msra.mxu0 %v1307
        %1459 = vmatpush.bf16.msra.mxu0 %v1305
        %1460 = vmatmul.bf16.gmra.mxu0 %v473
        %v1461 = vpop.f32.mrf.mxu0
        %v1462 = vadd.f32 %v1021, %v1461
        %v1463 = vpop.f32.mrf.mxu0
        %1464 = vdwg.mxu0
        %1465 = vmatpush.bf16.msra.mxu0 %v1335
        %1466 = vmatpush.bf16.msra.mxu0 %v1333
        %1467 = vmatpush.bf16.msra.mxu0 %v1331
        %1468 = vmatpush.bf16.msra.mxu0 %v1329
        %1469 = vmatpush.bf16.msra.mxu0 %v1327
        %1470 = vmatpush.bf16.msra.mxu0 %v1325
        %1471 = vmatpush.bf16.msra.mxu0 %v1323
        %1472 = vmatpush.bf16.msra.mxu0 %v1321
        %1473 = vmatmul.bf16.gmra.mxu0 %v474
        %v1474 = vpop.f32.mrf.mxu0
        %v1475 = vadd.f32 %v1462, %v1474
        %v1476 = vpop.f32.mrf.mxu0
        %1477 = vdwg.mxu0
        %1478 = vmatpush.bf16.msra.mxu0 %v1351
        %1479 = vmatpush.bf16.msra.mxu0 %v1349
        %1480 = vmatpush.bf16.msra.mxu0 %v1347
        %1481 = vmatpush.bf16.msra.mxu0 %v1345
        %1482 = vmatpush.bf16.msra.mxu0 %v1343
        %1483 = vmatpush.bf16.msra.mxu0 %v1341
        %1484 = vmatpush.bf16.msra.mxu0 %v1339
        %1485 = vmatpush.bf16.msra.mxu0 %v1337
        %1486 = vmatmul.bf16.gmra.mxu0 %v475
        %v1487 = vpop.f32.mrf.mxu0
        %v1488 = vadd.f32 %v1475, %v1487
        %v1489 = vpop.f32.mrf.mxu0
        %1490 = vdwg.mxu0
        %1491 = vmatpush.bf16.msra.mxu0 %v1367
        %1492 = vmatpush.bf16.msra.mxu0 %v1365
        %1493 = vmatpush.bf16.msra.mxu0 %v1363
        %1494 = vmatpush.bf16.msra.mxu0 %v1361
        %1495 = vmatpush.bf16.msra.mxu0 %v1359
        %1496 = vmatpush.bf16.msra.mxu0 %v1357
        %1497 = vmatpush.bf16.msra.mxu0 %v1355
        %1498 = vmatpush.bf16.msra.mxu0 %v1353
        %1499 = vmatmul.bf16.gmra.mxu0 %v476
        %v1500 = vpop.f32.mrf.mxu0
        %v1501 = vadd.f32 %v1488, %v1500
        %v1502 = vpop.f32.mrf.mxu0
        %1503 = vdwg.mxu0
        %1504 = vmatpush.bf16.msra.mxu0 0
        %1505 = vmatpush.bf16.msra.mxu0 0
        %1506 = vmatpush.bf16.msra.mxu0 0
        %1507 = vmatpush.bf16.msra.mxu0 0
        %1508 = vmatpush.bf16.msra.mxu0 %v1375
        %1509 = vmatpush.bf16.msra.mxu0 %v1373
        %1510 = vmatpush.bf16.msra.mxu0 %v1371
        %1511 = vmatpush.bf16.msra.mxu0 %v1369
        %1512 = vmatmul.bf16.gmra.mxu0 %v1450
        %v1513 = vpop.f32.mrf.mxu0
        %v1514 = vadd.f32 %v1501, %v1513
        %v1515 = vpop.f32.mrf.mxu0
        %1516 = vdwg.mxu0
        %1517 = vmatpush.bf16.msra.mxu0 %v1320
        %1518 = vmatpush.bf16.msra.mxu0 %v1318
        %1519 = vmatpush.bf16.msra.mxu0 %v1316
        %1520 = vmatpush.bf16.msra.mxu0 %v1314
        %1521 = vmatpush.bf16.msra.mxu0 %v1312
        %1522 = vmatpush.bf16.msra.mxu0 %v1310
        %1523 = vmatpush.bf16.msra.mxu0 %v1308
        %1524 = vmatpush.bf16.msra.mxu0 %v1306
        %1525 = vmatmul.bf16.gmra.mxu0 %v473
        %v1526 = vpop.f32.mrf.mxu0
        %v1527 = vadd.f32 %v1086, %v1526
        %v1528 = vpop.f32.mrf.mxu0
        %1529 = vdwg.mxu0
        %1530 = vmatpush.bf16.msra.mxu0 %v1336
        %1531 = vmatpush.bf16.msra.mxu0 %v1334
        %1532 = vmatpush.bf16.msra.mxu0 %v1332
        %1533 = vmatpush.bf16.msra.mxu0 %v1330
        %1534 = vmatpush.bf16.msra.mxu0 %v1328
        %1535 = vmatpush.bf16.msra.mxu0 %v1326
        %1536 = vmatpush.bf16.msra.mxu0 %v1324
        %1537 = vmatpush.bf16.msra.mxu0 %v1322
        %1538 = vmatmul.bf16.gmra.mxu0 %v474
        %v1539 = vpop.f32.mrf.mxu0
        %v1540 = vadd.f32 %v1527, %v1539
        %v1541 = vpop.f32.mrf.mxu0
        %1542 = vdwg.mxu0
        %1543 = vmatpush.bf16.msra.mxu0 %v1352
        %1544 = vmatpush.bf16.msra.mxu0 %v1350
        %1545 = vmatpush.bf16.msra.mxu0 %v1348
        %1546 = vmatpush.bf16.msra.mxu0 %v1346
        %1547 = vmatpush.bf16.msra.mxu0 %v1344
        %1548 = vmatpush.bf16.msra.mxu0 %v1342
        %1549 = vmatpush.bf16.msra.mxu0 %v1340
        %1550 = vmatpush.bf16.msra.mxu0 %v1338
        %1551 = vmatmul.bf16.gmra.mxu0 %v475
        %v1552 = vpop.f32.mrf.mxu0
        %v1553 = vadd.f32 %v1540, %v1552
        %v1554 = vpop.f32.mrf.mxu0
        %1555 = vdwg.mxu0
        %1556 = vmatpush.bf16.msra.mxu0 %v1368
        %1557 = vmatpush.bf16.msra.mxu0 %v1366
        %1558 = vmatpush.bf16.msra.mxu0 %v1364
        %1559 = vmatpush.bf16.msra.mxu0 %v1362
        %1560 = vmatpush.bf16.msra.mxu0 %v1360
        %1561 = vmatpush.bf16.msra.mxu0 %v1358
        %1562 = vmatpush.bf16.msra.mxu0 %v1356
        %1563 = vmatpush.bf16.msra.mxu0 %v1354
        %1564 = vmatmul.bf16.gmra.mxu0 %v476
        %v1565 = vpop.f32.mrf.mxu0
        %v1566 = vadd.f32 %v1553, %v1565
        %v1567 = vpop.f32.mrf.mxu0
        %1568 = vdwg.mxu0
        %1569 = vmatpush.bf16.msra.mxu0 0
        %1570 = vmatpush.bf16.msra.mxu0 0
        %1571 = vmatpush.bf16.msra.mxu0 0
        %1572 = vmatpush.bf16.msra.mxu0 0
        %1573 = vmatpush.bf16.msra.mxu0 %v1376
        %1574 = vmatpush.bf16.msra.mxu0 %v1374
        %1575 = vmatpush.bf16.msra.mxu0 %v1372
        %1576 = vmatpush.bf16.msra.mxu0 %v1370
        %1577 = vmatmul.bf16.gmra.mxu0 %v1450
        %v1578 = vpop.f32.mrf.mxu0
        %v1579 = vadd.f32 %v1566, %v1578
        %v1580 = vpop.f32.mrf.mxu0
        %1581 = vdwg.mxu0
        %v1582 = vld [vmem:[%s6] sm:$0x3]
        %v1584 = vperm.slane %v1582, 0
        %v1585 = vperm.slane %v1582, 1
        %v1588 = vadd.f32 %v1514, %v1584
        %v1589 = vadd.f32 %v1579, %v1585
        %v1590 = vmax.f32 %v1588, 0.0
        %v1591 = vmax.f32 %v1589, 0.0
        %v1594 = vrot.slane %v1590, 1
        %v1595 = vrot.slane %v1591, 1
        %v1598 = vrot.slane %v1590, 2
        %v1599 = vrot.slane %v1591, 2
        %vm1602 = vcmask 1040384
        %v1603 = vsel %vm1602, %v1590, %v1594
        %v1604 = vsel %vm1602, %v1591, %v1595
        %vm1605 = vcmask 1041408
        %v1606 = vsel %vm1605, %v1603, %v1598
        %v1607 = vsel %vm1605, %v1604, %v1599
        %v1608 = vld [vmem:[%s2] sm:$0xff]
        %v1609 = vld [vmem:[%s2 + $0x8] sm:$0xff]
        %v1610 = vld [vmem:[%s2 + $0x10] sm:$0xff]
        %v1611 = vld [vmem:[%s2 + $0x18] sm:$0xff]
        %v1612 = vld [vmem:[%s2 + $0x20] sm:$0xff]
        %v1613 = vld [vmem:[%s2 + $0x28] sm:$0xff]
        %v1614 = vld [vmem:[%s2 + $0x30] sm:$0xff]
        %v1615 = vld [vmem:[%s2 + $0x38] sm:$0xff]
        %v1616 = vld [vmem:[%s2 + $0x40] sm:$0xff]
        %v1617 = vld [vmem:[%s2 + $0x48] sm:$0xff]
        %v1618 = vld [vmem:[%s2 + $0x50] sm:$0xff]
        %v1619 = vld [vmem:[%s2 + $0x58] sm:$0xff]
        %v1620 = vld [vmem:[%s2 + $0x60] sm:$0xff]
        %v1621 = vld [vmem:[%s2 + $0x68] sm:$0xff]
        %v1622 = vld [vmem:[%s2 + $0x70] sm:$0xff]
        %v1623 = vld [vmem:[%s2 + $0x78] sm:$0xff]
        %v1624 = vld [vmem:[%s2 + $0x80] sm:$0xff]
        %v1625 = vld [vmem:[%s2 + $0x88] sm:$0xff]
        %v1626 = vld [vmem:[%s2 + $0x90] sm:$0xff]
        %v1627 = vld [vmem:[%s2 + $0x98] sm:$0xff]
        %v1628 = vld [vmem:[%s2 + $0xa0] sm:$0xff]
        %v1629 = vld [vmem:[%s2 + $0xa8] sm:$0xff]
        %v1630 = vld [vmem:[%s2 + $0xb0] sm:$0xff]
        %v1631 = vld [vmem:[%s2 + $0xb8] sm:$0xff]
        %v1632 = vld [vmem:[%s2 + $0xc0] sm:$0xff]
        %v1633 = vld [vmem:[%s2 + $0xc8] sm:$0xff]
        %v1634 = vld [vmem:[%s2 + $0xd0] sm:$0xff]
        %v1635 = vld [vmem:[%s2 + $0xd8] sm:$0xff]
        %v1636 = vld [vmem:[%s2 + $0xe0] sm:$0xff]
        %v1637 = vld [vmem:[%s2 + $0xe8] sm:$0xff]
        %v1638 = vld [vmem:[%s2 + $0xf0] sm:$0xff]
        %v1639 = vld [vmem:[%s2 + $0xf8] sm:$0xff]
        %v1640 = vpack.c.bf16 %v1606, %v1606
        %v1641 = vpack.c.bf16 %v1607, %v1607
        %v1642 = vrot.slane %v1590, 3
        %v1643 = vrot.slane %v1591, 3
        %v1646 = vsel %vm1602, %v1594, %v1598
        %v1647 = vsel %vm1602, %v1595, %v1599
        %v1648 = vsel %vm1605, %v1646, %v1642
        %v1649 = vsel %vm1605, %v1647, %v1643
        %s1650 = scalar_lea.vmem %s2, 256
        %v1651 = vld [vmem:[%s1650] sm:$0xff]
        %v1652 = vld [vmem:[%s1650 + $0x8] sm:$0xff]
        %v1653 = vld [vmem:[%s1650 + $0x10] sm:$0xff]
        %v1654 = vld [vmem:[%s1650 + $0x18] sm:$0xff]
        %v1655 = vld [vmem:[%s1650 + $0x20] sm:$0xff]
        %v1656 = vld [vmem:[%s1650 + $0x28] sm:$0xff]
        %v1657 = vld [vmem:[%s1650 + $0x30] sm:$0xff]
        %v1658 = vld [vmem:[%s1650 + $0x38] sm:$0xff]
        %v1659 = vld [vmem:[%s1650 + $0x40] sm:$0xff]
        %v1660 = vld [vmem:[%s1650 + $0x48] sm:$0xff]
        %v1661 = vld [vmem:[%s1650 + $0x50] sm:$0xff]
        %v1662 = vld [vmem:[%s1650 + $0x58] sm:$0xff]
        %v1663 = vld [vmem:[%s1650 + $0x60] sm:$0xff]
        %v1664 = vld [vmem:[%s1650 + $0x68] sm:$0xff]
        %v1665 = vld [vmem:[%s1650 + $0x70] sm:$0xff]
        %v1666 = vld [vmem:[%s1650 + $0x78] sm:$0xff]
        %v1667 = vld [vmem:[%s1650 + $0x80] sm:$0xff]
        %v1668 = vld [vmem:[%s1650 + $0x88] sm:$0xff]
        %v1669 = vld [vmem:[%s1650 + $0x90] sm:$0xff]
        %v1670 = vld [vmem:[%s1650 + $0x98] sm:$0xff]
        %v1671 = vld [vmem:[%s1650 + $0xa0] sm:$0xff]
        %v1672 = vld [vmem:[%s1650 + $0xa8] sm:$0xff]
        %v1673 = vld [vmem:[%s1650 + $0xb0] sm:$0xff]
        %v1674 = vld [vmem:[%s1650 + $0xb8] sm:$0xff]
        %v1675 = vld [vmem:[%s1650 + $0xc0] sm:$0xff]
        %v1676 = vld [vmem:[%s1650 + $0xc8] sm:$0xff]
        %v1677 = vld [vmem:[%s1650 + $0xd0] sm:$0xff]
        %v1678 = vld [vmem:[%s1650 + $0xd8] sm:$0xff]
        %v1679 = vld [vmem:[%s1650 + $0xe0] sm:$0xff]
        %v1680 = vld [vmem:[%s1650 + $0xe8] sm:$0xff]
        %v1681 = vld [vmem:[%s1650 + $0xf0] sm:$0xff]
        %v1682 = vld [vmem:[%s1650 + $0xf8] sm:$0xff]
        %v1683 = vpack.c.bf16 %v1648, %v1648
        %v1684 = vpack.c.bf16 %v1649, %v1649
        %v1717 = vunpack.c.l.b16 %v1651
        %v1718 = vunpack.c.h.b16 %v1651
        %v1719 = vunpack.c.l.b16 %v1652
        %v1720 = vunpack.c.h.b16 %v1652
        %v1721 = vunpack.c.l.b16 %v1653
        %v1722 = vunpack.c.h.b16 %v1653
        %v1723 = vunpack.c.l.b16 %v1654
        %v1724 = vunpack.c.h.b16 %v1654
        %v1725 = vunpack.c.l.b16 %v1655
        %v1726 = vunpack.c.h.b16 %v1655
        %v1727 = vunpack.c.l.b16 %v1656
        %v1728 = vunpack.c.h.b16 %v1656
        %v1729 = vunpack.c.l.b16 %v1657
        %v1730 = vunpack.c.h.b16 %v1657
        %v1731 = vunpack.c.l.b16 %v1658
        %v1732 = vunpack.c.h.b16 %v1658
        %v1733 = vunpack.c.l.b16 %v1659
        %v1734 = vunpack.c.h.b16 %v1659
        %v1735 = vunpack.c.l.b16 %v1660
        %v1736 = vunpack.c.h.b16 %v1660
        %v1737 = vunpack.c.l.b16 %v1661
        %v1738 = vunpack.c.h.b16 %v1661
        %v1739 = vunpack.c.l.b16 %v1662
        %v1740 = vunpack.c.h.b16 %v1662
        %v1741 = vunpack.c.l.b16 %v1663
        %v1742 = vunpack.c.h.b16 %v1663
        %v1743 = vunpack.c.l.b16 %v1664
        %v1744 = vunpack.c.h.b16 %v1664
        %v1745 = vunpack.c.l.b16 %v1665
        %v1746 = vunpack.c.h.b16 %v1665
        %v1747 = vunpack.c.l.b16 %v1666
        %v1748 = vunpack.c.h.b16 %v1666
        %v1749 = vunpack.c.l.b16 %v1667
        %v1750 = vunpack.c.h.b16 %v1667
        %v1751 = vunpack.c.l.b16 %v1668
        %v1752 = vunpack.c.h.b16 %v1668
        %v1753 = vunpack.c.l.b16 %v1669
        %v1754 = vunpack.c.h.b16 %v1669
        %v1755 = vunpack.c.l.b16 %v1670
        %v1756 = vunpack.c.h.b16 %v1670
        %v1757 = vunpack.c.l.b16 %v1671
        %v1758 = vunpack.c.h.b16 %v1671
        %v1759 = vunpack.c.l.b16 %v1672
        %v1760 = vunpack.c.h.b16 %v1672
        %v1761 = vunpack.c.l.b16 %v1673
        %v1762 = vunpack.c.h.b16 %v1673
        %v1763 = vunpack.c.l.b16 %v1674
        %v1764 = vunpack.c.h.b16 %v1674
        %v1765 = vunpack.c.l.b16 %v1675
        %v1766 = vunpack.c.h.b16 %v1675
        %v1767 = vunpack.c.l.b16 %v1676
        %v1768 = vunpack.c.h.b16 %v1676
        %v1769 = vunpack.c.l.b16 %v1677
        %v1770 = vunpack.c.h.b16 %v1677
        %v1771 = vunpack.c.l.b16 %v1678
        %v1772 = vunpack.c.h.b16 %v1678
        %v1773 = vunpack.c.l.b16 %v1679
        %v1774 = vunpack.c.h.b16 %v1679
        %v1775 = vunpack.c.l.b16 %v1680
        %v1776 = vunpack.c.h.b16 %v1680
        %v1777 = vunpack.c.l.b16 %v1681
        %v1778 = vunpack.c.h.b16 %v1681
        %v1779 = vunpack.c.l.b16 %v1682
        %v1780 = vunpack.c.h.b16 %v1682
        %v1781 = vpack.c.b16 %v1719, %v1717
        %v1782 = vpack.c.b16 %v1720, %v1718
        %v1783 = vpack.c.b16 %v1723, %v1721
        %v1784 = vpack.c.b16 %v1724, %v1722
        %v1785 = vpack.c.b16 %v1727, %v1725
        %v1786 = vpack.c.b16 %v1728, %v1726
        %v1787 = vpack.c.b16 %v1731, %v1729
        %v1788 = vpack.c.b16 %v1732, %v1730
        %v1789 = vpack.c.b16 %v1735, %v1733
        %v1790 = vpack.c.b16 %v1736, %v1734
        %v1791 = vpack.c.b16 %v1739, %v1737
        %v1792 = vpack.c.b16 %v1740, %v1738
        %v1793 = vpack.c.b16 %v1743, %v1741
        %v1794 = vpack.c.b16 %v1744, %v1742
        %v1795 = vpack.c.b16 %v1747, %v1745
        %v1796 = vpack.c.b16 %v1748, %v1746
        %v1797 = vpack.c.b16 %v1751, %v1749
        %v1798 = vpack.c.b16 %v1752, %v1750
        %v1799 = vpack.c.b16 %v1755, %v1753
        %v1800 = vpack.c.b16 %v1756, %v1754
        %v1801 = vpack.c.b16 %v1759, %v1757
        %v1802 = vpack.c.b16 %v1760, %v1758
        %v1803 = vpack.c.b16 %v1763, %v1761
        %v1804 = vpack.c.b16 %v1764, %v1762
        %v1805 = vpack.c.b16 %v1767, %v1765
        %v1806 = vpack.c.b16 %v1768, %v1766
        %v1807 = vpack.c.b16 %v1771, %v1769
        %v1808 = vpack.c.b16 %v1772, %v1770
        %v1809 = vpack.c.b16 %v1775, %v1773
        %v1810 = vpack.c.b16 %v1776, %v1774
        %v1811 = vpack.c.b16 %v1779, %v1777
        %v1812 = vpack.c.b16 %v1780, %v1778
        %1845 = vmatpush.bf16.msra.mxu0 %v1795
        %1846 = vmatpush.bf16.msra.mxu0 %v1793
        %1847 = vmatpush.bf16.msra.mxu0 %v1791
        %1848 = vmatpush.bf16.msra.mxu0 %v1789
        %1849 = vmatpush.bf16.msra.mxu0 %v1787
        %1850 = vmatpush.bf16.msra.mxu0 %v1785
        %1851 = vmatpush.bf16.msra.mxu0 %v1783
        %1852 = vmatpush.bf16.msra.mxu0 %v1781
        %1853 = vmatmul.bf16.gmra.mxu0 %v1683
        %v1854 = vpop.f32.mrf.mxu0
        %v1855 = vadd.f32 0.0, %v1854
        %v1856 = vpop.f32.mrf.mxu0
        %1857 = vdwg.mxu0
        %1858 = vmatpush.bf16.msra.mxu0 %v1811
        %1859 = vmatpush.bf16.msra.mxu0 %v1809
        %1860 = vmatpush.bf16.msra.mxu0 %v1807
        %1861 = vmatpush.bf16.msra.mxu0 %v1805
        %1862 = vmatpush.bf16.msra.mxu0 %v1803
        %1863 = vmatpush.bf16.msra.mxu0 %v1801
        %1864 = vmatpush.bf16.msra.mxu0 %v1799
        %1865 = vmatpush.bf16.msra.mxu0 %v1797
        %1866 = vmatmul.bf16.gmra.mxu0 %v1684
        %v1867 = vpop.f32.mrf.mxu0
        %v1868 = vadd.f32 %v1855, %v1867
        %v1869 = vpop.f32.mrf.mxu0
        %1870 = vdwg.mxu0
        %1871 = vmatpush.bf16.msra.mxu0 %v1796
        %1872 = vmatpush.bf16.msra.mxu0 %v1794
        %1873 = vmatpush.bf16.msra.mxu0 %v1792
        %1874 = vmatpush.bf16.msra.mxu0 %v1790
        %1875 = vmatpush.bf16.msra.mxu0 %v1788
        %1876 = vmatpush.bf16.msra.mxu0 %v1786
        %1877 = vmatpush.bf16.msra.mxu0 %v1784
        %1878 = vmatpush.bf16.msra.mxu0 %v1782
        %1879 = vmatmul.bf16.gmra.mxu0 %v1683
        %v1880 = vpop.f32.mrf.mxu0
        %v1881 = vadd.f32 0.0, %v1880
        %v1882 = vpop.f32.mrf.mxu0
        %1883 = vdwg.mxu0
        %1884 = vmatpush.bf16.msra.mxu0 %v1812
        %1885 = vmatpush.bf16.msra.mxu0 %v1810
        %1886 = vmatpush.bf16.msra.mxu0 %v1808
        %1887 = vmatpush.bf16.msra.mxu0 %v1806
        %1888 = vmatpush.bf16.msra.mxu0 %v1804
        %1889 = vmatpush.bf16.msra.mxu0 %v1802
        %1890 = vmatpush.bf16.msra.mxu0 %v1800
        %1891 = vmatpush.bf16.msra.mxu0 %v1798
        %1892 = vmatmul.bf16.gmra.mxu0 %v1684
        %v1893 = vpop.f32.mrf.mxu0
        %v1894 = vadd.f32 %v1881, %v1893
        %v1895 = vpop.f32.mrf.mxu0
        %1896 = vdwg.mxu0
        %v1929 = vunpack.c.l.b16 %v1608
        %v1930 = vunpack.c.h.b16 %v1608
        %v1931 = vunpack.c.l.b16 %v1609
        %v1932 = vunpack.c.h.b16 %v1609
        %v1933 = vunpack.c.l.b16 %v1610
        %v1934 = vunpack.c.h.b16 %v1610
        %v1935 = vunpack.c.l.b16 %v1611
        %v1936 = vunpack.c.h.b16 %v1611
        %v1937 = vunpack.c.l.b16 %v1612
        %v1938 = vunpack.c.h.b16 %v1612
        %v1939 = vunpack.c.l.b16 %v1613
        %v1940 = vunpack.c.h.b16 %v1613
        %v1941 = vunpack.c.l.b16 %v1614
        %v1942 = vunpack.c.h.b16 %v1614
        %v1943 = vunpack.c.l.b16 %v1615
        %v1944 = vunpack.c.h.b16 %v1615
        %v1945 = vunpack.c.l.b16 %v1616
        %v1946 = vunpack.c.h.b16 %v1616
        %v1947 = vunpack.c.l.b16 %v1617
        %v1948 = vunpack.c.h.b16 %v1617
        %v1949 = vunpack.c.l.b16 %v1618
        %v1950 = vunpack.c.h.b16 %v1618
        %v1951 = vunpack.c.l.b16 %v1619
        %v1952 = vunpack.c.h.b16 %v1619
        %v1953 = vunpack.c.l.b16 %v1620
        %v1954 = vunpack.c.h.b16 %v1620
        %v1955 = vunpack.c.l.b16 %v1621
        %v1956 = vunpack.c.h.b16 %v1621
        %v1957 = vunpack.c.l.b16 %v1622
        %v1958 = vunpack.c.h.b16 %v1622
        %v1959 = vunpack.c.l.b16 %v1623
        %v1960 = vunpack.c.h.b16 %v1623
        %v1961 = vunpack.c.l.b16 %v1624
        %v1962 = vunpack.c.h.b16 %v1624
        %v1963 = vunpack.c.l.b16 %v1625
        %v1964 = vunpack.c.h.b16 %v1625
        %v1965 = vunpack.c.l.b16 %v1626
        %v1966 = vunpack.c.h.b16 %v1626
        %v1967 = vunpack.c.l.b16 %v1627
        %v1968 = vunpack.c.h.b16 %v1627
        %v1969 = vunpack.c.l.b16 %v1628
        %v1970 = vunpack.c.h.b16 %v1628
        %v1971 = vunpack.c.l.b16 %v1629
        %v1972 = vunpack.c.h.b16 %v1629
        %v1973 = vunpack.c.l.b16 %v1630
        %v1974 = vunpack.c.h.b16 %v1630
        %v1975 = vunpack.c.l.b16 %v1631
        %v1976 = vunpack.c.h.b16 %v1631
        %v1977 = vunpack.c.l.b16 %v1632
        %v1978 = vunpack.c.h.b16 %v1632
        %v1979 = vunpack.c.l.b16 %v1633
        %v1980 = vunpack.c.h.b16 %v1633
        %v1981 = vunpack.c.l.b16 %v1634
        %v1982 = vunpack.c.h.b16 %v1634
        %v1983 = vunpack.c.l.b16 %v1635
        %v1984 = vunpack.c.h.b16 %v1635
        %v1985 = vunpack.c.l.b16 %v1636
        %v1986 = vunpack.c.h.b16 %v1636
        %v1987 = vunpack.c.l.b16 %v1637
        %v1988 = vunpack.c.h.b16 %v1637
        %v1989 = vunpack.c.l.b16 %v1638
        %v1990 = vunpack.c.h.b16 %v1638
        %v1991 = vunpack.c.l.b16 %v1639
        %v1992 = vunpack.c.h.b16 %v1639
        %v1993 = vpack.c.b16 %v1931, %v1929
        %v1994 = vpack.c.b16 %v1932, %v1930
        %v1995 = vpack.c.b16 %v1935, %v1933
        %v1996 = vpack.c.b16 %v1936, %v1934
        %v1997 = vpack.c.b16 %v1939, %v1937
        %v1998 = vpack.c.b16 %v1940, %v1938
        %v1999 = vpack.c.b16 %v1943, %v1941
        %v2000 = vpack.c.b16 %v1944, %v1942
        %v2001 = vpack.c.b16 %v1947, %v1945
        %v2002 = vpack.c.b16 %v1948, %v1946
        %v2003 = vpack.c.b16 %v1951, %v1949
        %v2004 = vpack.c.b16 %v1952, %v1950
        %v2005 = vpack.c.b16 %v1955, %v1953
        %v2006 = vpack.c.b16 %v1956, %v1954
        %v2007 = vpack.c.b16 %v1959, %v1957
        %v2008 = vpack.c.b16 %v1960, %v1958
        %v2009 = vpack.c.b16 %v1963, %v1961
        %v2010 = vpack.c.b16 %v1964, %v1962
        %v2011 = vpack.c.b16 %v1967, %v1965
        %v2012 = vpack.c.b16 %v1968, %v1966
        %v2013 = vpack.c.b16 %v1971, %v1969
        %v2014 = vpack.c.b16 %v1972, %v1970
        %v2015 = vpack.c.b16 %v1975, %v1973
        %v2016 = vpack.c.b16 %v1976, %v1974
        %v2017 = vpack.c.b16 %v1979, %v1977
        %v2018 = vpack.c.b16 %v1980, %v1978
        %v2019 = vpack.c.b16 %v1983, %v1981
        %v2020 = vpack.c.b16 %v1984, %v1982
        %v2021 = vpack.c.b16 %v1987, %v1985
        %v2022 = vpack.c.b16 %v1988, %v1986
        %v2023 = vpack.c.b16 %v1991, %v1989
        %v2024 = vpack.c.b16 %v1992, %v1990
        %2057 = vmatpush.bf16.msra.mxu0 %v2007
        %2058 = vmatpush.bf16.msra.mxu0 %v2005
        %2059 = vmatpush.bf16.msra.mxu0 %v2003
        %2060 = vmatpush.bf16.msra.mxu0 %v2001
        %2061 = vmatpush.bf16.msra.mxu0 %v1999
        %2062 = vmatpush.bf16.msra.mxu0 %v1997
        %2063 = vmatpush.bf16.msra.mxu0 %v1995
        %2064 = vmatpush.bf16.msra.mxu0 %v1993
        %2065 = vmatmul.bf16.gmra.mxu0 %v1640
        %v2066 = vpop.f32.mrf.mxu0
        %v2067 = vadd.f32 %v1868, %v2066
        %v2068 = vpop.f32.mrf.mxu0
        %2069 = vdwg.mxu0
        %2070 = vmatpush.bf16.msra.mxu0 %v2023
        %2071 = vmatpush.bf16.msra.mxu0 %v2021
        %2072 = vmatpush.bf16.msra.mxu0 %v2019
        %2073 = vmatpush.bf16.msra.mxu0 %v2017
        %2074 = vmatpush.bf16.msra.mxu0 %v2015
        %2075 = vmatpush.bf16.msra.mxu0 %v2013
        %2076 = vmatpush.bf16.msra.mxu0 %v2011
        %2077 = vmatpush.bf16.msra.mxu0 %v2009
        %2078 = vmatmul.bf16.gmra.mxu0 %v1641
        %v2079 = vpop.f32.mrf.mxu0
        %v2080 = vadd.f32 %v2067, %v2079
        %v2081 = vpop.f32.mrf.mxu0
        %2082 = vdwg.mxu0
        %2083 = vmatpush.bf16.msra.mxu0 %v2008
        %2084 = vmatpush.bf16.msra.mxu0 %v2006
        %2085 = vmatpush.bf16.msra.mxu0 %v2004
        %2086 = vmatpush.bf16.msra.mxu0 %v2002
        %2087 = vmatpush.bf16.msra.mxu0 %v2000
        %2088 = vmatpush.bf16.msra.mxu0 %v1998
        %2089 = vmatpush.bf16.msra.mxu0 %v1996
        %2090 = vmatpush.bf16.msra.mxu0 %v1994
        %2091 = vmatmul.bf16.gmra.mxu0 %v1640
        %v2092 = vpop.f32.mrf.mxu0
        %v2093 = vadd.f32 %v1894, %v2092
        %v2094 = vpop.f32.mrf.mxu0
        %2095 = vdwg.mxu0
        %2096 = vmatpush.bf16.msra.mxu0 %v2024
        %2097 = vmatpush.bf16.msra.mxu0 %v2022
        %2098 = vmatpush.bf16.msra.mxu0 %v2020
        %2099 = vmatpush.bf16.msra.mxu0 %v2018
        %2100 = vmatpush.bf16.msra.mxu0 %v2016
        %2101 = vmatpush.bf16.msra.mxu0 %v2014
        %2102 = vmatpush.bf16.msra.mxu0 %v2012
        %2103 = vmatpush.bf16.msra.mxu0 %v2010
        %2104 = vmatmul.bf16.gmra.mxu0 %v1641
        %v2105 = vpop.f32.mrf.mxu0
        %v2106 = vadd.f32 %v2093, %v2105
        %v2107 = vpop.f32.mrf.mxu0
        %2108 = vdwg.mxu0
        %v2109 = vrot.slane %v1590, 4
        %v2110 = vrot.slane %v1591, 4
        %v2113 = vsel %vm1602, %v1598, %v1642
        %v2114 = vsel %vm1602, %v1599, %v1643
        %v2115 = vsel %vm1605, %v2113, %v2109
        %v2116 = vsel %vm1605, %v2114, %v2110
        %s2117 = scalar_lea.vmem %s2, 512
        %v2118 = vld [vmem:[%s2117] sm:$0xff]
        %v2119 = vld [vmem:[%s2117 + $0x8] sm:$0xff]
        %v2120 = vld [vmem:[%s2117 + $0x10] sm:$0xff]
        %v2121 = vld [vmem:[%s2117 + $0x18] sm:$0xff]
        %v2122 = vld [vmem:[%s2117 + $0x20] sm:$0xff]
        %v2123 = vld [vmem:[%s2117 + $0x28] sm:$0xff]
        %v2124 = vld [vmem:[%s2117 + $0x30] sm:$0xff]
        %v2125 = vld [vmem:[%s2117 + $0x38] sm:$0xff]
        %v2126 = vld [vmem:[%s2117 + $0x40] sm:$0xff]
        %v2127 = vld [vmem:[%s2117 + $0x48] sm:$0xff]
        %v2128 = vld [vmem:[%s2117 + $0x50] sm:$0xff]
        %v2129 = vld [vmem:[%s2117 + $0x58] sm:$0xff]
        %v2130 = vld [vmem:[%s2117 + $0x60] sm:$0xff]
        %v2131 = vld [vmem:[%s2117 + $0x68] sm:$0xff]
        %v2132 = vld [vmem:[%s2117 + $0x70] sm:$0xff]
        %v2133 = vld [vmem:[%s2117 + $0x78] sm:$0xff]
        %v2134 = vld [vmem:[%s2117 + $0x80] sm:$0xff]
        %v2135 = vld [vmem:[%s2117 + $0x88] sm:$0xff]
        %v2136 = vld [vmem:[%s2117 + $0x90] sm:$0xff]
        %v2137 = vld [vmem:[%s2117 + $0x98] sm:$0xff]
        %v2138 = vld [vmem:[%s2117 + $0xa0] sm:$0xff]
        %v2139 = vld [vmem:[%s2117 + $0xa8] sm:$0xff]
        %v2140 = vld [vmem:[%s2117 + $0xb0] sm:$0xff]
        %v2141 = vld [vmem:[%s2117 + $0xb8] sm:$0xff]
        %v2142 = vld [vmem:[%s2117 + $0xc0] sm:$0xff]
        %v2143 = vld [vmem:[%s2117 + $0xc8] sm:$0xff]
        %v2144 = vld [vmem:[%s2117 + $0xd0] sm:$0xff]
        %v2145 = vld [vmem:[%s2117 + $0xd8] sm:$0xff]
        %v2146 = vld [vmem:[%s2117 + $0xe0] sm:$0xff]
        %v2147 = vld [vmem:[%s2117 + $0xe8] sm:$0xff]
        %v2148 = vld [vmem:[%s2117 + $0xf0] sm:$0xff]
        %v2149 = vld [vmem:[%s2117 + $0xf8] sm:$0xff]
        %v2150 = vpack.c.bf16 %v2115, %v2115
        %v2151 = vpack.c.bf16 %v2116, %v2116
        %v2184 = vunpack.c.l.b16 %v2118
        %v2185 = vunpack.c.h.b16 %v2118
        %v2186 = vunpack.c.l.b16 %v2119
        %v2187 = vunpack.c.h.b16 %v2119
        %v2188 = vunpack.c.l.b16 %v2120
        %v2189 = vunpack.c.h.b16 %v2120
        %v2190 = vunpack.c.l.b16 %v2121
        %v2191 = vunpack.c.h.b16 %v2121
        %v2192 = vunpack.c.l.b16 %v2122
        %v2193 = vunpack.c.h.b16 %v2122
        %v2194 = vunpack.c.l.b16 %v2123
        %v2195 = vunpack.c.h.b16 %v2123
        %v2196 = vunpack.c.l.b16 %v2124
        %v2197 = vunpack.c.h.b16 %v2124
        %v2198 = vunpack.c.l.b16 %v2125
        %v2199 = vunpack.c.h.b16 %v2125
        %v2200 = vunpack.c.l.b16 %v2126
        %v2201 = vunpack.c.h.b16 %v2126
        %v2202 = vunpack.c.l.b16 %v2127
        %v2203 = vunpack.c.h.b16 %v2127
        %v2204 = vunpack.c.l.b16 %v2128
        %v2205 = vunpack.c.h.b16 %v2128
        %v2206 = vunpack.c.l.b16 %v2129
        %v2207 = vunpack.c.h.b16 %v2129
        %v2208 = vunpack.c.l.b16 %v2130
        %v2209 = vunpack.c.h.b16 %v2130
        %v2210 = vunpack.c.l.b16 %v2131
        %v2211 = vunpack.c.h.b16 %v2131
        %v2212 = vunpack.c.l.b16 %v2132
        %v2213 = vunpack.c.h.b16 %v2132
        %v2214 = vunpack.c.l.b16 %v2133
        %v2215 = vunpack.c.h.b16 %v2133
        %v2216 = vunpack.c.l.b16 %v2134
        %v2217 = vunpack.c.h.b16 %v2134
        %v2218 = vunpack.c.l.b16 %v2135
        %v2219 = vunpack.c.h.b16 %v2135
        %v2220 = vunpack.c.l.b16 %v2136
        %v2221 = vunpack.c.h.b16 %v2136
        %v2222 = vunpack.c.l.b16 %v2137
        %v2223 = vunpack.c.h.b16 %v2137
        %v2224 = vunpack.c.l.b16 %v2138
        %v2225 = vunpack.c.h.b16 %v2138
        %v2226 = vunpack.c.l.b16 %v2139
        %v2227 = vunpack.c.h.b16 %v2139
        %v2228 = vunpack.c.l.b16 %v2140
        %v2229 = vunpack.c.h.b16 %v2140
        %v2230 = vunpack.c.l.b16 %v2141
        %v2231 = vunpack.c.h.b16 %v2141
        %v2232 = vunpack.c.l.b16 %v2142
        %v2233 = vunpack.c.h.b16 %v2142
        %v2234 = vunpack.c.l.b16 %v2143
        %v2235 = vunpack.c.h.b16 %v2143
        %v2236 = vunpack.c.l.b16 %v2144
        %v2237 = vunpack.c.h.b16 %v2144
        %v2238 = vunpack.c.l.b16 %v2145
        %v2239 = vunpack.c.h.b16 %v2145
        %v2240 = vunpack.c.l.b16 %v2146
        %v2241 = vunpack.c.h.b16 %v2146
        %v2242 = vunpack.c.l.b16 %v2147
        %v2243 = vunpack.c.h.b16 %v2147
        %v2244 = vunpack.c.l.b16 %v2148
        %v2245 = vunpack.c.h.b16 %v2148
        %v2246 = vunpack.c.l.b16 %v2149
        %v2247 = vunpack.c.h.b16 %v2149
        %v2248 = vpack.c.b16 %v2186, %v2184
        %v2249 = vpack.c.b16 %v2187, %v2185
        %v2250 = vpack.c.b16 %v2190, %v2188
        %v2251 = vpack.c.b16 %v2191, %v2189
        %v2252 = vpack.c.b16 %v2194, %v2192
        %v2253 = vpack.c.b16 %v2195, %v2193
        %v2254 = vpack.c.b16 %v2198, %v2196
        %v2255 = vpack.c.b16 %v2199, %v2197
        %v2256 = vpack.c.b16 %v2202, %v2200
        %v2257 = vpack.c.b16 %v2203, %v2201
        %v2258 = vpack.c.b16 %v2206, %v2204
        %v2259 = vpack.c.b16 %v2207, %v2205
        %v2260 = vpack.c.b16 %v2210, %v2208
        %v2261 = vpack.c.b16 %v2211, %v2209
        %v2262 = vpack.c.b16 %v2214, %v2212
        %v2263 = vpack.c.b16 %v2215, %v2213
        %v2264 = vpack.c.b16 %v2218, %v2216
        %v2265 = vpack.c.b16 %v2219, %v2217
        %v2266 = vpack.c.b16 %v2222, %v2220
        %v2267 = vpack.c.b16 %v2223, %v2221
        %v2268 = vpack.c.b16 %v2226, %v2224
        %v2269 = vpack.c.b16 %v2227, %v2225
        %v2270 = vpack.c.b16 %v2230, %v2228
        %v2271 = vpack.c.b16 %v2231, %v2229
        %v2272 = vpack.c.b16 %v2234, %v2232
        %v2273 = vpack.c.b16 %v2235, %v2233
        %v2274 = vpack.c.b16 %v2238, %v2236
        %v2275 = vpack.c.b16 %v2239, %v2237
        %v2276 = vpack.c.b16 %v2242, %v2240
        %v2277 = vpack.c.b16 %v2243, %v2241
        %v2278 = vpack.c.b16 %v2246, %v2244
        %v2279 = vpack.c.b16 %v2247, %v2245
        %2312 = vmatpush.bf16.msra.mxu0 %v2262
        %2313 = vmatpush.bf16.msra.mxu0 %v2260
        %2314 = vmatpush.bf16.msra.mxu0 %v2258
        %2315 = vmatpush.bf16.msra.mxu0 %v2256
        %2316 = vmatpush.bf16.msra.mxu0 %v2254
        %2317 = vmatpush.bf16.msra.mxu0 %v2252
        %2318 = vmatpush.bf16.msra.mxu0 %v2250
        %2319 = vmatpush.bf16.msra.mxu0 %v2248
        %2320 = vmatmul.bf16.gmra.mxu0 %v2150
        %v2321 = vpop.f32.mrf.mxu0
        %v2322 = vadd.f32 0.0, %v2321
        %v2323 = vpop.f32.mrf.mxu0
        %2324 = vdwg.mxu0
        %2325 = vmatpush.bf16.msra.mxu0 %v2278
        %2326 = vmatpush.bf16.msra.mxu0 %v2276
        %2327 = vmatpush.bf16.msra.mxu0 %v2274
        %2328 = vmatpush.bf16.msra.mxu0 %v2272
        %2329 = vmatpush.bf16.msra.mxu0 %v2270
        %2330 = vmatpush.bf16.msra.mxu0 %v2268
        %2331 = vmatpush.bf16.msra.mxu0 %v2266
        %2332 = vmatpush.bf16.msra.mxu0 %v2264
        %2333 = vmatmul.bf16.gmra.mxu0 %v2151
        %v2334 = vpop.f32.mrf.mxu0
        %v2335 = vadd.f32 %v2322, %v2334
        %v2336 = vpop.f32.mrf.mxu0
        %2337 = vdwg.mxu0
        %2338 = vmatpush.bf16.msra.mxu0 %v2263
        %2339 = vmatpush.bf16.msra.mxu0 %v2261
        %2340 = vmatpush.bf16.msra.mxu0 %v2259
        %2341 = vmatpush.bf16.msra.mxu0 %v2257
        %2342 = vmatpush.bf16.msra.mxu0 %v2255
        %2343 = vmatpush.bf16.msra.mxu0 %v2253
        %2344 = vmatpush.bf16.msra.mxu0 %v2251
        %2345 = vmatpush.bf16.msra.mxu0 %v2249
        %2346 = vmatmul.bf16.gmra.mxu0 %v2150
        %v2347 = vpop.f32.mrf.mxu0
        %v2348 = vadd.f32 0.0, %v2347
        %v2349 = vpop.f32.mrf.mxu0
        %2350 = vdwg.mxu0
        %2351 = vmatpush.bf16.msra.mxu0 %v2279
        %2352 = vmatpush.bf16.msra.mxu0 %v2277
        %2353 = vmatpush.bf16.msra.mxu0 %v2275
        %2354 = vmatpush.bf16.msra.mxu0 %v2273
        %2355 = vmatpush.bf16.msra.mxu0 %v2271
        %2356 = vmatpush.bf16.msra.mxu0 %v2269
        %2357 = vmatpush.bf16.msra.mxu0 %v2267
        %2358 = vmatpush.bf16.msra.mxu0 %v2265
        %2359 = vmatmul.bf16.gmra.mxu0 %v2151
        %v2360 = vpop.f32.mrf.mxu0
        %v2361 = vadd.f32 %v2348, %v2360
        %v2362 = vpop.f32.mrf.mxu0
        %2363 = vdwg.mxu0
        %v2364 = vadd.f32 %v2080, %v2335
        %v2365 = vadd.f32 %v2106, %v2361
        %v2366 = vrot.slane %v1590, 5
        %v2367 = vrot.slane %v1591, 5
        %v2370 = vsel %vm1602, %v1642, %v2109
        %v2371 = vsel %vm1602, %v1643, %v2110
        %v2372 = vsel %vm1605, %v2370, %v2366
        %v2373 = vsel %vm1605, %v2371, %v2367
        %s2374 = scalar_lea.vmem %s2, 768
        %v2375 = vld [vmem:[%s2374] sm:$0xff]
        %v2376 = vld [vmem:[%s2374 + $0x8] sm:$0xff]
        %v2377 = vld [vmem:[%s2374 + $0x10] sm:$0xff]
        %v2378 = vld [vmem:[%s2374 + $0x18] sm:$0xff]
        %v2379 = vld [vmem:[%s2374 + $0x20] sm:$0xff]
        %v2380 = vld [vmem:[%s2374 + $0x28] sm:$0xff]
        %v2381 = vld [vmem:[%s2374 + $0x30] sm:$0xff]
        %v2382 = vld [vmem:[%s2374 + $0x38] sm:$0xff]
        %v2383 = vld [vmem:[%s2374 + $0x40] sm:$0xff]
        %v2384 = vld [vmem:[%s2374 + $0x48] sm:$0xff]
        %v2385 = vld [vmem:[%s2374 + $0x50] sm:$0xff]
        %v2386 = vld [vmem:[%s2374 + $0x58] sm:$0xff]
        %v2387 = vld [vmem:[%s2374 + $0x60] sm:$0xff]
        %v2388 = vld [vmem:[%s2374 + $0x68] sm:$0xff]
        %v2389 = vld [vmem:[%s2374 + $0x70] sm:$0xff]
        %v2390 = vld [vmem:[%s2374 + $0x78] sm:$0xff]
        %v2391 = vld [vmem:[%s2374 + $0x80] sm:$0xff]
        %v2392 = vld [vmem:[%s2374 + $0x88] sm:$0xff]
        %v2393 = vld [vmem:[%s2374 + $0x90] sm:$0xff]
        %v2394 = vld [vmem:[%s2374 + $0x98] sm:$0xff]
        %v2395 = vld [vmem:[%s2374 + $0xa0] sm:$0xff]
        %v2396 = vld [vmem:[%s2374 + $0xa8] sm:$0xff]
        %v2397 = vld [vmem:[%s2374 + $0xb0] sm:$0xff]
        %v2398 = vld [vmem:[%s2374 + $0xb8] sm:$0xff]
        %v2399 = vld [vmem:[%s2374 + $0xc0] sm:$0xff]
        %v2400 = vld [vmem:[%s2374 + $0xc8] sm:$0xff]
        %v2401 = vld [vmem:[%s2374 + $0xd0] sm:$0xff]
        %v2402 = vld [vmem:[%s2374 + $0xd8] sm:$0xff]
        %v2403 = vld [vmem:[%s2374 + $0xe0] sm:$0xff]
        %v2404 = vld [vmem:[%s2374 + $0xe8] sm:$0xff]
        %v2405 = vld [vmem:[%s2374 + $0xf0] sm:$0xff]
        %v2406 = vld [vmem:[%s2374 + $0xf8] sm:$0xff]
        %v2407 = vpack.c.bf16 %v2372, %v2372
        %v2408 = vpack.c.bf16 %v2373, %v2373
        %v2441 = vunpack.c.l.b16 %v2375
        %v2442 = vunpack.c.h.b16 %v2375
        %v2443 = vunpack.c.l.b16 %v2376
        %v2444 = vunpack.c.h.b16 %v2376
        %v2445 = vunpack.c.l.b16 %v2377
        %v2446 = vunpack.c.h.b16 %v2377
        %v2447 = vunpack.c.l.b16 %v2378
        %v2448 = vunpack.c.h.b16 %v2378
        %v2449 = vunpack.c.l.b16 %v2379
        %v2450 = vunpack.c.h.b16 %v2379
        %v2451 = vunpack.c.l.b16 %v2380
        %v2452 = vunpack.c.h.b16 %v2380
        %v2453 = vunpack.c.l.b16 %v2381
        %v2454 = vunpack.c.h.b16 %v2381
        %v2455 = vunpack.c.l.b16 %v2382
        %v2456 = vunpack.c.h.b16 %v2382
        %v2457 = vunpack.c.l.b16 %v2383
        %v2458 = vunpack.c.h.b16 %v2383
        %v2459 = vunpack.c.l.b16 %v2384
        %v2460 = vunpack.c.h.b16 %v2384
        %v2461 = vunpack.c.l.b16 %v2385
        %v2462 = vunpack.c.h.b16 %v2385
        %v2463 = vunpack.c.l.b16 %v2386
        %v2464 = vunpack.c.h.b16 %v2386
        %v2465 = vunpack.c.l.b16 %v2387
        %v2466 = vunpack.c.h.b16 %v2387
        %v2467 = vunpack.c.l.b16 %v2388
        %v2468 = vunpack.c.h.b16 %v2388
        %v2469 = vunpack.c.l.b16 %v2389
        %v2470 = vunpack.c.h.b16 %v2389
        %v2471 = vunpack.c.l.b16 %v2390
        %v2472 = vunpack.c.h.b16 %v2390
        %v2473 = vunpack.c.l.b16 %v2391
        %v2474 = vunpack.c.h.b16 %v2391
        %v2475 = vunpack.c.l.b16 %v2392
        %v2476 = vunpack.c.h.b16 %v2392
        %v2477 = vunpack.c.l.b16 %v2393
        %v2478 = vunpack.c.h.b16 %v2393
        %v2479 = vunpack.c.l.b16 %v2394
        %v2480 = vunpack.c.h.b16 %v2394
        %v2481 = vunpack.c.l.b16 %v2395
        %v2482 = vunpack.c.h.b16 %v2395
        %v2483 = vunpack.c.l.b16 %v2396
        %v2484 = vunpack.c.h.b16 %v2396
        %v2485 = vunpack.c.l.b16 %v2397
        %v2486 = vunpack.c.h.b16 %v2397
        %v2487 = vunpack.c.l.b16 %v2398
        %v2488 = vunpack.c.h.b16 %v2398
        %v2489 = vunpack.c.l.b16 %v2399
        %v2490 = vunpack.c.h.b16 %v2399
        %v2491 = vunpack.c.l.b16 %v2400
        %v2492 = vunpack.c.h.b16 %v2400
        %v2493 = vunpack.c.l.b16 %v2401
        %v2494 = vunpack.c.h.b16 %v2401
        %v2495 = vunpack.c.l.b16 %v2402
        %v2496 = vunpack.c.h.b16 %v2402
        %v2497 = vunpack.c.l.b16 %v2403
        %v2498 = vunpack.c.h.b16 %v2403
        %v2499 = vunpack.c.l.b16 %v2404
        %v2500 = vunpack.c.h.b16 %v2404
        %v2501 = vunpack.c.l.b16 %v2405
        %v2502 = vunpack.c.h.b16 %v2405
        %v2503 = vunpack.c.l.b16 %v2406
        %v2504 = vunpack.c.h.b16 %v2406
        %v2505 = vpack.c.b16 %v2443, %v2441
        %v2506 = vpack.c.b16 %v2444, %v2442
        %v2507 = vpack.c.b16 %v2447, %v2445
        %v2508 = vpack.c.b16 %v2448, %v2446
        %v2509 = vpack.c.b16 %v2451, %v2449
        %v2510 = vpack.c.b16 %v2452, %v2450
        %v2511 = vpack.c.b16 %v2455, %v2453
        %v2512 = vpack.c.b16 %v2456, %v2454
        %v2513 = vpack.c.b16 %v2459, %v2457
        %v2514 = vpack.c.b16 %v2460, %v2458
        %v2515 = vpack.c.b16 %v2463, %v2461
        %v2516 = vpack.c.b16 %v2464, %v2462
        %v2517 = vpack.c.b16 %v2467, %v2465
        %v2518 = vpack.c.b16 %v2468, %v2466
        %v2519 = vpack.c.b16 %v2471, %v2469
        %v2520 = vpack.c.b16 %v2472, %v2470
        %v2521 = vpack.c.b16 %v2475, %v2473
        %v2522 = vpack.c.b16 %v2476, %v2474
        %v2523 = vpack.c.b16 %v2479, %v2477
        %v2524 = vpack.c.b16 %v2480, %v2478
        %v2525 = vpack.c.b16 %v2483, %v2481
        %v2526 = vpack.c.b16 %v2484, %v2482
        %v2527 = vpack.c.b16 %v2487, %v2485
        %v2528 = vpack.c.b16 %v2488, %v2486
        %v2529 = vpack.c.b16 %v2491, %v2489
        %v2530 = vpack.c.b16 %v2492, %v2490
        %v2531 = vpack.c.b16 %v2495, %v2493
        %v2532 = vpack.c.b16 %v2496, %v2494
        %v2533 = vpack.c.b16 %v2499, %v2497
        %v2534 = vpack.c.b16 %v2500, %v2498
        %v2535 = vpack.c.b16 %v2503, %v2501
        %v2536 = vpack.c.b16 %v2504, %v2502
        %2569 = vmatpush.bf16.msra.mxu0 %v2519
        %2570 = vmatpush.bf16.msra.mxu0 %v2517
        %2571 = vmatpush.bf16.msra.mxu0 %v2515
        %2572 = vmatpush.bf16.msra.mxu0 %v2513
        %2573 = vmatpush.bf16.msra.mxu0 %v2511
        %2574 = vmatpush.bf16.msra.mxu0 %v2509
        %2575 = vmatpush.bf16.msra.mxu0 %v2507
        %2576 = vmatpush.bf16.msra.mxu0 %v2505
        %2577 = vmatmul.bf16.gmra.mxu0 %v2407
        %v2578 = vpop.f32.mrf.mxu0
        %v2579 = vadd.f32 0.0, %v2578
        %v2580 = vpop.f32.mrf.mxu0
        %2581 = vdwg.mxu0
        %2582 = vmatpush.bf16.msra.mxu0 %v2535
        %2583 = vmatpush.bf16.msra.mxu0 %v2533
        %2584 = vmatpush.bf16.msra.mxu0 %v2531
        %2585 = vmatpush.bf16.msra.mxu0 %v2529
        %2586 = vmatpush.bf16.msra.mxu0 %v2527
        %2587 = vmatpush.bf16.msra.mxu0 %v2525
        %2588 = vmatpush.bf16.msra.mxu0 %v2523
        %2589 = vmatpush.bf16.msra.mxu0 %v2521
        %2590 = vmatmul.bf16.gmra.mxu0 %v2408
        %v2591 = vpop.f32.mrf.mxu0
        %v2592 = vadd.f32 %v2579, %v2591
        %v2593 = vpop.f32.mrf.mxu0
        %2594 = vdwg.mxu0
        %2595 = vmatpush.bf16.msra.mxu0 %v2520
        %2596 = vmatpush.bf16.msra.mxu0 %v2518
        %2597 = vmatpush.bf16.msra.mxu0 %v2516
        %2598 = vmatpush.bf16.msra.mxu0 %v2514
        %2599 = vmatpush.bf16.msra.mxu0 %v2512
        %2600 = vmatpush.bf16.msra.mxu0 %v2510
        %2601 = vmatpush.bf16.msra.mxu0 %v2508
        %2602 = vmatpush.bf16.msra.mxu0 %v2506
        %2603 = vmatmul.bf16.gmra.mxu0 %v2407
        %v2604 = vpop.f32.mrf.mxu0
        %v2605 = vadd.f32 0.0, %v2604
        %v2606 = vpop.f32.mrf.mxu0
        %2607 = vdwg.mxu0
        %2608 = vmatpush.bf16.msra.mxu0 %v2536
        %2609 = vmatpush.bf16.msra.mxu0 %v2534
        %2610 = vmatpush.bf16.msra.mxu0 %v2532
        %2611 = vmatpush.bf16.msra.mxu0 %v2530
        %2612 = vmatpush.bf16.msra.mxu0 %v2528
        %2613 = vmatpush.bf16.msra.mxu0 %v2526
        %2614 = vmatpush.bf16.msra.mxu0 %v2524
        %2615 = vmatpush.bf16.msra.mxu0 %v2522
        %2616 = vmatmul.bf16.gmra.mxu0 %v2408
        %v2617 = vpop.f32.mrf.mxu0
        %v2618 = vadd.f32 %v2605, %v2617
        %v2619 = vpop.f32.mrf.mxu0
        %2620 = vdwg.mxu0
        %v2621 = vadd.f32 %v2364, %v2592
        %v2622 = vadd.f32 %v2365, %v2618
        %v2623 = vld [vmem:[%s7] sm:$0x3]
        %v2625 = vperm.slane %v2623, 0
        %v2626 = vperm.slane %v2623, 1
        %v2629 = vadd.f32 %v2621, %v2625
        %v2630 = vadd.f32 %v2622, %v2626
        %v2631 = vmax.f32 %v2629, 0.0
        %v2632 = vmax.f32 %v2630, 0.0
        %v2633 = vld [vmem:[%s3] sm:$0xf]
        %v2634 = vld [vmem:[%s3 + $0x4] sm:$0xf]
        %v2635 = vld [vmem:[%s3 + $0x8] sm:$0xf]
        %v2636 = vld [vmem:[%s3 + $0xc] sm:$0xf]
        %v2637 = vld [vmem:[%s3 + $0x10] sm:$0xf]
        %v2638 = vld [vmem:[%s3 + $0x14] sm:$0xf]
        %v2639 = vld [vmem:[%s3 + $0x18] sm:$0xf]
        %v2640 = vld [vmem:[%s3 + $0x1c] sm:$0xf]
        %v2641 = vld [vmem:[%s3 + $0x20] sm:$0xf]
        %v2642 = vld [vmem:[%s3 + $0x24] sm:$0xf]
        %v2643 = vld [vmem:[%s3 + $0x28] sm:$0xf]
        %v2644 = vld [vmem:[%s3 + $0x2c] sm:$0xf]
        %v2645 = vld [vmem:[%s3 + $0x30] sm:$0xf]
        %v2646 = vld [vmem:[%s3 + $0x34] sm:$0xf]
        %v2647 = vld [vmem:[%s3 + $0x38] sm:$0xf]
        %v2648 = vld [vmem:[%s3 + $0x3c] sm:$0xf]
        %v2649 = vld [vmem:[%s3 + $0x40] sm:$0xf]
        %v2650 = vld [vmem:[%s3 + $0x44] sm:$0xf]
        %v2651 = vld [vmem:[%s3 + $0x48] sm:$0xf]
        %v2652 = vld [vmem:[%s3 + $0x4c] sm:$0xf]
        %v2653 = vld [vmem:[%s3 + $0x50] sm:$0xf]
        %v2654 = vld [vmem:[%s3 + $0x54] sm:$0xf]
        %v2655 = vld [vmem:[%s3 + $0x58] sm:$0xf]
        %v2656 = vld [vmem:[%s3 + $0x5c] sm:$0xf]
        %v2657 = vpack.c.bf16 %v2631, %v2631
        %v2658 = vpack.c.bf16 %v2632, %v2632
        %s2659 = scalar_lea.vmem %s3, 96
        %v2660 = vld [vmem:[%s2659] sm:$0xf]
        %v2661 = vld [vmem:[%s2659 + $0x4] sm:$0xf]
        %v2662 = vld [vmem:[%s2659 + $0x8] sm:$0xf]
        %v2663 = vld [vmem:[%s2659 + $0xc] sm:$0xf]
        %v2664 = vld [vmem:[%s2659 + $0x10] sm:$0xf]
        %v2665 = vld [vmem:[%s2659 + $0x14] sm:$0xf]
        %v2666 = vld [vmem:[%s2659 + $0x18] sm:$0xf]
        %v2667 = vld [vmem:[%s2659 + $0x1c] sm:$0xf]
        %v2668 = vld [vmem:[%s2659 + $0x20] sm:$0xf]
        %v2669 = vld [vmem:[%s2659 + $0x24] sm:$0xf]
        %v2670 = vld [vmem:[%s2659 + $0x28] sm:$0xf]
        %v2671 = vld [vmem:[%s2659 + $0x2c] sm:$0xf]
        %v2672 = vld [vmem:[%s2659 + $0x30] sm:$0xf]
        %v2673 = vld [vmem:[%s2659 + $0x34] sm:$0xf]
        %v2674 = vld [vmem:[%s2659 + $0x38] sm:$0xf]
        %v2675 = vld [vmem:[%s2659 + $0x3c] sm:$0xf]
        %v2676 = vld [vmem:[%s2659 + $0x40] sm:$0xf]
        %v2677 = vld [vmem:[%s2659 + $0x44] sm:$0xf]
        %v2678 = vld [vmem:[%s2659 + $0x48] sm:$0xf]
        %v2679 = vld [vmem:[%s2659 + $0x4c] sm:$0xf]
        %v2680 = vld [vmem:[%s2659 + $0x50] sm:$0xf]
        %v2681 = vld [vmem:[%s2659 + $0x54] sm:$0xf]
        %v2682 = vld [vmem:[%s2659 + $0x58] sm:$0xf]
        %v2683 = vld [vmem:[%s2659 + $0x5c] sm:$0xf]
        %v2685 = vshrl.u32 %v2657, 16
        %v2688 = vshrl.u32 %v2658, 16
        %v2715 = vunpack.c.l.b16 %v2660
        %v2716 = vunpack.c.l.b16 %v2661
        %v2717 = vunpack.c.l.b16 %v2662
        %v2718 = vunpack.c.l.b16 %v2663
        %v2719 = vunpack.c.l.b16 %v2664
        %v2720 = vunpack.c.l.b16 %v2665
        %v2721 = vunpack.c.l.b16 %v2666
        %v2722 = vunpack.c.l.b16 %v2667
        %v2723 = vunpack.c.l.b16 %v2668
        %v2724 = vunpack.c.l.b16 %v2669
        %v2725 = vunpack.c.l.b16 %v2670
        %v2726 = vunpack.c.l.b16 %v2671
        %v2727 = vunpack.c.l.b16 %v2672
        %v2728 = vunpack.c.l.b16 %v2673
        %v2729 = vunpack.c.l.b16 %v2674
        %v2730 = vunpack.c.l.b16 %v2675
        %v2731 = vunpack.c.l.b16 %v2676
        %v2732 = vunpack.c.l.b16 %v2677
        %v2733 = vunpack.c.l.b16 %v2678
        %v2734 = vunpack.c.l.b16 %v2679
        %v2735 = vunpack.c.l.b16 %v2680
        %v2736 = vunpack.c.l.b16 %v2681
        %v2737 = vunpack.c.l.b16 %v2682
        %v2738 = vunpack.c.l.b16 %v2683
        %v2739 = vpack.c.b16 %v2716, %v2715
        %v2740 = vpack.c.b16 %v2718, %v2717
        %v2741 = vpack.c.b16 %v2720, %v2719
        %v2742 = vpack.c.b16 %v2722, %v2721
        %v2743 = vpack.c.b16 %v2724, %v2723
        %v2744 = vpack.c.b16 %v2726, %v2725
        %v2745 = vpack.c.b16 %v2728, %v2727
        %v2746 = vpack.c.b16 %v2730, %v2729
        %v2747 = vpack.c.b16 %v2732, %v2731
        %v2748 = vpack.c.b16 %v2734, %v2733
        %v2749 = vpack.c.b16 %v2736, %v2735
        %v2750 = vpack.c.b16 %v2738, %v2737
        %v2764 = vsel %vm955, %v2688, 0
        %2766 = vmatpush.bf16.msra.mxu0 %v2746
        %2767 = vmatpush.bf16.msra.mxu0 %v2745
        %2768 = vmatpush.bf16.msra.mxu0 %v2744
        %2769 = vmatpush.bf16.msra.mxu0 %v2743
        %2770 = vmatpush.bf16.msra.mxu0 %v2742
        %2771 = vmatpush.bf16.msra.mxu0 %v2741
        %2772 = vmatpush.bf16.msra.mxu0 %v2740
        %2773 = vmatpush.bf16.msra.mxu0 %v2739
        %2774 = vmatmul.bf16.gmra.mxu0 %v2685
        %v2775 = vpop.f32.mrf.mxu0
        %v2776 = vadd.f32 0.0, %v2775
        %v2777 = vpop.f32.mrf.mxu0
        %2778 = vdwg.mxu0
        %2779 = vmatpush.bf16.msra.mxu0 0
        %2780 = vmatpush.bf16.msra.mxu0 0
        %2781 = vmatpush.bf16.msra.mxu0 0
        %2782 = vmatpush.bf16.msra.mxu0 0
        %2783 = vmatpush.bf16.msra.mxu0 %v2750
        %2784 = vmatpush.bf16.msra.mxu0 %v2749
        %2785 = vmatpush.bf16.msra.mxu0 %v2748
        %2786 = vmatpush.bf16.msra.mxu0 %v2747
        %2787 = vmatmul.bf16.gmra.mxu0 %v2764
        %v2788 = vpop.f32.mrf.mxu0
        %v2789 = vadd.f32 %v2776, %v2788
        %v2790 = vpop.f32.mrf.mxu0
        %2791 = vdwg.mxu0
        %v2816 = vunpack.c.l.b16 %v2633
        %v2817 = vunpack.c.l.b16 %v2634
        %v2818 = vunpack.c.l.b16 %v2635
        %v2819 = vunpack.c.l.b16 %v2636
        %v2820 = vunpack.c.l.b16 %v2637
        %v2821 = vunpack.c.l.b16 %v2638
        %v2822 = vunpack.c.l.b16 %v2639
        %v2823 = vunpack.c.l.b16 %v2640
        %v2824 = vunpack.c.l.b16 %v2641
        %v2825 = vunpack.c.l.b16 %v2642
        %v2826 = vunpack.c.l.b16 %v2643
        %v2827 = vunpack.c.l.b16 %v2644
        %v2828 = vunpack.c.l.b16 %v2645
        %v2829 = vunpack.c.l.b16 %v2646
        %v2830 = vunpack.c.l.b16 %v2647
        %v2831 = vunpack.c.l.b16 %v2648
        %v2832 = vunpack.c.l.b16 %v2649
        %v2833 = vunpack.c.l.b16 %v2650
        %v2834 = vunpack.c.l.b16 %v2651
        %v2835 = vunpack.c.l.b16 %v2652
        %v2836 = vunpack.c.l.b16 %v2653
        %v2837 = vunpack.c.l.b16 %v2654
        %v2838 = vunpack.c.l.b16 %v2655
        %v2839 = vunpack.c.l.b16 %v2656
        %v2840 = vpack.c.b16 %v2817, %v2816
        %v2841 = vpack.c.b16 %v2819, %v2818
        %v2842 = vpack.c.b16 %v2821, %v2820
        %v2843 = vpack.c.b16 %v2823, %v2822
        %v2844 = vpack.c.b16 %v2825, %v2824
        %v2845 = vpack.c.b16 %v2827, %v2826
        %v2846 = vpack.c.b16 %v2829, %v2828
        %v2847 = vpack.c.b16 %v2831, %v2830
        %v2848 = vpack.c.b16 %v2833, %v2832
        %v2849 = vpack.c.b16 %v2835, %v2834
        %v2850 = vpack.c.b16 %v2837, %v2836
        %v2851 = vpack.c.b16 %v2839, %v2838
        %v2864 = vsel %vm955, %v2658, 0
        %2866 = vmatpush.bf16.msra.mxu0 %v2847
        %2867 = vmatpush.bf16.msra.mxu0 %v2846
        %2868 = vmatpush.bf16.msra.mxu0 %v2845
        %2869 = vmatpush.bf16.msra.mxu0 %v2844
        %2870 = vmatpush.bf16.msra.mxu0 %v2843
        %2871 = vmatpush.bf16.msra.mxu0 %v2842
        %2872 = vmatpush.bf16.msra.mxu0 %v2841
        %2873 = vmatpush.bf16.msra.mxu0 %v2840
        %2874 = vmatmul.bf16.gmra.mxu0 %v2657
        %v2875 = vpop.f32.mrf.mxu0
        %v2876 = vadd.f32 %v2789, %v2875
        %v2877 = vpop.f32.mrf.mxu0
        %2878 = vdwg.mxu0
        %2879 = vmatpush.bf16.msra.mxu0 0
        %2880 = vmatpush.bf16.msra.mxu0 0
        %2881 = vmatpush.bf16.msra.mxu0 0
        %2882 = vmatpush.bf16.msra.mxu0 0
        %2883 = vmatpush.bf16.msra.mxu0 %v2851
        %2884 = vmatpush.bf16.msra.mxu0 %v2850
        %2885 = vmatpush.bf16.msra.mxu0 %v2849
        %2886 = vmatpush.bf16.msra.mxu0 %v2848
        %2887 = vmatmul.bf16.gmra.mxu0 %v2864
        %v2888 = vpop.f32.mrf.mxu0
        %v2889 = vadd.f32 %v2876, %v2888
        %v2890 = vpop.f32.mrf.mxu0
        %2891 = vdwg.mxu0
        %s2892 = scalar_lea.vmem %s3, 192
        %v2893 = vld [vmem:[%s2892] sm:$0xf]
        %v2894 = vld [vmem:[%s2892 + $0x4] sm:$0xf]
        %v2895 = vld [vmem:[%s2892 + $0x8] sm:$0xf]
        %v2896 = vld [vmem:[%s2892 + $0xc] sm:$0xf]
        %v2897 = vld [vmem:[%s2892 + $0x10] sm:$0xf]
        %v2898 = vld [vmem:[%s2892 + $0x14] sm:$0xf]
        %v2899 = vld [vmem:[%s2892 + $0x18] sm:$0xf]
        %v2900 = vld [vmem:[%s2892 + $0x1c] sm:$0xf]
        %v2901 = vld [vmem:[%s2892 + $0x20] sm:$0xf]
        %v2902 = vld [vmem:[%s2892 + $0x24] sm:$0xf]
        %v2903 = vld [vmem:[%s2892 + $0x28] sm:$0xf]
        %v2904 = vld [vmem:[%s2892 + $0x2c] sm:$0xf]
        %v2905 = vld [vmem:[%s2892 + $0x30] sm:$0xf]
        %v2906 = vld [vmem:[%s2892 + $0x34] sm:$0xf]
        %v2907 = vld [vmem:[%s2892 + $0x38] sm:$0xf]
        %v2908 = vld [vmem:[%s2892 + $0x3c] sm:$0xf]
        %v2909 = vld [vmem:[%s2892 + $0x40] sm:$0xf]
        %v2910 = vld [vmem:[%s2892 + $0x44] sm:$0xf]
        %v2911 = vld [vmem:[%s2892 + $0x48] sm:$0xf]
        %v2912 = vld [vmem:[%s2892 + $0x4c] sm:$0xf]
        %v2913 = vld [vmem:[%s2892 + $0x50] sm:$0xf]
        %v2914 = vld [vmem:[%s2892 + $0x54] sm:$0xf]
        %v2915 = vld [vmem:[%s2892 + $0x58] sm:$0xf]
        %v2916 = vld [vmem:[%s2892 + $0x5c] sm:$0xf]
        %v2919 = vrot.slane %v2657, 1
        %v2920 = vrot.slane %v2658, 1
        %v2946 = vunpack.c.l.b16 %v2893
        %v2947 = vunpack.c.l.b16 %v2894
        %v2948 = vunpack.c.l.b16 %v2895
        %v2949 = vunpack.c.l.b16 %v2896
        %v2950 = vunpack.c.l.b16 %v2897
        %v2951 = vunpack.c.l.b16 %v2898
        %v2952 = vunpack.c.l.b16 %v2899
        %v2953 = vunpack.c.l.b16 %v2900
        %v2954 = vunpack.c.l.b16 %v2901
        %v2955 = vunpack.c.l.b16 %v2902
        %v2956 = vunpack.c.l.b16 %v2903
        %v2957 = vunpack.c.l.b16 %v2904
        %v2958 = vunpack.c.l.b16 %v2905
        %v2959 = vunpack.c.l.b16 %v2906
        %v2960 = vunpack.c.l.b16 %v2907
        %v2961 = vunpack.c.l.b16 %v2908
        %v2962 = vunpack.c.l.b16 %v2909
        %v2963 = vunpack.c.l.b16 %v2910
        %v2964 = vunpack.c.l.b16 %v2911
        %v2965 = vunpack.c.l.b16 %v2912
        %v2966 = vunpack.c.l.b16 %v2913
        %v2967 = vunpack.c.l.b16 %v2914
        %v2968 = vunpack.c.l.b16 %v2915
        %v2969 = vunpack.c.l.b16 %v2916
        %v2970 = vpack.c.b16 %v2947, %v2946
        %v2971 = vpack.c.b16 %v2949, %v2948
        %v2972 = vpack.c.b16 %v2951, %v2950
        %v2973 = vpack.c.b16 %v2953, %v2952
        %v2974 = vpack.c.b16 %v2955, %v2954
        %v2975 = vpack.c.b16 %v2957, %v2956
        %v2976 = vpack.c.b16 %v2959, %v2958
        %v2977 = vpack.c.b16 %v2961, %v2960
        %v2978 = vpack.c.b16 %v2963, %v2962
        %v2979 = vpack.c.b16 %v2965, %v2964
        %v2980 = vpack.c.b16 %v2967, %v2966
        %v2981 = vpack.c.b16 %v2969, %v2968
        %v2995 = vsel %vm955, %v2920, 0
        %2997 = vmatpush.bf16.msra.mxu0 %v2977
        %2998 = vmatpush.bf16.msra.mxu0 %v2976
        %2999 = vmatpush.bf16.msra.mxu0 %v2975
        %3000 = vmatpush.bf16.msra.mxu0 %v2974
        %3001 = vmatpush.bf16.msra.mxu0 %v2973
        %3002 = vmatpush.bf16.msra.mxu0 %v2972
        %3003 = vmatpush.bf16.msra.mxu0 %v2971
        %3004 = vmatpush.bf16.msra.mxu0 %v2970
        %3005 = vmatmul.bf16.gmra.mxu0 %v2919
        %v3006 = vpop.f32.mrf.mxu0
        %v3007 = vadd.f32 0.0, %v3006
        %v3008 = vpop.f32.mrf.mxu0
        %3009 = vdwg.mxu0
        %3010 = vmatpush.bf16.msra.mxu0 0
        %3011 = vmatpush.bf16.msra.mxu0 0
        %3012 = vmatpush.bf16.msra.mxu0 0
        %3013 = vmatpush.bf16.msra.mxu0 0
        %3014 = vmatpush.bf16.msra.mxu0 %v2981
        %3015 = vmatpush.bf16.msra.mxu0 %v2980
        %3016 = vmatpush.bf16.msra.mxu0 %v2979
        %3017 = vmatpush.bf16.msra.mxu0 %v2978
        %3018 = vmatmul.bf16.gmra.mxu0 %v2995
        %v3019 = vpop.f32.mrf.mxu0
        %v3020 = vadd.f32 %v3007, %v3019
        %v3021 = vpop.f32.mrf.mxu0
        %3022 = vdwg.mxu0
        %v3023 = vadd.f32 %v2889, %v3020
        %v3024 = vld [vmem:[%s8] sm:$0x1]
        %v3025 = vadd.f32 %v3023, %v3024
        %v3026 = vmax.f32 %v3025, 0.0
        %v3027 = vld [vmem:[%s4] sm:$0xff]
        %v3028 = vld [vmem:[%s4 + $0x8] sm:$0xff]
        %v3029 = vld [vmem:[%s4 + $0x10] sm:$0xff]
        %v3030 = vld [vmem:[%s4 + $0x18] sm:$0xff]
        %v3031 = vld [vmem:[%s4 + $0x20] sm:$0xff]
        %v3032 = vld [vmem:[%s4 + $0x28] sm:$0xff]
        %v3033 = vld [vmem:[%s4 + $0x30] sm:$0xff]
        %v3034 = vld [vmem:[%s4 + $0x38] sm:$0xff]
        %v3035 = vld [vmem:[%s4 + $0x40] sm:$0xff]
        %v3036 = vld [vmem:[%s4 + $0x48] sm:$0xff]
        %v3037 = vld [vmem:[%s4 + $0x50] sm:$0xff]
        %v3038 = vld [vmem:[%s4 + $0x58] sm:$0xff]
        %v3039 = vld [vmem:[%s4 + $0x60] sm:$0xff]
        %v3040 = vld [vmem:[%s4 + $0x68] sm:$0xff]
        %v3041 = vld [vmem:[%s4 + $0x70] sm:$0xff]
        %v3042 = vld [vmem:[%s4 + $0x78] sm:$0xff]
        %v3043 = vpack.c.bf16 %v3026, %v3026
        %v3044 = vld [vmem:[%s9] sm:$0xf]
        %v3061 = vunpack.c.l.b16 %v3027
        %v3062 = vunpack.c.h.b16 %v3027
        %v3063 = vunpack.c.l.b16 %v3028
        %v3064 = vunpack.c.h.b16 %v3028
        %v3065 = vunpack.c.l.b16 %v3029
        %v3066 = vunpack.c.h.b16 %v3029
        %v3067 = vunpack.c.l.b16 %v3030
        %v3068 = vunpack.c.h.b16 %v3030
        %v3069 = vunpack.c.l.b16 %v3031
        %v3070 = vunpack.c.h.b16 %v3031
        %v3071 = vunpack.c.l.b16 %v3032
        %v3072 = vunpack.c.h.b16 %v3032
        %v3073 = vunpack.c.l.b16 %v3033
        %v3074 = vunpack.c.h.b16 %v3033
        %v3075 = vunpack.c.l.b16 %v3034
        %v3076 = vunpack.c.h.b16 %v3034
        %v3077 = vunpack.c.l.b16 %v3035
        %v3078 = vunpack.c.h.b16 %v3035
        %v3079 = vunpack.c.l.b16 %v3036
        %v3080 = vunpack.c.h.b16 %v3036
        %v3081 = vunpack.c.l.b16 %v3037
        %v3082 = vunpack.c.h.b16 %v3037
        %v3083 = vunpack.c.l.b16 %v3038
        %v3084 = vunpack.c.h.b16 %v3038
        %v3085 = vunpack.c.l.b16 %v3039
        %v3086 = vunpack.c.h.b16 %v3039
        %v3087 = vunpack.c.l.b16 %v3040
        %v3088 = vunpack.c.h.b16 %v3040
        %v3089 = vunpack.c.l.b16 %v3041
        %v3090 = vunpack.c.h.b16 %v3041
        %v3091 = vunpack.c.l.b16 %v3042
        %v3092 = vunpack.c.h.b16 %v3042
        %v3093 = vpack.c.b16 %v3065, %v3061
        %v3094 = vpack.c.b16 %v3066, %v3062
        %v3095 = vpack.c.b16 %v3067, %v3063
        %v3096 = vpack.c.b16 %v3068, %v3064
        %v3097 = vpack.c.b16 %v3073, %v3069
        %v3098 = vpack.c.b16 %v3074, %v3070
        %v3099 = vpack.c.b16 %v3075, %v3071
        %v3100 = vpack.c.b16 %v3076, %v3072
        %v3101 = vpack.c.b16 %v3081, %v3077
        %v3102 = vpack.c.b16 %v3082, %v3078
        %v3103 = vpack.c.b16 %v3083, %v3079
        %v3104 = vpack.c.b16 %v3084, %v3080
        %v3105 = vpack.c.b16 %v3089, %v3085
        %v3106 = vpack.c.b16 %v3090, %v3086
        %v3107 = vpack.c.b16 %v3091, %v3087
        %v3108 = vpack.c.b16 %v3092, %v3088
        %v3126 = vperm.slane %v3044, 0
        %v3127 = vperm.slane %v3044, 1
        %v3128 = vperm.slane %v3044, 2
        %v3129 = vperm.slane %v3044, 3
        %v3135 = vsel %vm955, %v3043, 0
        %3137 = vmatpush.bf16.msra.mxu0 0
        %3138 = vmatpush.bf16.msra.mxu0 0
        %3139 = vmatpush.bf16.msra.mxu0 0
        %3140 = vmatpush.bf16.msra.mxu0 0
        %3141 = vmatpush.bf16.msra.mxu0 %v3105
        %3142 = vmatpush.bf16.msra.mxu0 %v3101
        %3143 = vmatpush.bf16.msra.mxu0 %v3097
        %3144 = vmatpush.bf16.msra.mxu0 %v3093
        %3145 = vmatmul.bf16.gmra.mxu0 %v3135
        %v3146 = vpop.f32.mrf.mxu0
        %v3147 = vadd.f32 %v3126, %v3146
        %v3148 = vpop.f32.mrf.mxu0
        %3149 = vdwg.mxu0
        %3150 = vmatpush.bf16.msra.mxu0 0
        %3151 = vmatpush.bf16.msra.mxu0 0
        %3152 = vmatpush.bf16.msra.mxu0 0
        %3153 = vmatpush.bf16.msra.mxu0 0
        %3154 = vmatpush.bf16.msra.mxu0 %v3106
        %3155 = vmatpush.bf16.msra.mxu0 %v3102
        %3156 = vmatpush.bf16.msra.mxu0 %v3098
        %3157 = vmatpush.bf16.msra.mxu0 %v3094
        %3158 = vmatmul.bf16.gmra.mxu0 %v3135
        %v3159 = vpop.f32.mrf.mxu0
        %v3160 = vadd.f32 %v3127, %v3159
        %v3161 = vpop.f32.mrf.mxu0
        %3162 = vdwg.mxu0
        %3163 = vmatpush.bf16.msra.mxu0 0
        %3164 = vmatpush.bf16.msra.mxu0 0
        %3165 = vmatpush.bf16.msra.mxu0 0
        %3166 = vmatpush.bf16.msra.mxu0 0
        %3167 = vmatpush.bf16.msra.mxu0 %v3107
        %3168 = vmatpush.bf16.msra.mxu0 %v3103
        %3169 = vmatpush.bf16.msra.mxu0 %v3099
        %3170 = vmatpush.bf16.msra.mxu0 %v3095
        %3171 = vmatmul.bf16.gmra.mxu0 %v3135
        %v3172 = vpop.f32.mrf.mxu0
        %v3173 = vadd.f32 %v3128, %v3172
        %v3174 = vpop.f32.mrf.mxu0
        %3175 = vdwg.mxu0
        %3176 = vmatpush.bf16.msra.mxu0 0
        %3177 = vmatpush.bf16.msra.mxu0 0
        %3178 = vmatpush.bf16.msra.mxu0 0
        %3179 = vmatpush.bf16.msra.mxu0 0
        %3180 = vmatpush.bf16.msra.mxu0 %v3108
        %3181 = vmatpush.bf16.msra.mxu0 %v3104
        %3182 = vmatpush.bf16.msra.mxu0 %v3100
        %3183 = vmatpush.bf16.msra.mxu0 %v3096
        %3184 = vmatmul.bf16.gmra.mxu0 %v3135
        %v3185 = vpop.f32.mrf.mxu0
        %v3186 = vadd.f32 %v3129, %v3185
        %v3187 = vpop.f32.mrf.mxu0
        %3188 = vdwg.mxu0
        %v3189 = vmax.f32 %v3147, 0.0
        %v3190 = vmax.f32 %v3160, 0.0
        %v3191 = vmax.f32 %v3173, 0.0
        %v3192 = vmax.f32 %v3186, 0.0
        %v3193 = vld [vmem:[%s5] sm:$0xf]
        %v3194 = vld [vmem:[%s5 + $0x4] sm:$0xf]
        %v3195 = vld [vmem:[%s5 + $0x8] sm:$0xf]
        %v3196 = vld [vmem:[%s5 + $0xc] sm:$0xf]
        %v3197 = vld [vmem:[%s5 + $0x10] sm:$0xf]
        %v3198 = vld [vmem:[%s5 + $0x14] sm:$0xf]
        %v3199 = vld [vmem:[%s5 + $0x18] sm:$0xf]
        %v3200 = vld [vmem:[%s5 + $0x1c] sm:$0xf]
        %v3201 = vld [vmem:[%s5 + $0x20] sm:$0xf]
        %v3202 = vld [vmem:[%s5 + $0x24] sm:$0xf]
        %v3203 = vld [vmem:[%s5 + $0x28] sm:$0xf]
        %v3204 = vld [vmem:[%s5 + $0x2c] sm:$0xf]
        %v3205 = vld [vmem:[%s5 + $0x30] sm:$0xf]
        %v3206 = vld [vmem:[%s5 + $0x34] sm:$0xf]
        %v3207 = vld [vmem:[%s5 + $0x38] sm:$0xf]
        %v3208 = vld [vmem:[%s5 + $0x3c] sm:$0xf]
        %v3209 = vld [vmem:[%s5 + $0x40] sm:$0xf]
        %v3210 = vld [vmem:[%s5 + $0x44] sm:$0xf]
        %v3211 = vld [vmem:[%s5 + $0x48] sm:$0xf]
        %v3212 = vld [vmem:[%s5 + $0x4c] sm:$0xf]
        %v3213 = vld [vmem:[%s5 + $0x50] sm:$0xf]
        %v3214 = vld [vmem:[%s5 + $0x54] sm:$0xf]
        %v3215 = vld [vmem:[%s5 + $0x58] sm:$0xf]
        %v3216 = vld [vmem:[%s5 + $0x5c] sm:$0xf]
        %v3217 = vld [vmem:[%s5 + $0x60] sm:$0xf]
        %v3218 = vld [vmem:[%s5 + $0x64] sm:$0xf]
        %v3219 = vld [vmem:[%s5 + $0x68] sm:$0xf]
        %v3220 = vld [vmem:[%s5 + $0x6c] sm:$0xf]
        %v3221 = vld [vmem:[%s5 + $0x70] sm:$0xf]
        %v3222 = vld [vmem:[%s5 + $0x74] sm:$0xf]
        %v3223 = vld [vmem:[%s5 + $0x78] sm:$0xf]
        %v3224 = vld [vmem:[%s5 + $0x7c] sm:$0xf]
        %v3225 = vld [vmem:[%s5 + $0x80] sm:$0xf]
        %v3226 = vld [vmem:[%s5 + $0x84] sm:$0xf]
        %v3227 = vld [vmem:[%s5 + $0x88] sm:$0xf]
        %v3228 = vld [vmem:[%s5 + $0x8c] sm:$0xf]
        %v3229 = vld [vmem:[%s5 + $0x90] sm:$0xf]
        %v3230 = vld [vmem:[%s5 + $0x94] sm:$0xf]
        %v3231 = vld [vmem:[%s5 + $0x98] sm:$0xf]
        %v3232 = vld [vmem:[%s5 + $0x9c] sm:$0xf]
        %v3233 = vld [vmem:[%s5 + $0xa0] sm:$0xf]
        %v3234 = vld [vmem:[%s5 + $0xa4] sm:$0xf]
        %v3235 = vld [vmem:[%s5 + $0xa8] sm:$0xf]
        %v3236 = vld [vmem:[%s5 + $0xac] sm:$0xf]
        %v3237 = vld [vmem:[%s5 + $0xb0] sm:$0xf]
        %v3238 = vld [vmem:[%s5 + $0xb4] sm:$0xf]
        %v3239 = vld [vmem:[%s5 + $0xb8] sm:$0xf]
        %v3240 = vld [vmem:[%s5 + $0xbc] sm:$0xf]
        %v3241 = vld [vmem:[%s5 + $0xc0] sm:$0xf]
        %v3242 = vld [vmem:[%s5 + $0xc4] sm:$0xf]
        %v3243 = vld [vmem:[%s5 + $0xc8] sm:$0xf]
        %v3244 = vld [vmem:[%s5 + $0xcc] sm:$0xf]
        %v3245 = vld [vmem:[%s5 + $0xd0] sm:$0xf]
        %v3246 = vld [vmem:[%s5 + $0xd4] sm:$0xf]
        %v3247 = vld [vmem:[%s5 + $0xd8] sm:$0xf]
        %v3248 = vld [vmem:[%s5 + $0xdc] sm:$0xf]
        %v3249 = vld [vmem:[%s5 + $0xe0] sm:$0xf]
        %v3250 = vld [vmem:[%s5 + $0xe4] sm:$0xf]
        %v3251 = vld [vmem:[%s5 + $0xe8] sm:$0xf]
        %v3252 = vld [vmem:[%s5 + $0xec] sm:$0xf]
        %v3253 = vld [vmem:[%s5 + $0xf0] sm:$0xf]
        %v3254 = vld [vmem:[%s5 + $0xf4] sm:$0xf]
        %v3255 = vld [vmem:[%s5 + $0xf8] sm:$0xf]
        %v3256 = vld [vmem:[%s5 + $0xfc] sm:$0xf]
        %v3257 = vpack.c.bf16 %v3189, %v3189
        %v3258 = vpack.c.bf16 %v3190, %v3190
        %v3259 = vpack.c.bf16 %v3191, %v3191
        %v3260 = vpack.c.bf16 %v3192, %v3192
        %v3261 = vld [vmem:[%s10] sm:$0x1]
        %v3326 = vunpack.c.l.b16 %v3193
        %v3327 = vunpack.c.l.b16 %v3194
        %v3328 = vunpack.c.l.b16 %v3195
        %v3329 = vunpack.c.l.b16 %v3196
        %v3330 = vunpack.c.l.b16 %v3197
        %v3331 = vunpack.c.l.b16 %v3198
        %v3332 = vunpack.c.l.b16 %v3199
        %v3333 = vunpack.c.l.b16 %v3200
        %v3334 = vunpack.c.l.b16 %v3201
        %v3335 = vunpack.c.l.b16 %v3202
        %v3336 = vunpack.c.l.b16 %v3203
        %v3337 = vunpack.c.l.b16 %v3204
        %v3338 = vunpack.c.l.b16 %v3205
        %v3339 = vunpack.c.l.b16 %v3206
        %v3340 = vunpack.c.l.b16 %v3207
        %v3341 = vunpack.c.l.b16 %v3208
        %v3342 = vunpack.c.l.b16 %v3209
        %v3343 = vunpack.c.l.b16 %v3210
        %v3344 = vunpack.c.l.b16 %v3211
        %v3345 = vunpack.c.l.b16 %v3212
        %v3346 = vunpack.c.l.b16 %v3213
        %v3347 = vunpack.c.l.b16 %v3214
        %v3348 = vunpack.c.l.b16 %v3215
        %v3349 = vunpack.c.l.b16 %v3216
        %v3350 = vunpack.c.l.b16 %v3217
        %v3351 = vunpack.c.l.b16 %v3218
        %v3352 = vunpack.c.l.b16 %v3219
        %v3353 = vunpack.c.l.b16 %v3220
        %v3354 = vunpack.c.l.b16 %v3221
        %v3355 = vunpack.c.l.b16 %v3222
        %v3356 = vunpack.c.l.b16 %v3223
        %v3357 = vunpack.c.l.b16 %v3224
        %v3358 = vunpack.c.l.b16 %v3225
        %v3359 = vunpack.c.l.b16 %v3226
        %v3360 = vunpack.c.l.b16 %v3227
        %v3361 = vunpack.c.l.b16 %v3228
        %v3362 = vunpack.c.l.b16 %v3229
        %v3363 = vunpack.c.l.b16 %v3230
        %v3364 = vunpack.c.l.b16 %v3231
        %v3365 = vunpack.c.l.b16 %v3232
        %v3366 = vunpack.c.l.b16 %v3233
        %v3367 = vunpack.c.l.b16 %v3234
        %v3368 = vunpack.c.l.b16 %v3235
        %v3369 = vunpack.c.l.b16 %v3236
        %v3370 = vunpack.c.l.b16 %v3237
        %v3371 = vunpack.c.l.b16 %v3238
        %v3372 = vunpack.c.l.b16 %v3239
        %v3373 = vunpack.c.l.b16 %v3240
        %v3374 = vunpack.c.l.b16 %v3241
        %v3375 = vunpack.c.l.b16 %v3242
        %v3376 = vunpack.c.l.b16 %v3243
        %v3377 = vunpack.c.l.b16 %v3244
        %v3378 = vunpack.c.l.b16 %v3245
        %v3379 = vunpack.c.l.b16 %v3246
        %v3380 = vunpack.c.l.b16 %v3247
        %v3381 = vunpack.c.l.b16 %v3248
        %v3382 = vunpack.c.l.b16 %v3249
        %v3383 = vunpack.c.l.b16 %v3250
        %v3384 = vunpack.c.l.b16 %v3251
        %v3385 = vunpack.c.l.b16 %v3252
        %v3386 = vunpack.c.l.b16 %v3253
        %v3387 = vunpack.c.l.b16 %v3254
        %v3388 = vunpack.c.l.b16 %v3255
        %v3389 = vunpack.c.l.b16 %v3256
        %v3390 = vpack.c.b16 %v3327, %v3326
        %v3391 = vpack.c.b16 %v3329, %v3328
        %v3392 = vpack.c.b16 %v3331, %v3330
        %v3393 = vpack.c.b16 %v3333, %v3332
        %v3394 = vpack.c.b16 %v3335, %v3334
        %v3395 = vpack.c.b16 %v3337, %v3336
        %v3396 = vpack.c.b16 %v3339, %v3338
        %v3397 = vpack.c.b16 %v3341, %v3340
        %v3398 = vpack.c.b16 %v3343, %v3342
        %v3399 = vpack.c.b16 %v3345, %v3344
        %v3400 = vpack.c.b16 %v3347, %v3346
        %v3401 = vpack.c.b16 %v3349, %v3348
        %v3402 = vpack.c.b16 %v3351, %v3350
        %v3403 = vpack.c.b16 %v3353, %v3352
        %v3404 = vpack.c.b16 %v3355, %v3354
        %v3405 = vpack.c.b16 %v3357, %v3356
        %v3406 = vpack.c.b16 %v3359, %v3358
        %v3407 = vpack.c.b16 %v3361, %v3360
        %v3408 = vpack.c.b16 %v3363, %v3362
        %v3409 = vpack.c.b16 %v3365, %v3364
        %v3410 = vpack.c.b16 %v3367, %v3366
        %v3411 = vpack.c.b16 %v3369, %v3368
        %v3412 = vpack.c.b16 %v3371, %v3370
        %v3413 = vpack.c.b16 %v3373, %v3372
        %v3414 = vpack.c.b16 %v3375, %v3374
        %v3415 = vpack.c.b16 %v3377, %v3376
        %v3416 = vpack.c.b16 %v3379, %v3378
        %v3417 = vpack.c.b16 %v3381, %v3380
        %v3418 = vpack.c.b16 %v3383, %v3382
        %v3419 = vpack.c.b16 %v3385, %v3384
        %v3420 = vpack.c.b16 %v3387, %v3386
        %v3421 = vpack.c.b16 %v3389, %v3388
        %3454 = vmatpush.bf16.msra.mxu0 %v3397
        %3455 = vmatpush.bf16.msra.mxu0 %v3396
        %3456 = vmatpush.bf16.msra.mxu0 %v3395
        %3457 = vmatpush.bf16.msra.mxu0 %v3394
        %3458 = vmatpush.bf16.msra.mxu0 %v3393
        %3459 = vmatpush.bf16.msra.mxu0 %v3392
        %3460 = vmatpush.bf16.msra.mxu0 %v3391
        %3461 = vmatpush.bf16.msra.mxu0 %v3390
        %3462 = vmatmul.bf16.gmra.mxu0 %v3257
        %v3463 = vpop.f32.mrf.mxu0
        %v3464 = vadd.f32 %v3261, %v3463
        %v3465 = vpop.f32.mrf.mxu0
        %3466 = vdwg.mxu0
        %3467 = vmatpush.bf16.msra.mxu0 %v3405
        %3468 = vmatpush.bf16.msra.mxu0 %v3404
        %3469 = vmatpush.bf16.msra.mxu0 %v3403
        %3470 = vmatpush.bf16.msra.mxu0 %v3402
        %3471 = vmatpush.bf16.msra.mxu0 %v3401
        %3472 = vmatpush.bf16.msra.mxu0 %v3400
        %3473 = vmatpush.bf16.msra.mxu0 %v3399
        %3474 = vmatpush.bf16.msra.mxu0 %v3398
        %3475 = vmatmul.bf16.gmra.mxu0 %v3258
        %v3476 = vpop.f32.mrf.mxu0
        %v3477 = vadd.f32 %v3464, %v3476
        %v3478 = vpop.f32.mrf.mxu0
        %3479 = vdwg.mxu0
        %3480 = vmatpush.bf16.msra.mxu0 %v3413
        %3481 = vmatpush.bf16.msra.mxu0 %v3412
        %3482 = vmatpush.bf16.msra.mxu0 %v3411
        %3483 = vmatpush.bf16.msra.mxu0 %v3410
        %3484 = vmatpush.bf16.msra.mxu0 %v3409
        %3485 = vmatpush.bf16.msra.mxu0 %v3408
        %3486 = vmatpush.bf16.msra.mxu0 %v3407
        %3487 = vmatpush.bf16.msra.mxu0 %v3406
        %3488 = vmatmul.bf16.gmra.mxu0 %v3259
        %v3489 = vpop.f32.mrf.mxu0
        %v3490 = vadd.f32 %v3477, %v3489
        %v3491 = vpop.f32.mrf.mxu0
        %3492 = vdwg.mxu0
        %3493 = vmatpush.bf16.msra.mxu0 %v3421
        %3494 = vmatpush.bf16.msra.mxu0 %v3420
        %3495 = vmatpush.bf16.msra.mxu0 %v3419
        %3496 = vmatpush.bf16.msra.mxu0 %v3418
        %3497 = vmatpush.bf16.msra.mxu0 %v3417
        %3498 = vmatpush.bf16.msra.mxu0 %v3416
        %3499 = vmatpush.bf16.msra.mxu0 %v3415
        %3500 = vmatpush.bf16.msra.mxu0 %v3414
        %3501 = vmatmul.bf16.gmra.mxu0 %v3260
        %v3502 = vpop.f32.mrf.mxu0
        %v3503 = vadd.f32 %v3490, %v3502
        %v3504 = vpop.f32.mrf.mxu0
        %3505 = vdwg.mxu0
        %3506 = vst [vmem:[%s378] sm:$0x1] %v3503
        %s3507 = sand.u32 %s269, 1
        %s3508 = scalar_lea.sflag [#allocation3], %s3507
        %s3509 = sand.u32 %s269, 1
        %s3510 = scalar_lea.vmem [#allocation2], %s3509
        // Predicated region
        $region65: #{qnet_forward.1} parent=63 // pred_check
          %p3511 = pneg %p279
        $region66: #{qnet_forward.1} parent=63 // pred_check_branch
          %3513 = sbr.rel (%p3511) target = $region68
        $region67: #{qnet_forward.1} parent=63 // pred_region
          %3515 = vsyncadd %s3508, 0
          %s3516 = scalar_lea.hbm %s11, %s25
          %s3518 = sshll.u32 %s3510, 4
          %s3519 = int_to_ptr.vmem [resolvable:$true] %s3518
          %s3520 = sshll.u32 %s3516, 4
          %s3521 = int_to_ptr.hbm [resolvable:$true] %s3520
          %3523 = dma.vmem_to_hbm [thread:$0]  %s3519, 16, %s3521, %s3508
        $region68: #{qnet_forward.1} parent=63 // pred_fallthru
          _
      $region64: #{qnet_forward.1} parent=5 // pred_fallthru
        _
      %p3524 = scmp.le.s32.totalorder 2, %s20
      // Predicated region
      $region69: #{qnet_forward.1} parent=5 // pred_check
        %p3525 = pneg %p3524
      $region70: #{qnet_forward.1} parent=5 // pred_check_branch
        %3527 = sbr.rel (%p3525) target = $region72
      $region71: #{qnet_forward.1} parent=5 // pred_region
        %s3528 = ssub.s32 %s20, 2
        // Predicated region
        $region73: #{qnet_forward.1} parent=71 // pred_check
          %p3529 = pneg %p285
        $region74: #{qnet_forward.1} parent=71 // pred_check_branch
          %3531 = sbr.rel (%p3529) target = $region76
        $region75: #{qnet_forward.1} parent=71 // pred_region
          %s3532 = sand.u32 %s270, 1
          %s3533 = scalar_lea.sflag [#allocation3], %s3532
          %s3534 = sand.u32 %s270, 1
          %s3535 = scalar_lea.vmem [#allocation2], %s3534
          %3537 = dma.done %s3533, 16
        $region76: #{qnet_forward.1} parent=71 // pred_fallthru
          _
      $region72: #{qnet_forward.1} parent=5 // pred_fallthru
        _
    $region6: #{qnet_forward.1} parent=1 // loop_footer
      %s24 = sadd.s32 1, %s20
    $region7: #{qnet_forward.1} parent=1 // loop_footer_branch
      %19 = sbr.rel target = $region3
    $region8: #{qnet_forward.1} parent=1 // loop_exit
      _
    %3538 = vsyncpa [#allocation3], 1
    %s3539 = scalar_lea.sflag [#allocation3], 1
    %3540 = vsyncpa %s3539, 1

</llo_original>
